<compile_context>
chip_gen: v6e
topology: v6e:2x2x1
jax: 0.10.0
libtpu: 0.0.40
codegen_flags: <defaults>
</compile_context>

<pallas_src>
import functools

import numpy as np
import jax
import jax.numpy as jnp
from jax.experimental import pallas as pl
from jax.experimental.pallas import tpu as pltpu

EPS = 1e-5       # nn.BatchNorm2d default eps
SLOPE = 0.01     # nn.LeakyReLU default negative_slope
LANES = 128      # TPU lane width: pad output channels / K up to this
TILE_M = 256     # rows of the flattened (N*H*W) axis per grid step

_VMEM_LIMIT = 32 * 1024 * 1024   # explicit budget, fits v5e/v6e/v7x
_CP_ACC = pltpu.CompilerParams(dimension_semantics=("arbitrary",),
                               vmem_limit_bytes=_VMEM_LIMIT)
_CP_PAR = pltpu.CompilerParams(dimension_semantics=("parallel",),
                               vmem_limit_bytes=_VMEM_LIMIT)


def _round_up(x, m):
    return (x + m - 1) // m * m


def _pad_to(x, shape):
    return jnp.pad(x, [(0, t - s) for s, t in zip(x.shape, shape)])


# ----------------------------- Pallas kernels ------------------------------

def _matmul_stats_kernel(x_ref, w_ref, y_ref, sum_ref, ssq_ref, acc_s, acc_q):
    """Tiled conv-as-matmul (bf16 in, f32 acc) + per-channel sum / sum-sq."""
    i = pl.program_id(0)

    @pl.when(i == 0)
    def _():
        acc_s[...] = jnp.zeros_like(acc_s)
        acc_q[...] = jnp.zeros_like(acc_q)

    y = jnp.dot(x_ref[...], w_ref[...], preferred_element_type=jnp.float32)
    y_ref[...] = y
    acc_s[...] += jnp.sum(y, axis=0, keepdims=True)
    acc_q[...] += jnp.sum(y * y, axis=0, keepdims=True)

    @pl.when(i == pl.num_programs(0) - 1)
    def _():
        sum_ref[...] = acc_s[...]
        ssq_ref[...] = acc_q[...]


def _pool_stats_kernel(xp_ref, inv_ref, y_ref, sum_ref, ssq_ref, acc_s, acc_q):
    """3x3 stride-1 average pool (count_include_pad=False) on a lane-dense
    NHWC slab, plus per-channel sum / sum-sq of the pooled values."""
    n = pl.program_id(0)

    @pl.when(n == 0)
    def _():
        acc_s[...] = jnp.zeros_like(acc_s)
        acc_q[...] = jnp.zeros_like(acc_q)

    _, H, W, C = y_ref.shape
    xp = xp_ref[...]                                     # (1, H+2, W+2, C)
    s = jnp.zeros((1, H, W, C), jnp.float32)
    for dh in range(3):
        for dw in range(3):
            s = s + xp[:, dh:dh + H, dw:dw + W, :]
    y = s * inv_ref[...]                                 # multiply by 1/count
    y_ref[...] = y

    y2d = y.reshape(H * W, C)
    acc_s[...] += jnp.sum(y2d, axis=0, keepdims=True)
    acc_q[...] += jnp.sum(y2d * y2d, axis=0, keepdims=True)

    @pl.when(n == pl.num_programs(0) - 1)
    def _():
        sum_ref[...] = acc_s[...]
        ssq_ref[...] = acc_q[...]


def _bn_lrelu_kernel(y_ref, s_ref, q_ref, g_ref, b_ref, o_ref, *, inv_m):
    mean = s_ref[...] * inv_m
    var = jnp.maximum(q_ref[...] * inv_m - mean * mean, 0.0)
    scale = jax.lax.rsqrt(var + EPS) * g_ref[...]
    yn = (y_ref[...] - mean) * scale + b_ref[...]
    o_ref[...] = jnp.where(yn >= 0, yn, SLOPE * yn)


def _bn_lrelu_pool_kernel(yr_ref, yp_ref, sr_ref, qr_ref, sp_ref, qp_ref,
                          g_ref, b_ref, o_ref, *, inv_m, n_pool):
    """Normalize + LeakyReLU; columns < n_pool use the pooled values/stats
    (pool branch), the rest use the raw conv values/stats."""
    np_ = o_ref.shape[1]
    col = jax.lax.broadcasted_iota(jnp.int32, (1, np_), 1)
    is_pool = col < n_pool
    s = jnp.where(is_pool, sp_ref[...], sr_ref[...])
    q = jnp.where(is_pool, qp_ref[...], qr_ref[...])
    mean = s * inv_m
    var = jnp.maximum(q * inv_m - mean * mean, 0.0)
    scale = jax.lax.rsqrt(var + EPS) * g_ref[...]
    y = jnp.where(is_pool, yp_ref[...], yr_ref[...])
    yn = (y - mean) * scale + b_ref[...]
    o_ref[...] = jnp.where(yn >= 0, yn, SLOPE * yn)


# ------------------------------ host wrappers -------------------------------

def _matmul_stats(x_cols, w_mat):
    # x_cols: (Mp, Kp) bf16, Mp % TILE_M == 0; w_mat: (Kp, Np) bf16, Np % 128 == 0
    Mp, Kp = x_cols.shape
    Np = w_mat.shape[1]
    return pl.pallas_call(
        _matmul_stats_kernel,
        out_shape=(jax.ShapeDtypeStruct((Mp, Np), jnp.float32),
                   jax.ShapeDtypeStruct((1, Np), jnp.float32),
                   jax.ShapeDtypeStruct((1, Np), jnp.float32)),
        grid=(Mp // TILE_M,),
        in_specs=[pl.BlockSpec((TILE_M, Kp), lambda i: (i, 0)),
                  pl.BlockSpec((Kp, Np), lambda i: (0, 0))],
        out_specs=(pl.BlockSpec((TILE_M, Np), lambda i: (i, 0)),
                   pl.BlockSpec((1, Np), lambda i: (0, 0)),
                   pl.BlockSpec((1, Np), lambda i: (0, 0))),
        scratch_shapes=[pltpu.VMEM((1, Np), jnp.float32),
                        pltpu.VMEM((1, Np), jnp.float32)],
        compiler_params=_CP_ACC,
    )(x_cols, w_mat)


def _pool_stats(y_padded_sp, inv_cnt):
    # y_padded_sp: (N, H+2, W+2, Np) f32, inv_cnt: (1, H, W, 1) f32
    N, Hp2, Wp2, Np = y_padded_sp.shape
    H, W = Hp2 - 2, Wp2 - 2
    return pl.pallas_call(
        _pool_stats_kernel,
        out_shape=(jax.ShapeDtypeStruct((N, H, W, Np), jnp.float32),
                   jax.ShapeDtypeStruct((1, Np), jnp.float32),
                   jax.ShapeDtypeStruct((1, Np), jnp.float32)),
        grid=(N,),
        in_specs=[pl.BlockSpec((1, Hp2, Wp2, Np), lambda n: (n, 0, 0, 0)),
                  pl.BlockSpec((1, H, W, 1), lambda n: (0, 0, 0, 0))],
        out_specs=(pl.BlockSpec((1, H, W, Np), lambda n: (n, 0, 0, 0)),
                   pl.BlockSpec((1, Np), lambda n: (0, 0)),
                   pl.BlockSpec((1, Np), lambda n: (0, 0))),
        scratch_shapes=[pltpu.VMEM((1, Np), jnp.float32),
                        pltpu.VMEM((1, Np), jnp.float32)],
        compiler_params=_CP_ACC,
    )(y_padded_sp, inv_cnt)


def _bn_lrelu(y, s, q, gamma, beta, *, m_real):
    Mp, Np = y.shape
    row = pl.BlockSpec((TILE_M, Np), lambda i: (i, 0))
    stat = pl.BlockSpec((1, Np), lambda i: (0, 0))
    kern = functools.partial(_bn_lrelu_kernel, inv_m=1.0 / m_real)
    return pl.pallas_call(
        kern,
        out_shape=jax.ShapeDtypeStruct((Mp, Np), jnp.float32),
        grid=(Mp // TILE_M,),
        in_specs=[row, stat, stat, stat, stat],
        out_specs=row,
        compiler_params=_CP_PAR,
    )(y, s, q, gamma, beta)


def _bn_lrelu_pool(y_raw, y_pool, s_raw, q_raw, s_pool, q_pool, gamma, beta,
                   *, m_real, n_pool):
    Mp, Np = y_raw.shape
    row = pl.BlockSpec((TILE_M, Np), lambda i: (i, 0))
    stat = pl.BlockSpec((1, Np), lambda i: (0, 0))
    kern = functools.partial(_bn_lrelu_pool_kernel, inv_m=1.0 / m_real,
                             n_pool=n_pool)
    return pl.pallas_call(
        kern,
        out_shape=jax.ShapeDtypeStruct((Mp, Np), jnp.float32),
        grid=(Mp // TILE_M,),
        in_specs=[row, row, stat, stat, stat, stat, stat, stat],
        out_specs=row,
        compiler_params=_CP_PAR,
    )(y_raw, y_pool, s_raw, q_raw, s_pool, q_pool, gamma, beta)


# ------------------------- layout / weight preparation ----------------------

def _count_map(H, W):
    rc = np.minimum(np.arange(H) + 1, H - 1) - np.maximum(np.arange(H) - 1, 0) + 1
    cc = np.minimum(np.arange(W) + 1, W - 1) - np.maximum(np.arange(W) - 1, 0) + 1
    return (rc[:, None] * cc[None, :]).astype(np.float32)


def _im2col3_nhwc(x_nhwc):
    # (N, H, W, C) -> (N*H*W, 9*C), K ordered (kh, kw, ci); channels stay last.
    N, H, W, C = x_nhwc.shape
    xp = jnp.pad(x_nhwc, ((0, 0), (1, 1), (1, 1), (0, 0)))
    cols = [xp[:, dh:dh + H, dw:dw + W, :] for dh in range(3) for dw in range(3)]
    return jnp.concatenate(cols, axis=-1).reshape(N * H * W, 9 * C)


def init_inception_params(key, in_channels, out_channels):
    def conv(k, cout, cin, ks):
        w = 0.1 * jax.random.normal(k, (cout, cin, ks, ks), jnp.float32)
        gamma = jnp.ones((cout,), jnp.float32)   # BN default weight
        beta = jnp.zeros((cout,), jnp.float32)   # BN default bias
        return (w, gamma, beta)

    ks = jax.random.split(key, 7)
    return {
        "pool_1x1": conv(ks[0], out_channels, in_channels, 1),
        "b1x1":     conv(ks[1], out_channels, in_channels, 1),
        "b3x3_1":   conv(ks[2], out_channels, in_channels, 1),
        "b3x3_2":   conv(ks[3], out_channels, out_channels, 3),
        "stk_1":    conv(ks[4], out_channels, in_channels, 1),
        "stk_2":    conv(ks[5], out_channels, out_channels, 3),
        "stk_3":    conv(ks[6], out_channels, out_channels, 3),
    }


def prepare_inception_params(p, cout):
    """Fuse + pad weights into lane-dense (K_pad, 128k) bf16 matmul operands."""
    def mat1x1(w):                               # OIHW (O,I,1,1) -> (I, O)
        return w.reshape(w.shape[0], w.shape[1]).T

    def mat3x3(w):                               # OIHW -> (9*I, O), (kh,kw,ci)
        return jnp.transpose(w, (2, 3, 1, 0)).reshape(-1, w.shape[0])

    def pad_mat(m, rows, cols):
        return jnp.pad(m, ((0, rows - m.shape[0]), (0, cols - m.shape[1])))

    def pad_vec(v, cols):
        return jnp.pad(v, (0, cols - v.shape[0])).reshape(1, cols)

    # stage 1: the four 1x1 convs that read x, fused along Cout
    names1 = ["pool_1x1", "b1x1", "b3x3_1", "stk_1"]
    w1 = jnp.concatenate([mat1x1(p[n][0]) for n in names1], axis=1)
    g1 = jnp.concatenate([p[n][1] for n in names1])
    b1 = jnp.concatenate([p[n][2] for n in names1])
    k1p, n1p = _round_up(w1.shape[0], LANES), _round_up(w1.shape[1], LANES)

    # stage 2: b3x3_2 and stk_2 fused block-diagonally (disjoint input groups)
    wa, ga, ba = p["b3x3_2"]
    wb, gb, bb = p["stk_2"]
    zeros = jnp.zeros((cout, cout), jnp.float32)
    taps = []
    for kh in range(3):
        for kw in range(3):
            top = jnp.concatenate([wa[:, :, kh, kw].T, zeros], axis=1)
            bot = jnp.concatenate([zeros, wb[:, :, kh, kw].T], axis=1)
            taps.append(jnp.concatenate([top, bot], axis=0))
    w2 = jnp.concatenate(taps, axis=0)           # (18*cout, 2*cout)
    g2 = jnp.concatenate([ga, gb])
    b2 = jnp.concatenate([ba, bb])
    k2p, n2p = _round_up(w2.shape[0], LANES), _round_up(w2.shape[1], LANES)

    # stage 3: stk_3
    wc, gc, bc = p["stk_3"]
    w3 = mat3x3(wc)
    k3p, n3p = _round_up(w3.shape[0], LANES), _round_up(w3.shape[1], LANES)

    return {
        "w1": pad_mat(w1, k1p, n1p).astype(jnp.bfloat16),
        "g1": pad_vec(g1, n1p), "b1": pad_vec(b1, n1p),
        "w2": pad_mat(w2, k2p, n2p).astype(jnp.bfloat16),
        "g2": pad_vec(g2, n2p), "b2": pad_vec(b2, n2p),
        "w3": pad_mat(w3, k3p, n3p).astype(jnp.bfloat16),
        "g3": pad_vec(gc, n3p), "b3": pad_vec(bc, n3p),
    }


# --------------------------------- forward ----------------------------------

def inception_forward(x_nchw, fp, *, cout):
    N, cin, H, W = x_nchw.shape
    M = N * H * W
    Mp = _round_up(M, TILE_M)
    x_nhwc = jnp.transpose(x_nchw, (0, 2, 3, 1))

    # ---- stage 1: fused 1x1 convs [pool_1x1 | b1x1 | b3x3_1 | stk_1] ----
    x1 = _pad_to(x_nhwc.reshape(M, cin).astype(jnp.bfloat16),
                 (Mp, fp["w1"].shape[0]))
    y1, s1, q1 = _matmul_stats(x1, fp["w1"])                 # (Mp, 128)

    # 3x3 avg-pool (count_include_pad=False) of the pool-branch conv output.
    # AvgPool and 1x1-conv commute exactly, so this equals conv1x1(avgpool(x)).
    n1p = y1.shape[1]
    y1_sp = jnp.pad(y1[:M].reshape(N, H, W, n1p),
                    ((0, 0), (1, 1), (1, 1), (0, 0)))
    inv_cnt = jnp.asarray(1.0 / _count_map(H, W),
                          jnp.float32).reshape(1, H, W, 1)
    yp, sp, qp = _pool_stats(y1_sp, inv_cnt)
    yp_flat = _pad_to(yp.reshape(M, n1p), (Mp, n1p))

    z1 = _bn_lrelu_pool(y1, yp_flat, s1, q1, sp, qp, fp["g1"], fp["b1"],
                        m_real=M, n_pool=cout)
    # z1 columns: [0:C) pool-branch out, [C:2C) b1x1 out,
    #             [2C:3C) b3x3_1 act,    [3C:4C) stk_1 act

    # ---- stage 2: fused 3x3 convs (b3x3_2 (+) stk_2, block diagonal) ----
    act2 = z1[:M, 2 * cout:4 * cout].reshape(N, H, W, 2 * cout)
    x2 = _pad_to(_im2col3_nhwc(act2).astype(jnp.bfloat16),
                 (Mp, fp["w2"].shape[0]))
    y2, s2, q2 = _matmul_stats(x2, fp["w2"])
    z2 = _bn_lrelu(y2, s2, q2, fp["g2"], fp["b2"], m_real=M)
    # z2 columns: [0:C) b3x3-branch out, [C:2C) stk_2 act

    # ---- stage 3: stk_3 ----
    act3 = z2[:M, cout:2 * cout].reshape(N, H, W, cout)
    x3 = _pad_to(_im2col3_nhwc(act3).astype(jnp.bfloat16),
                 (Mp, fp["w3"].shape[0]))
    y3, s3, q3 = _matmul_stats(x3, fp["w3"])
    z3 = _bn_lrelu(y3, s3, q3, fp["g3"], fp["b3"], m_real=M)

    # ---- assemble channels-last, single transpose back to NCHW ----
    out_nhwc = jnp.concatenate(
        [z1[:M, :2 * cout], z2[:M, :cout], z3[:M, :cout]], axis=-1
    ).reshape(N, H, W, 4 * cout)
    return jnp.transpose(out_nhwc, (0, 3, 1, 2))


# ------------------------------ pure-JAX reference --------------------------
# Conv operands are cast to bf16 (matching the kernel's MXU precision) with
# f32 accumulation / BN, so the tolerance stays tight.

def _ref_basic(x, w, gamma, beta):
    pad = (w.shape[2] - 1) // 2
    y = jax.lax.conv_general_dilated(
        x.astype(jnp.bfloat16), w.astype(jnp.bfloat16), (1, 1),
        [(pad, pad), (pad, pad)],
        dimension_numbers=("NCHW", "OIHW", "NCHW"),
        preferred_element_type=jnp.float32)
    mean = y.mean(axis=(0, 2, 3), keepdims=True)
    var = ((y - mean) ** 2).mean(axis=(0, 2, 3), keepdims=True)
    yn = (y - mean) / jnp.sqrt(var + EPS)
    yn = yn * gamma.reshape(1, -1, 1, 1) + beta.reshape(1, -1, 1, 1)
    return jnp.where(yn >= 0, yn, SLOPE * yn)


def _ref_avgpool3(x):
    N, C, H, W = x.shape
    s = jax.lax.reduce_window(x, 0.0, jax.lax.add, (1, 1, 3, 3), (1, 1, 1, 1),
                              [(0, 0), (0, 0), (1, 1), (1, 1)])
    return s / jnp.asarray(_count_map(H, W))[None, None]


def _ref_inception(x, p):
    b_pool = _ref_basic(_ref_avgpool3(x), *p["pool_1x1"])
    b_1x1 = _ref_basic(x, *p["b1x1"])
    b_3x3 = _ref_basic(_ref_basic(x, *p["b3x3_1"]), *p["b3x3_2"])
    b_stk = _ref_basic(_ref_basic(_ref_basic(x, *p["stk_1"]), *p["stk_2"]),
                       *p["stk_3"])
    return jnp.concatenate([b_pool, b_1x1, b_3x3, b_stk], axis=1)


# ----------------------------------- main ------------------------------------

if __name__ == "__main__":
    N, C_IN, C_OUT, H, W = 2, 4, 8, 16, 16
    key = jax.random.PRNGKey(0)
    kx, kp = jax.random.split(key)
    x = jax.random.normal(kx, (N, C_IN, H, W), jnp.float32)
    params = init_inception_params(kp, C_IN, C_OUT)
    fparams = prepare_inception_params(params, C_OUT)

    fwd = jax.jit(functools.partial(inception_forward, cout=C_OUT))
    out = jax.block_until_ready(fwd(x, fparams))
    assert out.shape == (N, 4 * C_OUT, H, W), out.shape

    ref = jax.block_until_ready(_ref_inception(x, params))
    np.testing.assert_allclose(np.asarray(out), np.asarray(ref),
                               rtol=5e-2, atol=5e-2)
    print("KERNEL_OK")
</pallas_src>

<mosaic_0001>
module attributes {stable_mosaic.version = 11 : i64} {
  func.func @_matmul_stats_kernel(%arg0: i32, %arg1: memref<256x128xbf16, #tpu.memory_space<vmem>>, %arg2: memref<128x128xbf16, #tpu.memory_space<vmem>>, %arg3: memref<256x128xf32, #tpu.memory_space<vmem>>, %arg4: memref<1x128xf32, #tpu.memory_space<vmem>>, %arg5: memref<1x128xf32, #tpu.memory_space<vmem>>, %arg6: memref<1x128xf32, #tpu.memory_space<vmem>>, %arg7: memref<1x128xf32, #tpu.memory_space<vmem>>) attributes {dimension_semantics = [#tpu.dimension_semantics<arbitrary>], iteration_bounds = array<i64: 2>, scalar_prefetch = 0 : i64, scratch_operands = 2 : i64, tpu.core_type = #tpu.core_type<tc>, window_params = [{transform_indices = @transform_0, window_bounds = array<i64: 256, 128>}, {pipeline_mode = #tpu.pipeline_mode<synchronous>, transform_indices = @transform_1, window_bounds = array<i64: 128, 128>}, {transform_indices = @transform_2, window_bounds = array<i64: 256, 128>}, {pipeline_mode = #tpu.pipeline_mode<synchronous>, transform_indices = @transform_3, window_bounds = array<i64: 1, 128>}, {pipeline_mode = #tpu.pipeline_mode<synchronous>, transform_indices = @transform_4, window_bounds = array<i64: 1, 128>}]} {
    %c0_i32 = arith.constant 0 : i32
    %0 = arith.cmpi eq, %arg0, %c0_i32 : i32
    %1 = arith.extui %0 : i1 to i32
    %c0_i32_0 = arith.constant 0 : i32
    %2 = arith.cmpi ne, %1, %c0_i32_0 : i32
    scf.if %2 {
      %cst_17 = arith.constant 0.000000e+00 : f32
      %21 = vector.broadcast %cst_17 : f32 to vector<1x128xf32>
      %c0_18 = arith.constant 0 : index
      %c0_19 = arith.constant 0 : index
      %22 = vector.load %arg6[%c0_18, %c0_19] : memref<1x128xf32, #tpu.memory_space<vmem>>, vector<1x128xf32>
      tpu.vector_store %arg6[%c0_18, %c0_19], %21 {strides = array<i32>} : memref<1x128xf32, #tpu.memory_space<vmem>>, vector<1x128xf32>,
      %cst_20 = arith.constant 0.000000e+00 : f32
      %23 = vector.broadcast %cst_20 : f32 to vector<1x128xf32>
      %c0_21 = arith.constant 0 : index
      %c0_22 = arith.constant 0 : index
      %24 = vector.load %arg7[%c0_21, %c0_22] : memref<1x128xf32, #tpu.memory_space<vmem>>, vector<1x128xf32>
      tpu.vector_store %arg7[%c0_21, %c0_22], %23 {strides = array<i32>} : memref<1x128xf32, #tpu.memory_space<vmem>>, vector<1x128xf32>,
    } else {
    }
    %c0 = arith.constant 0 : index
    %c0_1 = arith.constant 0 : index
    %3 = vector.load %arg1[%c0, %c0_1] : memref<256x128xbf16, #tpu.memory_space<vmem>>, vector<256x128xbf16>
    %c0_2 = arith.constant 0 : index
    %c0_3 = arith.constant 0 : index
    %4 = vector.load %arg2[%c0_2, %c0_3] : memref<128x128xbf16, #tpu.memory_space<vmem>>, vector<128x128xbf16>
    %cst = arith.constant dense<0.000000e+00> : vector<256x128xf32>
    %5 = tpu.matmul %3, %4, %cst {dimension_numbers = #tpu.dot_dimension_numbers<[1], [0], [0], [1], [0, 0, 1, 1], [], []>} : vector<256x128xbf16>, vector<128x128xbf16>, vector<256x128xf32> -> vector<256x128xf32>
    %c0_4 = arith.constant 0 : index
    %c0_5 = arith.constant 0 : index
    %6 = vector.load %arg3[%c0_4, %c0_5] : memref<256x128xf32, #tpu.memory_space<vmem>>, vector<256x128xf32>
    tpu.vector_store %arg3[%c0_4, %c0_5], %5 {strides = array<i32>} : memref<256x128xf32, #tpu.memory_space<vmem>>, vector<256x128xf32>,
    %c0_6 = arith.constant 0 : index
    %c0_7 = arith.constant 0 : index
    %7 = vector.load %arg6[%c0_6, %c0_7] : memref<1x128xf32, #tpu.memory_space<vmem>>, vector<1x128xf32>
    %cst_8 = arith.constant dense<0.000000e+00> : vector<128xf32>
    %8 = vector.multi_reduction <add>, %5, %cst_8 [0] : vector<256x128xf32> to vector<128xf32>
    %9 = vector.shape_cast %8 : vector<128xf32> to vector<1x128xf32>
    %10 = arith.addf %7, %9 : vector<1x128xf32>
    %c0_9 = arith.constant 0 : index
    %c0_10 = arith.constant 0 : index
    %11 = vector.load %arg6[%c0_9, %c0_10] : memref<1x128xf32, #tpu.memory_space<vmem>>, vector<1x128xf32>
    tpu.vector_store %arg6[%c0_9, %c0_10], %10 {strides = array<i32>} : memref<1x128xf32, #tpu.memory_space<vmem>>, vector<1x128xf32>,
    %c0_11 = arith.constant 0 : index
    %c0_12 = arith.constant 0 : index
    %12 = vector.load %arg7[%c0_11, %c0_12] : memref<1x128xf32, #tpu.memory_space<vmem>>, vector<1x128xf32>
    %13 = arith.mulf %5, %5 : vector<256x128xf32>
    %cst_13 = arith.constant dense<0.000000e+00> : vector<128xf32>
    %14 = vector.multi_reduction <add>, %13, %cst_13 [0] : vector<256x128xf32> to vector<128xf32>
    %15 = vector.shape_cast %14 : vector<128xf32> to vector<1x128xf32>
    %16 = arith.addf %12, %15 : vector<1x128xf32>
    %c0_14 = arith.constant 0 : index
    %c0_15 = arith.constant 0 : index
    %17 = vector.load %arg7[%c0_14, %c0_15] : memref<1x128xf32, #tpu.memory_space<vmem>>, vector<1x128xf32>
    tpu.vector_store %arg7[%c0_14, %c0_15], %16 {strides = array<i32>} : memref<1x128xf32, #tpu.memory_space<vmem>>, vector<1x128xf32>,
    %c1_i32 = arith.constant 1 : i32
    %18 = arith.cmpi eq, %arg0, %c1_i32 : i32
    %19 = arith.extui %18 : i1 to i32
    %c0_i32_16 = arith.constant 0 : i32
    %20 = arith.cmpi ne, %19, %c0_i32_16 : i32
    scf.if %20 {
      %c0_17 = arith.constant 0 : index
      %c0_18 = arith.constant 0 : index
      %21 = vector.load %arg6[%c0_17, %c0_18] : memref<1x128xf32, #tpu.memory_space<vmem>>, vector<1x128xf32>
      %c0_19 = arith.constant 0 : index
      %c0_20 = arith.constant 0 : index
      %22 = vector.load %arg4[%c0_19, %c0_20] : memref<1x128xf32, #tpu.memory_space<vmem>>, vector<1x128xf32>
      tpu.vector_store %arg4[%c0_19, %c0_20], %21 {strides = array<i32>} : memref<1x128xf32, #tpu.memory_space<vmem>>, vector<1x128xf32>,
      %c0_21 = arith.constant 0 : index
      %c0_22 = arith.constant 0 : index
      %23 = vector.load %arg7[%c0_21, %c0_22] : memref<1x128xf32, #tpu.memory_space<vmem>>, vector<1x128xf32>
      %c0_23 = arith.constant 0 : index
      %c0_24 = arith.constant 0 : index
      %24 = vector.load %arg5[%c0_23, %c0_24] : memref<1x128xf32, #tpu.memory_space<vmem>>, vector<1x128xf32>
      tpu.vector_store %arg5[%c0_23, %c0_24], %23 {strides = array<i32>} : memref<1x128xf32, #tpu.memory_space<vmem>>, vector<1x128xf32>,
    } else {
    }
    return
  }
  func.func @transform_0(%arg0: i32) -> (i32, i32) {
    %c0_i32 = arith.constant 0 : i32
    %c0_i32_0 = arith.constant 0 : i32
    return %arg0, %c0_i32 : i32, i32
  }
  func.func @transform_1(%arg0: i32) -> (i32, i32) {
    %c0_i32 = arith.constant 0 : i32
    %c0_i32_0 = arith.constant 0 : i32
    %c0_i32_1 = arith.constant 0 : i32
    return %c0_i32, %c0_i32_0 : i32, i32
  }
  func.func @transform_2(%arg0: i32) -> (i32, i32) {
    %c0_i32 = arith.constant 0 : i32
    %c0_i32_0 = arith.constant 0 : i32
    return %arg0, %c0_i32 : i32, i32
  }
  func.func @transform_3(%arg0: i32) -> (i32, i32) {
    %c0_i32 = arith.constant 0 : i32
    %c0_i32_0 = arith.constant 0 : i32
    %c0_i32_1 = arith.constant 0 : i32
    return %c0_i32, %c0_i32_0 : i32, i32
  }
  func.func @transform_4(%arg0: i32) -> (i32, i32) {
    %c0_i32 = arith.constant 0 : i32
    %c0_i32_0 = arith.constant 0 : i32
    %c0_i32_1 = arith.constant 0 : i32
    return %c0_i32, %c0_i32_0 : i32, i32
  }
}

module attributes {stable_mosaic.version = 11 : i64} {
  func.func @_pool_stats_kernel(%arg0: i32, %arg1: memref<1x18x18x128xf32, #tpu.memory_space<vmem>>, %arg2: memref<1x16x16x1xf32, #tpu.memory_space<vmem>>, %arg3: memref<1x16x16x128xf32, #tpu.memory_space<vmem>>, %arg4: memref<1x128xf32, #tpu.memory_space<vmem>>, %arg5: memref<1x128xf32, #tpu.memory_space<vmem>>, %arg6: memref<1x128xf32, #tpu.memory_space<vmem>>, %arg7: memref<1x128xf32, #tpu.memory_space<vmem>>) attributes {dimension_semantics = [#tpu.dimension_semantics<arbitrary>], iteration_bounds = array<i64: 2>, scalar_prefetch = 0 : i64, scratch_operands = 2 : i64, tpu.core_type = #tpu.core_type<tc>, window_params = [{transform_indices = @transform_0, window_bounds = array<i64: 1, 18, 18, 128>}, {pipeline_mode = #tpu.pipeline_mode<synchronous>, transform_indices = @transform_1, window_bounds = array<i64: 1, 16, 16, 1>}, {transform_indices = @transform_2, window_bounds = array<i64: 1, 16, 16, 128>}, {pipeline_mode = #tpu.pipeline_mode<synchronous>, transform_indices = @transform_3, window_bounds = array<i64: 1, 128>}, {pipeline_mode = #tpu.pipeline_mode<synchronous>, transform_indices = @transform_4, window_bounds = array<i64: 1, 128>}]} {
    %c0_i32 = arith.constant 0 : i32
    %0 = arith.cmpi eq, %arg0, %c0_i32 : i32
    %1 = arith.extui %0 : i1 to i32
    %c0_i32_0 = arith.constant 0 : i32
    %2 = arith.cmpi ne, %1, %c0_i32_0 : i32
    scf.if %2 {
      %cst_23 = arith.constant 0.000000e+00 : f32
      %42 = vector.broadcast %cst_23 : f32 to vector<1x128xf32>
      %c0_24 = arith.constant 0 : index
      %c0_25 = arith.constant 0 : index
      %43 = vector.load %arg6[%c0_24, %c0_25] : memref<1x128xf32, #tpu.memory_space<vmem>>, vector<1x128xf32>
      tpu.vector_store %arg6[%c0_24, %c0_25], %42 {strides = array<i32>} : memref<1x128xf32, #tpu.memory_space<vmem>>, vector<1x128xf32>,
      %cst_26 = arith.constant 0.000000e+00 : f32
      %44 = vector.broadcast %cst_26 : f32 to vector<1x128xf32>
      %c0_27 = arith.constant 0 : index
      %c0_28 = arith.constant 0 : index
      %45 = vector.load %arg7[%c0_27, %c0_28] : memref<1x128xf32, #tpu.memory_space<vmem>>, vector<1x128xf32>
      tpu.vector_store %arg7[%c0_27, %c0_28], %44 {strides = array<i32>} : memref<1x128xf32, #tpu.memory_space<vmem>>, vector<1x128xf32>,
    } else {
    }
    %c0 = arith.constant 0 : index
    %c0_1 = arith.constant 0 : index
    %c0_2 = arith.constant 0 : index
    %c0_3 = arith.constant 0 : index
    %3 = vector.load %arg1[%c0, %c0_1, %c0_2, %c0_3] : memref<1x18x18x128xf32, #tpu.memory_space<vmem>>, vector<1x18x18x128xf32>
    %cst = arith.constant 0.000000e+00 : f32
    %4 = vector.broadcast %cst : f32 to vector<1x16x16x128xf32>
    %5 = vector.extract_strided_slice %3 {offsets = [0, 0, 0, 0], sizes = [1, 16, 16, 128], strides = [1, 1, 1, 1]} : vector<1x18x18x128xf32> to vector<1x16x16x128xf32>
    %6 = arith.addf %4, %5 : vector<1x16x16x128xf32>
    %7 = vector.extract_strided_slice %3 {offsets = [0, 0, 1, 0], sizes = [1, 16, 16, 128], strides = [1, 1, 1, 1]} : vector<1x18x18x128xf32> to vector<1x16x16x128xf32>
    %8 = arith.addf %6, %7 : vector<1x16x16x128xf32>
    %9 = vector.extract_strided_slice %3 {offsets = [0, 0, 2, 0], sizes = [1, 16, 16, 128], strides = [1, 1, 1, 1]} : vector<1x18x18x128xf32> to vector<1x16x16x128xf32>
    %10 = arith.addf %8, %9 : vector<1x16x16x128xf32>
    %11 = vector.extract_strided_slice %3 {offsets = [0, 1, 0, 0], sizes = [1, 16, 16, 128], strides = [1, 1, 1, 1]} : vector<1x18x18x128xf32> to vector<1x16x16x128xf32>
    %12 = arith.addf %10, %11 : vector<1x16x16x128xf32>
    %13 = vector.extract_strided_slice %3 {offsets = [0, 1, 1, 0], sizes = [1, 16, 16, 128], strides = [1, 1, 1, 1]} : vector<1x18x18x128xf32> to vector<1x16x16x128xf32>
    %14 = arith.addf %12, %13 : vector<1x16x16x128xf32>
    %15 = vector.extract_strided_slice %3 {offsets = [0, 1, 2, 0], sizes = [1, 16, 16, 128], strides = [1, 1, 1, 1]} : vector<1x18x18x128xf32> to vector<1x16x16x128xf32>
    %16 = arith.addf %14, %15 : vector<1x16x16x128xf32>
    %17 = vector.extract_strided_slice %3 {offsets = [0, 2, 0, 0], sizes = [1, 16, 16, 128], strides = [1, 1, 1, 1]} : vector<1x18x18x128xf32> to vector<1x16x16x128xf32>
    %18 = arith.addf %16, %17 : vector<1x16x16x128xf32>
    %19 = vector.extract_strided_slice %3 {offsets = [0, 2, 1, 0], sizes = [1, 16, 16, 128], strides = [1, 1, 1, 1]} : vector<1x18x18x128xf32> to vector<1x16x16x128xf32>
    %20 = arith.addf %18, %19 : vector<1x16x16x128xf32>
    %21 = vector.extract_strided_slice %3 {offsets = [0, 2, 2, 0], sizes = [1, 16, 16, 128], strides = [1, 1, 1, 1]} : vector<1x18x18x128xf32> to vector<1x16x16x128xf32>
    %22 = arith.addf %20, %21 : vector<1x16x16x128xf32>
    %c0_4 = arith.constant 0 : index
    %c0_5 = arith.constant 0 : index
    %c0_6 = arith.constant 0 : index
    %c0_7 = arith.constant 0 : index
    %23 = vector.load %arg2[%c0_4, %c0_5, %c0_6, %c0_7] : memref<1x16x16x1xf32, #tpu.memory_space<vmem>>, vector<1x16x16x1xf32>
    %24 = vector.broadcast %23 : vector<1x16x16x1xf32> to vector<1x16x16x128xf32>
    %25 = arith.mulf %22, %24 : vector<1x16x16x128xf32>
    %c0_8 = arith.constant 0 : index
    %c0_9 = arith.constant 0 : index
    %c0_10 = arith.constant 0 : index
    %c0_11 = arith.constant 0 : index
    %26 = vector.load %arg3[%c0_8, %c0_9, %c0_10, %c0_11] : memref<1x16x16x128xf32, #tpu.memory_space<vmem>>, vector<1x16x16x128xf32>
    tpu.vector_store %arg3[%c0_8, %c0_9, %c0_10, %c0_11], %25 {strides = array<i32>} : memref<1x16x16x128xf32, #tpu.memory_space<vmem>>, vector<1x16x16x128xf32>,
    %27 = vector.shape_cast %25 : vector<1x16x16x128xf32> to vector<256x128xf32>
    %c0_12 = arith.constant 0 : index
    %c0_13 = arith.constant 0 : index
    %28 = vector.load %arg6[%c0_12, %c0_13] : memref<1x128xf32, #tpu.memory_space<vmem>>, vector<1x128xf32>
    %cst_14 = arith.constant dense<0.000000e+00> : vector<128xf32>
    %29 = vector.multi_reduction <add>, %27, %cst_14 [0] : vector<256x128xf32> to vector<128xf32>
    %30 = vector.shape_cast %29 : vector<128xf32> to vector<1x128xf32>
    %31 = arith.addf %28, %30 : vector<1x128xf32>
    %c0_15 = arith.constant 0 : index
    %c0_16 = arith.constant 0 : index
    %32 = vector.load %arg6[%c0_15, %c0_16] : memref<1x128xf32, #tpu.memory_space<vmem>>, vector<1x128xf32>
    tpu.vector_store %arg6[%c0_15, %c0_16], %31 {strides = array<i32>} : memref<1x128xf32, #tpu.memory_space<vmem>>, vector<1x128xf32>,
    %c0_17 = arith.constant 0 : index
    %c0_18 = arith.constant 0 : index
    %33 = vector.load %arg7[%c0_17, %c0_18] : memref<1x128xf32, #tpu.memory_space<vmem>>, vector<1x128xf32>
    %34 = arith.mulf %27, %27 : vector<256x128xf32>
    %cst_19 = arith.constant dense<0.000000e+00> : vector<128xf32>
    %35 = vector.multi_reduction <add>, %34, %cst_19 [0] : vector<256x128xf32> to vector<128xf32>
    %36 = vector.shape_cast %35 : vector<128xf32> to vector<1x128xf32>
    %37 = arith.addf %33, %36 : vector<1x128xf32>
    %c0_20 = arith.constant 0 : index
    %c0_21 = arith.constant 0 : index
    %38 = vector.load %arg7[%c0_20, %c0_21] : memref<1x128xf32, #tpu.memory_space<vmem>>, vector<1x128xf32>
    tpu.vector_store %arg7[%c0_20, %c0_21], %37 {strides = array<i32>} : memref<1x128xf32, #tpu.memory_space<vmem>>, vector<1x128xf32>,
    %c1_i32 = arith.constant 1 : i32
    %39 = arith.cmpi eq, %arg0, %c1_i32 : i32
    %40 = arith.extui %39 : i1 to i32
    %c0_i32_22 = arith.constant 0 : i32
    %41 = arith.cmpi ne, %40, %c0_i32_22 : i32
    scf.if %41 {
      %c0_23 = arith.constant 0 : index
      %c0_24 = arith.constant 0 : index
      %42 = vector.load %arg6[%c0_23, %c0_24] : memref<1x128xf32, #tpu.memory_space<vmem>>, vector<1x128xf32>
      %c0_25 = arith.constant 0 : index
      %c0_26 = arith.constant 0 : index
      %43 = vector.load %arg4[%c0_25, %c0_26] : memref<1x128xf32, #tpu.memory_space<vmem>>, vector<1x128xf32>
      tpu.vector_store %arg4[%c0_25, %c0_26], %42 {strides = array<i32>} : memref<1x128xf32, #tpu.memory_space<vmem>>, vector<1x128xf32>,
      %c0_27 = arith.constant 0 : index
      %c0_28 = arith.constant 0 : index
      %44 = vector.load %arg7[%c0_27, %c0_28] : memref<1x128xf32, #tpu.memory_space<vmem>>, vector<1x128xf32>
      %c0_29 = arith.constant 0 : index
      %c0_30 = arith.constant 0 : index
      %45 = vector.load %arg5[%c0_29, %c0_30] : memref<1x128xf32, #tpu.memory_space<vmem>>, vector<1x128xf32>
      tpu.vector_store %arg5[%c0_29, %c0_30], %44 {strides = array<i32>} : memref<1x128xf32, #tpu.memory_space<vmem>>, vector<1x128xf32>,
    } else {
    }
    return
  }
  func.func @transform_0(%arg0: i32) -> (i32, i32, i32, i32) {
    %c0_i32 = arith.constant 0 : i32
    %c0_i32_0 = arith.constant 0 : i32
    %c0_i32_1 = arith.constant 0 : i32
    %c0_i32_2 = arith.constant 0 : i32
    return %arg0, %c0_i32, %c0_i32_0, %c0_i32_1 : i32, i32, i32, i32
  }
  func.func @transform_1(%arg0: i32) -> (i32, i32, i32, i32) {
    %c0_i32 = arith.constant 0 : i32
    %c0_i32_0 = arith.constant 0 : i32
    %c0_i32_1 = arith.constant 0 : i32
    %c0_i32_2 = arith.constant 0 : i32
    %c0_i32_3 = arith.constant 0 : i32
    return %c0_i32, %c0_i32_0, %c0_i32_1, %c0_i32_2 : i32, i32, i32, i32
  }
  func.func @transform_2(%arg0: i32) -> (i32, i32, i32, i32) {
    %c0_i32 = arith.constant 0 : i32
    %c0_i32_0 = arith.constant 0 : i32
    %c0_i32_1 = arith.constant 0 : i32
    %c0_i32_2 = arith.constant 0 : i32
    return %arg0, %c0_i32, %c0_i32_0, %c0_i32_1 : i32, i32, i32, i32
  }
  func.func @transform_3(%arg0: i32) -> (i32, i32) {
    %c0_i32 = arith.constant 0 : i32
    %c0_i32_0 = arith.constant 0 : i32
    %c0_i32_1 = arith.constant 0 : i32
    return %c0_i32, %c0_i32_0 : i32, i32
  }
  func.func @transform_4(%arg0: i32) -> (i32, i32) {
    %c0_i32 = arith.constant 0 : i32
    %c0_i32_0 = arith.constant 0 : i32
    %c0_i32_1 = arith.constant 0 : i32
    return %c0_i32, %c0_i32_0 : i32, i32
  }
}

module attributes {stable_mosaic.version = 11 : i64} {
  func.func @_bn_lrelu_pool_kernel(%arg0: i32, %arg1: memref<256x128xf32, #tpu.memory_space<vmem>>, %arg2: memref<256x128xf32, #tpu.memory_space<vmem>>, %arg3: memref<1x128xf32, #tpu.memory_space<vmem>>, %arg4: memref<1x128xf32, #tpu.memory_space<vmem>>, %arg5: memref<1x128xf32, #tpu.memory_space<vmem>>, %arg6: memref<1x128xf32, #tpu.memory_space<vmem>>, %arg7: memref<1x128xf32, #tpu.memory_space<vmem>>, %arg8: memref<1x128xf32, #tpu.memory_space<vmem>>, %arg9: memref<256x128xf32, #tpu.memory_space<vmem>>) attributes {dimension_semantics = [#tpu.dimension_semantics<parallel>], iteration_bounds = array<i64: 2>, scalar_prefetch = 0 : i64, scratch_operands = 0 : i64, tpu.core_type = #tpu.core_type<tc>, window_params = [{transform_indices = @transform_0, window_bounds = array<i64: 256, 128>}, {transform_indices = @transform_1, window_bounds = array<i64: 256, 128>}, {pipeline_mode = #tpu.pipeline_mode<synchronous>, transform_indices = @transform_2, window_bounds = array<i64: 1, 128>}, {pipeline_mode = #tpu.pipeline_mode<synchronous>, transform_indices = @transform_3, window_bounds = array<i64: 1, 128>}, {pipeline_mode = #tpu.pipeline_mode<synchronous>, transform_indices = @transform_4, window_bounds = array<i64: 1, 128>}, {pipeline_mode = #tpu.pipeline_mode<synchronous>, transform_indices = @transform_5, window_bounds = array<i64: 1, 128>}, {pipeline_mode = #tpu.pipeline_mode<synchronous>, transform_indices = @transform_6, window_bounds = array<i64: 1, 128>}, {pipeline_mode = #tpu.pipeline_mode<synchronous>, transform_indices = @transform_7, window_bounds = array<i64: 1, 128>}, {transform_indices = @transform_8, window_bounds = array<i64: 256, 128>}]} {
    %0 = tpu.iota {dimensions = array<i32: 1>} : vector<1x128xi32>
    %c8_i32 = arith.constant 8 : i32
    %1 = vector.broadcast %c8_i32 : i32 to vector<1x128xi32>
    %2 = arith.cmpi slt, %0, %1 : vector<1x128xi32>
    %c0 = arith.constant 0 : index
    %c0_0 = arith.constant 0 : index
    %3 = vector.load %arg5[%c0, %c0_0] : memref<1x128xf32, #tpu.memory_space<vmem>>, vector<1x128xf32>
    %c0_1 = arith.constant 0 : index
    %c0_2 = arith.constant 0 : index
    %4 = vector.load %arg3[%c0_1, %c0_2] : memref<1x128xf32, #tpu.memory_space<vmem>>, vector<1x128xf32>
    %5 = arith.select %2, %3, %4 : vector<1x128xi1>, vector<1x128xf32>
    %c0_3 = arith.constant 0 : index
    %c0_4 = arith.constant 0 : index
    %6 = vector.load %arg6[%c0_3, %c0_4] : memref<1x128xf32, #tpu.memory_space<vmem>>, vector<1x128xf32>
    %c0_5 = arith.constant 0 : index
    %c0_6 = arith.constant 0 : index
    %7 = vector.load %arg4[%c0_5, %c0_6] : memref<1x128xf32, #tpu.memory_space<vmem>>, vector<1x128xf32>
    %8 = arith.select %2, %6, %7 : vector<1x128xi1>, vector<1x128xf32>
    %cst = arith.constant 0.001953125 : f32
    %9 = vector.broadcast %cst : f32 to vector<1x128xf32>
    %10 = arith.mulf %5, %9 : vector<1x128xf32>
    %cst_7 = arith.constant 0.001953125 : f32
    %11 = vector.broadcast %cst_7 : f32 to vector<1x128xf32>
    %12 = arith.mulf %8, %11 : vector<1x128xf32>
    %13 = arith.mulf %10, %10 : vector<1x128xf32>
    %14 = arith.subf %12, %13 : vector<1x128xf32>
    %cst_8 = arith.constant 0.000000e+00 : f32
    %15 = vector.broadcast %cst_8 : f32 to vector<1x128xf32>
    %16 = arith.maximumf %14, %15 : vector<1x128xf32>
    %cst_9 = arith.constant 9.99999974E-6 : f32
    %17 = vector.broadcast %cst_9 : f32 to vector<1x128xf32>
    %18 = arith.addf %16, %17 : vector<1x128xf32>
    %19 = math.rsqrt %18 : vector<1x128xf32>
    %c0_10 = arith.constant 0 : index
    %c0_11 = arith.constant 0 : index
    %20 = vector.load %arg7[%c0_10, %c0_11] : memref<1x128xf32, #tpu.memory_space<vmem>>, vector<1x128xf32>
    %21 = arith.mulf %19, %20 : vector<1x128xf32>
    %c0_12 = arith.constant 0 : index
    %c0_13 = arith.constant 0 : index
    %22 = vector.load %arg2[%c0_12, %c0_13] : memref<256x128xf32, #tpu.memory_space<vmem>>, vector<256x128xf32>
    %c0_14 = arith.constant 0 : index
    %c0_15 = arith.constant 0 : index
    %23 = vector.load %arg1[%c0_14, %c0_15] : memref<256x128xf32, #tpu.memory_space<vmem>>, vector<256x128xf32>
    %24 = vector.shape_cast %2 : vector<1x128xi1> to vector<1x128xi1>
    %25 = vector.broadcast %24 : vector<1x128xi1> to vector<256x128xi1>
    %26 = arith.select %25, %22, %23 : vector<256x128xi1>, vector<256x128xf32>
    %27 = vector.broadcast %10 : vector<1x128xf32> to vector<256x128xf32>
    %28 = arith.subf %26, %27 : vector<256x128xf32>
    %29 = vector.broadcast %21 : vector<1x128xf32> to vector<256x128xf32>
    %30 = arith.mulf %28, %29 : vector<256x128xf32>
    %c0_16 = arith.constant 0 : index
    %c0_17 = arith.constant 0 : index
    %31 = vector.load %arg8[%c0_16, %c0_17] : memref<1x128xf32, #tpu.memory_space<vmem>>, vector<1x128xf32>
    %32 = vector.broadcast %31 : vector<1x128xf32> to vector<256x128xf32>
    %33 = arith.addf %30, %32 : vector<256x128xf32>
    %cst_18 = arith.constant 0.000000e+00 : f32
    %34 = vector.broadcast %cst_18 : f32 to vector<256x128xf32>
    %35 = arith.cmpf oge, %33, %34 : vector<256x128xf32>
    %cst_19 = arith.constant 0.00999999977 : f32
    %36 = vector.broadcast %cst_19 : f32 to vector<256x128xf32>
    %37 = arith.mulf %36, %33 : vector<256x128xf32>
    %38 = arith.select %35, %33, %37 : vector<256x128xi1>, vector<256x128xf32>
    %c0_20 = arith.constant 0 : index
    %c0_21 = arith.constant 0 : index
    %39 = vector.load %arg9[%c0_20, %c0_21] : memref<256x128xf32, #tpu.memory_space<vmem>>, vector<256x128xf32>
    tpu.vector_store %arg9[%c0_20, %c0_21], %38 {strides = array<i32>} : memref<256x128xf32, #tpu.memory_space<vmem>>, vector<256x128xf32>,
    return
  }
  func.func @transform_0(%arg0: i32) -> (i32, i32) {
    %c0_i32 = arith.constant 0 : i32
    %c0_i32_0 = arith.constant 0 : i32
    return %arg0, %c0_i32 : i32, i32
  }
  func.func @transform_1(%arg0: i32) -> (i32, i32) {
    %c0_i32 = arith.constant 0 : i32
    %c0_i32_0 = arith.constant 0 : i32
    return %arg0, %c0_i32 : i32, i32
  }
  func.func @transform_2(%arg0: i32) -> (i32, i32) {
    %c0_i32 = arith.constant 0 : i32
    %c0_i32_0 = arith.constant 0 : i32
    %c0_i32_1 = arith.constant 0 : i32
    return %c0_i32, %c0_i32_0 : i32, i32
  }
  func.func @transform_3(%arg0: i32) -> (i32, i32) {
    %c0_i32 = arith.constant 0 : i32
    %c0_i32_0 = arith.constant 0 : i32
    %c0_i32_1 = arith.constant 0 : i32
    return %c0_i32, %c0_i32_0 : i32, i32
  }
  func.func @transform_4(%arg0: i32) -> (i32, i32) {
    %c0_i32 = arith.constant 0 : i32
    %c0_i32_0 = arith.constant 0 : i32
    %c0_i32_1 = arith.constant 0 : i32
    return %c0_i32, %c0_i32_0 : i32, i32
  }
  func.func @transform_5(%arg0: i32) -> (i32, i32) {
    %c0_i32 = arith.constant 0 : i32
    %c0_i32_0 = arith.constant 0 : i32
    %c0_i32_1 = arith.constant 0 : i32
    return %c0_i32, %c0_i32_0 : i32, i32
  }
  func.func @transform_6(%arg0: i32) -> (i32, i32) {
    %c0_i32 = arith.constant 0 : i32
    %c0_i32_0 = arith.constant 0 : i32
    %c0_i32_1 = arith.constant 0 : i32
    return %c0_i32, %c0_i32_0 : i32, i32
  }
  func.func @transform_7(%arg0: i32) -> (i32, i32) {
    %c0_i32 = arith.constant 0 : i32
    %c0_i32_0 = arith.constant 0 : i32
    %c0_i32_1 = arith.constant 0 : i32
    return %c0_i32, %c0_i32_0 : i32, i32
  }
  func.func @transform_8(%arg0: i32) -> (i32, i32) {
    %c0_i32 = arith.constant 0 : i32
    %c0_i32_0 = arith.constant 0 : i32
    return %arg0, %c0_i32 : i32, i32
  }
}

module attributes {stable_mosaic.version = 11 : i64} {
  func.func @_matmul_stats_kernel(%arg0: i32, %arg1: memref<256x256xbf16, #tpu.memory_space<vmem>>, %arg2: memref<256x128xbf16, #tpu.memory_space<vmem>>, %arg3: memref<256x128xf32, #tpu.memory_space<vmem>>, %arg4: memref<1x128xf32, #tpu.memory_space<vmem>>, %arg5: memref<1x128xf32, #tpu.memory_space<vmem>>, %arg6: memref<1x128xf32, #tpu.memory_space<vmem>>, %arg7: memref<1x128xf32, #tpu.memory_space<vmem>>) attributes {dimension_semantics = [#tpu.dimension_semantics<arbitrary>], iteration_bounds = array<i64: 2>, scalar_prefetch = 0 : i64, scratch_operands = 2 : i64, tpu.core_type = #tpu.core_type<tc>, window_params = [{transform_indices = @transform_0, window_bounds = array<i64: 256, 256>}, {pipeline_mode = #tpu.pipeline_mode<synchronous>, transform_indices = @transform_1, window_bounds = array<i64: 256, 128>}, {transform_indices = @transform_2, window_bounds = array<i64: 256, 128>}, {pipeline_mode = #tpu.pipeline_mode<synchronous>, transform_indices = @transform_3, window_bounds = array<i64: 1, 128>}, {pipeline_mode = #tpu.pipeline_mode<synchronous>, transform_indices = @transform_4, window_bounds = array<i64: 1, 128>}]} {
    %c0_i32 = arith.constant 0 : i32
    %0 = arith.cmpi eq, %arg0, %c0_i32 : i32
    %1 = arith.extui %0 : i1 to i32
    %c0_i32_0 = arith.constant 0 : i32
    %2 = arith.cmpi ne, %1, %c0_i32_0 : i32
    scf.if %2 {
      %cst_17 = arith.constant 0.000000e+00 : f32
      %21 = vector.broadcast %cst_17 : f32 to vector<1x128xf32>
      %c0_18 = arith.constant 0 : index
      %c0_19 = arith.constant 0 : index
      %22 = vector.load %arg6[%c0_18, %c0_19] : memref<1x128xf32, #tpu.memory_space<vmem>>, vector<1x128xf32>
      tpu.vector_store %arg6[%c0_18, %c0_19], %21 {strides = array<i32>} : memref<1x128xf32, #tpu.memory_space<vmem>>, vector<1x128xf32>,
      %cst_20 = arith.constant 0.000000e+00 : f32
      %23 = vector.broadcast %cst_20 : f32 to vector<1x128xf32>
      %c0_21 = arith.constant 0 : index
      %c0_22 = arith.constant 0 : index
      %24 = vector.load %arg7[%c0_21, %c0_22] : memref<1x128xf32, #tpu.memory_space<vmem>>, vector<1x128xf32>
      tpu.vector_store %arg7[%c0_21, %c0_22], %23 {strides = array<i32>} : memref<1x128xf32, #tpu.memory_space<vmem>>, vector<1x128xf32>,
    } else {
    }
    %c0 = arith.constant 0 : index
    %c0_1 = arith.constant 0 : index
    %3 = vector.load %arg1[%c0, %c0_1] : memref<256x256xbf16, #tpu.memory_space<vmem>>, vector<256x256xbf16>
    %c0_2 = arith.constant 0 : index
    %c0_3 = arith.constant 0 : index
    %4 = vector.load %arg2[%c0_2, %c0_3] : memref<256x128xbf16, #tpu.memory_space<vmem>>, vector<256x128xbf16>
    %cst = arith.constant dense<0.000000e+00> : vector<256x128xf32>
    %5 = tpu.matmul %3, %4, %cst {dimension_numbers = #tpu.dot_dimension_numbers<[1], [0], [0], [1], [0, 0, 1, 1], [], []>} : vector<256x256xbf16>, vector<256x128xbf16>, vector<256x128xf32> -> vector<256x128xf32>
    %c0_4 = arith.constant 0 : index
    %c0_5 = arith.constant 0 : index
    %6 = vector.load %arg3[%c0_4, %c0_5] : memref<256x128xf32, #tpu.memory_space<vmem>>, vector<256x128xf32>
    tpu.vector_store %arg3[%c0_4, %c0_5], %5 {strides = array<i32>} : memref<256x128xf32, #tpu.memory_space<vmem>>, vector<256x128xf32>,
    %c0_6 = arith.constant 0 : index
    %c0_7 = arith.constant 0 : index
    %7 = vector.load %arg6[%c0_6, %c0_7] : memref<1x128xf32, #tpu.memory_space<vmem>>, vector<1x128xf32>
    %cst_8 = arith.constant dense<0.000000e+00> : vector<128xf32>
    %8 = vector.multi_reduction <add>, %5, %cst_8 [0] : vector<256x128xf32> to vector<128xf32>
    %9 = vector.shape_cast %8 : vector<128xf32> to vector<1x128xf32>
    %10 = arith.addf %7, %9 : vector<1x128xf32>
    %c0_9 = arith.constant 0 : index
    %c0_10 = arith.constant 0 : index
    %11 = vector.load %arg6[%c0_9, %c0_10] : memref<1x128xf32, #tpu.memory_space<vmem>>, vector<1x128xf32>
    tpu.vector_store %arg6[%c0_9, %c0_10], %10 {strides = array<i32>} : memref<1x128xf32, #tpu.memory_space<vmem>>, vector<1x128xf32>,
    %c0_11 = arith.constant 0 : index
    %c0_12 = arith.constant 0 : index
    %12 = vector.load %arg7[%c0_11, %c0_12] : memref<1x128xf32, #tpu.memory_space<vmem>>, vector<1x128xf32>
    %13 = arith.mulf %5, %5 : vector<256x128xf32>
    %cst_13 = arith.constant dense<0.000000e+00> : vector<128xf32>
    %14 = vector.multi_reduction <add>, %13, %cst_13 [0] : vector<256x128xf32> to vector<128xf32>
    %15 = vector.shape_cast %14 : vector<128xf32> to vector<1x128xf32>
    %16 = arith.addf %12, %15 : vector<1x128xf32>
    %c0_14 = arith.constant 0 : index
    %c0_15 = arith.constant 0 : index
    %17 = vector.load %arg7[%c0_14, %c0_15] : memref<1x128xf32, #tpu.memory_space<vmem>>, vector<1x128xf32>
    tpu.vector_store %arg7[%c0_14, %c0_15], %16 {strides = array<i32>} : memref<1x128xf32, #tpu.memory_space<vmem>>, vector<1x128xf32>,
    %c1_i32 = arith.constant 1 : i32
    %18 = arith.cmpi eq, %arg0, %c1_i32 : i32
    %19 = arith.extui %18 : i1 to i32
    %c0_i32_16 = arith.constant 0 : i32
    %20 = arith.cmpi ne, %19, %c0_i32_16 : i32
    scf.if %20 {
      %c0_17 = arith.constant 0 : index
      %c0_18 = arith.constant 0 : index
      %21 = vector.load %arg6[%c0_17, %c0_18] : memref<1x128xf32, #tpu.memory_space<vmem>>, vector<1x128xf32>
      %c0_19 = arith.constant 0 : index
      %c0_20 = arith.constant 0 : index
      %22 = vector.load %arg4[%c0_19, %c0_20] : memref<1x128xf32, #tpu.memory_space<vmem>>, vector<1x128xf32>
      tpu.vector_store %arg4[%c0_19, %c0_20], %21 {strides = array<i32>} : memref<1x128xf32, #tpu.memory_space<vmem>>, vector<1x128xf32>,
      %c0_21 = arith.constant 0 : index
      %c0_22 = arith.constant 0 : index
      %23 = vector.load %arg7[%c0_21, %c0_22] : memref<1x128xf32, #tpu.memory_space<vmem>>, vector<1x128xf32>
      %c0_23 = arith.constant 0 : index
      %c0_24 = arith.constant 0 : index
      %24 = vector.load %arg5[%c0_23, %c0_24] : memref<1x128xf32, #tpu.memory_space<vmem>>, vector<1x128xf32>
      tpu.vector_store %arg5[%c0_23, %c0_24], %23 {strides = array<i32>} : memref<1x128xf32, #tpu.memory_space<vmem>>, vector<1x128xf32>,
    } else {
    }
    return
  }
  func.func @transform_0(%arg0: i32) -> (i32, i32) {
    %c0_i32 = arith.constant 0 : i32
    %c0_i32_0 = arith.constant 0 : i32
    return %arg0, %c0_i32 : i32, i32
  }
  func.func @transform_1(%arg0: i32) -> (i32, i32) {
    %c0_i32 = arith.constant 0 : i32
    %c0_i32_0 = arith.constant 0 : i32
    %c0_i32_1 = arith.constant 0 : i32
    return %c0_i32, %c0_i32_0 : i32, i32
  }
  func.func @transform_2(%arg0: i32) -> (i32, i32) {
    %c0_i32 = arith.constant 0 : i32
    %c0_i32_0 = arith.constant 0 : i32
    return %arg0, %c0_i32 : i32, i32
  }
  func.func @transform_3(%arg0: i32) -> (i32, i32) {
    %c0_i32 = arith.constant 0 : i32
    %c0_i32_0 = arith.constant 0 : i32
    %c0_i32_1 = arith.constant 0 : i32
    return %c0_i32, %c0_i32_0 : i32, i32
  }
  func.func @transform_4(%arg0: i32) -> (i32, i32) {
    %c0_i32 = arith.constant 0 : i32
    %c0_i32_0 = arith.constant 0 : i32
    %c0_i32_1 = arith.constant 0 : i32
    return %c0_i32, %c0_i32_0 : i32, i32
  }
}

module attributes {stable_mosaic.version = 11 : i64} {
  func.func @_bn_lrelu_kernel(%arg0: i32, %arg1: memref<256x128xf32, #tpu.memory_space<vmem>>, %arg2: memref<1x128xf32, #tpu.memory_space<vmem>>, %arg3: memref<1x128xf32, #tpu.memory_space<vmem>>, %arg4: memref<1x128xf32, #tpu.memory_space<vmem>>, %arg5: memref<1x128xf32, #tpu.memory_space<vmem>>, %arg6: memref<256x128xf32, #tpu.memory_space<vmem>>) attributes {dimension_semantics = [#tpu.dimension_semantics<parallel>], iteration_bounds = array<i64: 2>, scalar_prefetch = 0 : i64, scratch_operands = 0 : i64, tpu.core_type = #tpu.core_type<tc>, window_params = [{transform_indices = @transform_0, window_bounds = array<i64: 256, 128>}, {pipeline_mode = #tpu.pipeline_mode<synchronous>, transform_indices = @transform_1, window_bounds = array<i64: 1, 128>}, {pipeline_mode = #tpu.pipeline_mode<synchronous>, transform_indices = @transform_2, window_bounds = array<i64: 1, 128>}, {pipeline_mode = #tpu.pipeline_mode<synchronous>, transform_indices = @transform_3, window_bounds = array<i64: 1, 128>}, {pipeline_mode = #tpu.pipeline_mode<synchronous>, transform_indices = @transform_4, window_bounds = array<i64: 1, 128>}, {transform_indices = @transform_5, window_bounds = array<i64: 256, 128>}]} {
    %c0 = arith.constant 0 : index
    %c0_0 = arith.constant 0 : index
    %0 = vector.load %arg2[%c0, %c0_0] : memref<1x128xf32, #tpu.memory_space<vmem>>, vector<1x128xf32>
    %cst = arith.constant 0.001953125 : f32
    %1 = vector.broadcast %cst : f32 to vector<1x128xf32>
    %2 = arith.mulf %0, %1 : vector<1x128xf32>
    %c0_1 = arith.constant 0 : index
    %c0_2 = arith.constant 0 : index
    %3 = vector.load %arg3[%c0_1, %c0_2] : memref<1x128xf32, #tpu.memory_space<vmem>>, vector<1x128xf32>
    %cst_3 = arith.constant 0.001953125 : f32
    %4 = vector.broadcast %cst_3 : f32 to vector<1x128xf32>
    %5 = arith.mulf %3, %4 : vector<1x128xf32>
    %6 = arith.mulf %2, %2 : vector<1x128xf32>
    %7 = arith.subf %5, %6 : vector<1x128xf32>
    %cst_4 = arith.constant 0.000000e+00 : f32
    %8 = vector.broadcast %cst_4 : f32 to vector<1x128xf32>
    %9 = arith.maximumf %7, %8 : vector<1x128xf32>
    %cst_5 = arith.constant 9.99999974E-6 : f32
    %10 = vector.broadcast %cst_5 : f32 to vector<1x128xf32>
    %11 = arith.addf %9, %10 : vector<1x128xf32>
    %12 = math.rsqrt %11 : vector<1x128xf32>
    %c0_6 = arith.constant 0 : index
    %c0_7 = arith.constant 0 : index
    %13 = vector.load %arg4[%c0_6, %c0_7] : memref<1x128xf32, #tpu.memory_space<vmem>>, vector<1x128xf32>
    %14 = arith.mulf %12, %13 : vector<1x128xf32>
    %c0_8 = arith.constant 0 : index
    %c0_9 = arith.constant 0 : index
    %15 = vector.load %arg1[%c0_8, %c0_9] : memref<256x128xf32, #tpu.memory_space<vmem>>, vector<256x128xf32>
    %16 = vector.broadcast %2 : vector<1x128xf32> to vector<256x128xf32>
    %17 = arith.subf %15, %16 : vector<256x128xf32>
    %18 = vector.broadcast %14 : vector<1x128xf32> to vector<256x128xf32>
    %19 = arith.mulf %17, %18 : vector<256x128xf32>
    %c0_10 = arith.constant 0 : index
    %c0_11 = arith.constant 0 : index
    %20 = vector.load %arg5[%c0_10, %c0_11] : memref<1x128xf32, #tpu.memory_space<vmem>>, vector<1x128xf32>
    %21 = vector.broadcast %20 : vector<1x128xf32> to vector<256x128xf32>
    %22 = arith.addf %19, %21 : vector<256x128xf32>
    %cst_12 = arith.constant 0.000000e+00 : f32
    %23 = vector.broadcast %cst_12 : f32 to vector<256x128xf32>
    %24 = arith.cmpf oge, %22, %23 : vector<256x128xf32>
    %cst_13 = arith.constant 0.00999999977 : f32
    %25 = vector.broadcast %cst_13 : f32 to vector<256x128xf32>
    %26 = arith.mulf %25, %22 : vector<256x128xf32>
    %27 = arith.select %24, %22, %26 : vector<256x128xi1>, vector<256x128xf32>
    %c0_14 = arith.constant 0 : index
    %c0_15 = arith.constant 0 : index
    %28 = vector.load %arg6[%c0_14, %c0_15] : memref<256x128xf32, #tpu.memory_space<vmem>>, vector<256x128xf32>
    tpu.vector_store %arg6[%c0_14, %c0_15], %27 {strides = array<i32>} : memref<256x128xf32, #tpu.memory_space<vmem>>, vector<256x128xf32>,
    return
  }
  func.func @transform_0(%arg0: i32) -> (i32, i32) {
    %c0_i32 = arith.constant 0 : i32
    %c0_i32_0 = arith.constant 0 : i32
    return %arg0, %c0_i32 : i32, i32
  }
  func.func @transform_1(%arg0: i32) -> (i32, i32) {
    %c0_i32 = arith.constant 0 : i32
    %c0_i32_0 = arith.constant 0 : i32
    %c0_i32_1 = arith.constant 0 : i32
    return %c0_i32, %c0_i32_0 : i32, i32
  }
  func.func @transform_2(%arg0: i32) -> (i32, i32) {
    %c0_i32 = arith.constant 0 : i32
    %c0_i32_0 = arith.constant 0 : i32
    %c0_i32_1 = arith.constant 0 : i32
    return %c0_i32, %c0_i32_0 : i32, i32
  }
  func.func @transform_3(%arg0: i32) -> (i32, i32) {
    %c0_i32 = arith.constant 0 : i32
    %c0_i32_0 = arith.constant 0 : i32
    %c0_i32_1 = arith.constant 0 : i32
    return %c0_i32, %c0_i32_0 : i32, i32
  }
  func.func @transform_4(%arg0: i32) -> (i32, i32) {
    %c0_i32 = arith.constant 0 : i32
    %c0_i32_0 = arith.constant 0 : i32
    %c0_i32_1 = arith.constant 0 : i32
    return %c0_i32, %c0_i32_0 : i32, i32
  }
  func.func @transform_5(%arg0: i32) -> (i32, i32) {
    %c0_i32 = arith.constant 0 : i32
    %c0_i32_0 = arith.constant 0 : i32
    return %arg0, %c0_i32 : i32, i32
  }
}

</mosaic_0001>

<llo_original>
// kernel: inception_forward.7
$region0: #{inception_forward.7}
  #allocation0 [shape = 'u32[]', space=smem, size = 0x4, offset = 0x4, fixed_abs, tag = 'smem constant byte address 0x4 - core index']
  #allocation1 [shape = 'u32[144,128]{1,0:T(1,128)}', space=vmem, size = 0x12000, scoped, tag = 'internal scratch']
  #allocation2 [shape = 'f32[1,128]{1,0:T(1,128)}', space=vmem, size = 0x200, scoped, tag = 'scratch operand']
  #allocation3 [shape = 'f32[1,128]{1,0:T(1,128)}', space=vmem, size = 0x200, scoped, tag = 'scratch operand']
  %s0 = inlined_call_operand.vmem [shape: bf16[512,128], index: 0, kind: input, shape index: {}]
  %s1 = inlined_call_operand.vmem [shape: bf16[128,128], index: 1, kind: input, shape index: {}]
  %s2 = inlined_call_operand.vmem [shape: f32[512,128], index: 2, kind: output, shape index: {0}]
  %s3 = inlined_call_operand.vmem [shape: f32[1,128], index: 3, kind: output, shape index: {1}]
  %s4 = inlined_call_operand.vmem [shape: f32[1,128], index: 4, kind: output, shape index: {2}]
  %5 = xla_tuple %s2, %s3, %s4
  %s6 = sld [smem:[#allocation0]]
  $region65: #{inception_forward.7} parent=0
    _
  %s8 = ssub.s32 1, %s6
  %s9 = scalar_select 0, %s8, %s6
  loop: start=0, step=1, limit=4
  $region2: #{inception_forward.7} parent=0 // loop_pre_header
    _
  $region3: #{inception_forward.7} parent=0 // loop_header
    %s11 = sphi 0, %s15
    %p12 = scmp.ge.s32.totalorder %s11, 4
    %s21 = sphi 0, %s23
    %s24 = sphi 0, %s21
    %s25 = sphi 0, %s24
    %s41 = sphi 0, %s25
    %s45 = sphi 0, %s45
    %s47 = sphi 0, %s45
    %s48 = sphi 0, %s47
    %s62 = sphi 0, %s48
    %s68 = sphi 0, %s70
    %s71 = sphi 0, %s68
    %s72 = sphi 0, %s71
    %s88 = sphi 0, %s72
    %s92 = sphi 0, %s92
    %s94 = sphi 0, %s92
    %s95 = sphi 0, %s94
    %s109 = sphi 0, %s95
    %s113 = sphi 0, %s113
    %s115 = sphi 0, %s113
    %s116 = sphi 0, %s115
    %s130 = sphi 0, %s116
  $region4: #{inception_forward.7} parent=0 // loop_header_branch
    %14 = sbr.rel (%p12) target = $region8
  $region5: #{inception_forward.7} parent=0 // loop_body
    %s16 = ssub.s32 %s11, 1
    %s17 = ssub.s32 %s11, 2
    %s18 = sadd.s32 %s11, 1
    %s19 = ssub.s32 %s11, %s18
    %p20 = scmp.eq.s32.totalorder %s19, 0
    %s22 = sadd.s32 %s21, 1
    %s23 = scalar_select %p20, %s21, %s22
    %p26 = pneg %p20
    %p27 = scmp.eq.s32.totalorder %s11, 1
    %p28 = por %p26, %p27
    %p29 = scmp.ne.s32.totalorder %s21, %s24
    %p30 = scmp.eq.s32.totalorder %s11, 0
    %p31 = por %p29, %p30
    %p32 = scmp.ne.s32.totalorder %s21, %s24
    %p33 = scmp.eq.s32.totalorder %s16, 1
    %p34 = por %p32, %p33
    %p35 = scmp.ne.s32.totalorder %s24, %s25
    %p36 = scmp.eq.s32.totalorder %s16, 0
    %p37 = por %p35, %p36
    %p38 = scmp.ne.s32.totalorder %s24, %s25
    %p39 = scmp.eq.s32.totalorder %s17, 1
    %p40 = por %p38, %p39
    %p42 = scmp.ne.s32.totalorder %s25, %s41
    %p43 = scmp.eq.s32.totalorder %s17, 0
    %p44 = por %p42, %p43
    %s46 = sadd.s32 %s45, 1
    %p49 = scmp.eq.s32.totalorder %s11, 1
    %p50 = scmp.ne.s32.totalorder %s45, %s47
    %p51 = scmp.eq.s32.totalorder %s11, 0
    %p52 = por %p50, %p51
    %p53 = scmp.ne.s32.totalorder %s45, %s47
    %p54 = scmp.eq.s32.totalorder %s16, 1
    %p55 = por %p53, %p54
    %p56 = scmp.ne.s32.totalorder %s47, %s48
    %p57 = scmp.eq.s32.totalorder %s16, 0
    %p58 = por %p56, %p57
    %p59 = scmp.ne.s32.totalorder %s47, %s48
    %p60 = scmp.eq.s32.totalorder %s17, 1
    %p61 = por %p59, %p60
    %p63 = scmp.ne.s32.totalorder %s48, %s62
    %p64 = scmp.eq.s32.totalorder %s17, 0
    %p65 = por %p63, %p64
    %s66 = ssub.s32 %s11, %s18
    %p67 = scmp.eq.s32.totalorder %s66, 0
    %s69 = sadd.s32 %s68, 1
    %s70 = scalar_select %p67, %s68, %s69
    %p73 = pneg %p67
    %p74 = scmp.eq.s32.totalorder %s11, 1
    %p75 = por %p73, %p74
    %p76 = scmp.ne.s32.totalorder %s68, %s71
    %p77 = scmp.eq.s32.totalorder %s11, 0
    %p78 = por %p76, %p77
    %p79 = scmp.ne.s32.totalorder %s68, %s71
    %p80 = scmp.eq.s32.totalorder %s16, 1
    %p81 = por %p79, %p80
    %p82 = scmp.ne.s32.totalorder %s71, %s72
    %p83 = scmp.eq.s32.totalorder %s16, 0
    %p84 = por %p82, %p83
    %p85 = scmp.ne.s32.totalorder %s71, %s72
    %p86 = scmp.eq.s32.totalorder %s17, 1
    %p87 = por %p85, %p86
    %p89 = scmp.ne.s32.totalorder %s72, %s88
    %p90 = scmp.eq.s32.totalorder %s17, 0
    %p91 = por %p89, %p90
    %s93 = sadd.s32 %s92, 1
    %p96 = scmp.eq.s32.totalorder %s11, 1
    %p97 = scmp.ne.s32.totalorder %s92, %s94
    %p98 = scmp.eq.s32.totalorder %s11, 0
    %p99 = por %p97, %p98
    %p100 = scmp.ne.s32.totalorder %s92, %s94
    %p101 = scmp.eq.s32.totalorder %s16, 1
    %p102 = por %p100, %p101
    %p103 = scmp.ne.s32.totalorder %s94, %s95
    %p104 = scmp.eq.s32.totalorder %s16, 0
    %p105 = por %p103, %p104
    %p106 = scmp.ne.s32.totalorder %s94, %s95
    %p107 = scmp.eq.s32.totalorder %s17, 1
    %p108 = por %p106, %p107
    %p110 = scmp.ne.s32.totalorder %s95, %s109
    %p111 = scmp.eq.s32.totalorder %s17, 0
    %p112 = por %p110, %p111
    %s114 = sadd.s32 %s113, 1
    %p117 = scmp.eq.s32.totalorder %s11, 1
    %p118 = scmp.ne.s32.totalorder %s113, %s115
    %p119 = scmp.eq.s32.totalorder %s11, 0
    %p120 = por %p118, %p119
    %p121 = scmp.ne.s32.totalorder %s113, %s115
    %p122 = scmp.eq.s32.totalorder %s16, 1
    %p123 = por %p121, %p122
    %p124 = scmp.ne.s32.totalorder %s115, %s116
    %p125 = scmp.eq.s32.totalorder %s16, 0
    %p126 = por %p124, %p125
    %p127 = scmp.ne.s32.totalorder %s115, %s116
    %p128 = scmp.eq.s32.totalorder %s17, 1
    %p129 = por %p127, %p128
    %p131 = scmp.ne.s32.totalorder %s116, %s130
    %p132 = scmp.eq.s32.totalorder %s17, 0
    %p133 = por %p131, %p132
    %p134 = scmp.le.s32.totalorder 1, %s11
    %p135 = scmp.lt.s32.totalorder %s11, 3
    %p136 = pnand %p134, %p135
    %p137 = pneg %p136
    // Predicated region
    $region9: #{inception_forward.7} parent=5 // pred_check
      _
    $region10: #{inception_forward.7} parent=5 // pred_check_branch
      %139 = sbr.rel (%p136) target = $region12
    $region11: #{inception_forward.7} parent=5 // pred_region
      %s140 = ssub.s32 %s11, 1
      // Predicated region
      $region13: #{inception_forward.7} parent=11 // pred_check
        %p141 = pneg %p58
      $region14: #{inception_forward.7} parent=11 // pred_check_branch
        %143 = sbr.rel (%p141) target = $region16
      $region15: #{inception_forward.7} parent=11 // pred_region
        _
      $region16: #{inception_forward.7} parent=11 // pred_fallthru
        _
    $region12: #{inception_forward.7} parent=5 // pred_fallthru
      _
    %p144 = scmp.lt.s32.totalorder %s11, 2
    // Predicated region
    $region17: #{inception_forward.7} parent=5 // pred_check
      %p145 = pneg %p144
    $region18: #{inception_forward.7} parent=5 // pred_check_branch
      %147 = sbr.rel (%p145) target = $region20
    $region19: #{inception_forward.7} parent=5 // pred_region
      // Predicated region
      $region21: #{inception_forward.7} parent=19 // pred_check
        %p148 = pneg %p31
      $region22: #{inception_forward.7} parent=19 // pred_check_branch
        %150 = sbr.rel (%p148) target = $region24
      $region23: #{inception_forward.7} parent=19 // pred_region
        %s151 = smul.u32 32, %s11
        %p152 = scmp.lt.s32.totalorder %s151, 63
        %s153 = scalar_select %p152, %s151, 63
        %s154 = smul.addr %s153, 4
        %s155 = scalar_lea.vmem %s0, %s154
        %s156 = smul.u32 32, %s11
      $region24: #{inception_forward.7} parent=19 // pred_fallthru
        _
    $region20: #{inception_forward.7} parent=5 // pred_fallthru
      _
    %p157 = scmp.le.s32.totalorder 1, %s11
    %p158 = scmp.lt.s32.totalorder %s11, 3
    %p159 = pnand %p157, %p158
    %p160 = pneg %p159
    // Predicated region
    $region25: #{inception_forward.7} parent=5 // pred_check
      _
    $region26: #{inception_forward.7} parent=5 // pred_check_branch
      %162 = sbr.rel (%p159) target = $region28
    $region27: #{inception_forward.7} parent=5 // pred_region
      %s163 = ssub.s32 %s11, 1
      %s164 = smul.u32 32, %s16
      %p165 = scmp.lt.s32.totalorder %s164, 63
      %s166 = scalar_select %p165, %s164, 63
      %s167 = smul.addr %s166, 4
      %s168 = scalar_lea.vmem %s0, %s167
      %p169 = pneg %p37
      %p170 = pneg %p34
      %p171 = pneg %p58
      %p172 = pneg %p55
      %p173 = pneg %p84
      %p174 = pneg %p81
      %s175 = smul.u32 32, %s16
      %p176 = scmp.lt.s32.totalorder %s175, 63
      %s177 = scalar_select %p176, %s175, 63
      %s178 = smul.addr %s177, 8
      %s179 = scalar_lea.vmem %s2, %s178
      %p180 = pneg %p105
      %p181 = pneg %p102
      %p182 = pneg %p126
      %p183 = pneg %p123
      %s184 = smul.u32 32, %s16
      %p185 = scmp.lt.s32.totalorder %s184, 63
      %s186 = scalar_select %p185, %s184, 63
      %s187 = smul.addr %s186, 4
      %s188 = scalar_lea.vmem %s0, %s187
      %s189 = smul.u32 32, %s16
      %s190 = smul.u32 32, %s16
      %p191 = scmp.lt.s32.totalorder %s190, 63
      %s192 = scalar_select %p191, %s190, 63
      %s193 = smul.addr %s192, 8
      %s194 = scalar_lea.vmem %s2, %s193
      %s195 = smul.u32 32, %s16
      %p197 = scmp.eq.s32.totalorder %s16, 0
      // Predicated region
      $region29: #{inception_forward.7} parent=27 // pred_check
        %p198 = pneg %p197
      $region30: #{inception_forward.7} parent=27 // pred_check_branch
        %200 = sbr.rel (%p198) target = $region32
      $region31: #{inception_forward.7} parent=27 // pred_region
        %201 = vst [vmem:[#allocation2] sm:$0x1] 0.0
        %202 = vst [vmem:[#allocation3] sm:$0x1] 0.0
      $region32: #{inception_forward.7} parent=27 // pred_fallthru
        _
      %v203 = vld [vmem:[%s188] sm:$0xf]
      %v204 = vld [vmem:[%s188 + $0x4] sm:$0xf]
      %v205 = vld [vmem:[%s188 + $0x8] sm:$0xf]
      %v206 = vld [vmem:[%s188 + $0xc] sm:$0xf]
      %v207 = vld [vmem:[%s188 + $0x10] sm:$0xf]
      %v208 = vld [vmem:[%s188 + $0x14] sm:$0xf]
      %v209 = vld [vmem:[%s188 + $0x18] sm:$0xf]
      %v210 = vld [vmem:[%s188 + $0x1c] sm:$0xf]
      %v211 = vld [vmem:[%s188 + $0x20] sm:$0xf]
      %v212 = vld [vmem:[%s188 + $0x24] sm:$0xf]
      %v213 = vld [vmem:[%s188 + $0x28] sm:$0xf]
      %v214 = vld [vmem:[%s188 + $0x2c] sm:$0xf]
      %v215 = vld [vmem:[%s188 + $0x30] sm:$0xf]
      %v216 = vld [vmem:[%s188 + $0x34] sm:$0xf]
      %v217 = vld [vmem:[%s188 + $0x38] sm:$0xf]
      %v218 = vld [vmem:[%s188 + $0x3c] sm:$0xf]
      %v219 = vld [vmem:[%s188 + $0x40] sm:$0xf]
      %v220 = vld [vmem:[%s188 + $0x44] sm:$0xf]
      %v221 = vld [vmem:[%s188 + $0x48] sm:$0xf]
      %v222 = vld [vmem:[%s188 + $0x4c] sm:$0xf]
      %v223 = vld [vmem:[%s188 + $0x50] sm:$0xf]
      %v224 = vld [vmem:[%s188 + $0x54] sm:$0xf]
      %v225 = vld [vmem:[%s188 + $0x58] sm:$0xf]
      %v226 = vld [vmem:[%s188 + $0x5c] sm:$0xf]
      %v227 = vld [vmem:[%s188 + $0x60] sm:$0xf]
      %v228 = vld [vmem:[%s188 + $0x64] sm:$0xf]
      %v229 = vld [vmem:[%s188 + $0x68] sm:$0xf]
      %v230 = vld [vmem:[%s188 + $0x6c] sm:$0xf]
      %v231 = vld [vmem:[%s188 + $0x70] sm:$0xf]
      %v232 = vld [vmem:[%s188 + $0x74] sm:$0xf]
      %v233 = vld [vmem:[%s188 + $0x78] sm:$0xf]
      %v234 = vld [vmem:[%s188 + $0x7c] sm:$0xf]
      %v235 = vld [vmem:[%s1] sm:$0xf]
      %v236 = vld [vmem:[%s1 + $0x4] sm:$0xf]
      %v237 = vld [vmem:[%s1 + $0x8] sm:$0xf]
      %v238 = vld [vmem:[%s1 + $0xc] sm:$0xf]
      %v239 = vld [vmem:[%s1 + $0x10] sm:$0xf]
      %v240 = vld [vmem:[%s1 + $0x14] sm:$0xf]
      %v241 = vld [vmem:[%s1 + $0x18] sm:$0xf]
      %v242 = vld [vmem:[%s1 + $0x1c] sm:$0xf]
      %v243 = vld [vmem:[%s1 + $0x20] sm:$0xf]
      %v244 = vld [vmem:[%s1 + $0x24] sm:$0xf]
      %v245 = vld [vmem:[%s1 + $0x28] sm:$0xf]
      %v246 = vld [vmem:[%s1 + $0x2c] sm:$0xf]
      %v247 = vld [vmem:[%s1 + $0x30] sm:$0xf]
      %v248 = vld [vmem:[%s1 + $0x34] sm:$0xf]
      %v249 = vld [vmem:[%s1 + $0x38] sm:$0xf]
      %v250 = vld [vmem:[%s1 + $0x3c] sm:$0xf]
      %v283 = vunpack.c.l.b16 %v203
      %v284 = vunpack.c.l.b16 %v204
      %v285 = vunpack.c.l.b16 %v205
      %v286 = vunpack.c.l.b16 %v206
      %v287 = vunpack.c.l.b16 %v207
      %v288 = vunpack.c.l.b16 %v208
      %v289 = vunpack.c.l.b16 %v209
      %v290 = vunpack.c.l.b16 %v210
      %v291 = vunpack.c.l.b16 %v211
      %v292 = vunpack.c.l.b16 %v212
      %v293 = vunpack.c.l.b16 %v213
      %v294 = vunpack.c.l.b16 %v214
      %v295 = vunpack.c.l.b16 %v215
      %v296 = vunpack.c.l.b16 %v216
      %v297 = vunpack.c.l.b16 %v217
      %v298 = vunpack.c.l.b16 %v218
      %v299 = vunpack.c.l.b16 %v219
      %v300 = vunpack.c.l.b16 %v220
      %v301 = vunpack.c.l.b16 %v221
      %v302 = vunpack.c.l.b16 %v222
      %v303 = vunpack.c.l.b16 %v223
      %v304 = vunpack.c.l.b16 %v224
      %v305 = vunpack.c.l.b16 %v225
      %v306 = vunpack.c.l.b16 %v226
      %v307 = vunpack.c.l.b16 %v227
      %v308 = vunpack.c.l.b16 %v228
      %v309 = vunpack.c.l.b16 %v229
      %v310 = vunpack.c.l.b16 %v230
      %v311 = vunpack.c.l.b16 %v231
      %v312 = vunpack.c.l.b16 %v232
      %v313 = vunpack.c.l.b16 %v233
      %v314 = vunpack.c.l.b16 %v234
      %v315 = vpack.c.b16 %v284, %v283
      %v316 = vpack.c.b16 %v286, %v285
      %v317 = vpack.c.b16 %v288, %v287
      %v318 = vpack.c.b16 %v290, %v289
      %v319 = vpack.c.b16 %v292, %v291
      %v320 = vpack.c.b16 %v294, %v293
      %v321 = vpack.c.b16 %v296, %v295
      %v322 = vpack.c.b16 %v298, %v297
      %v323 = vpack.c.b16 %v300, %v299
      %v324 = vpack.c.b16 %v302, %v301
      %v325 = vpack.c.b16 %v304, %v303
      %v326 = vpack.c.b16 %v306, %v305
      %v327 = vpack.c.b16 %v308, %v307
      %v328 = vpack.c.b16 %v310, %v309
      %v329 = vpack.c.b16 %v312, %v311
      %v330 = vpack.c.b16 %v314, %v313
      %v363 = vunpack.c.l.b16 %v235
      %v364 = vunpack.c.l.b16 %v236
      %v365 = vunpack.c.l.b16 %v237
      %v366 = vunpack.c.l.b16 %v238
      %v367 = vunpack.c.l.b16 %v239
      %v368 = vunpack.c.l.b16 %v240
      %v369 = vunpack.c.l.b16 %v241
      %v370 = vunpack.c.l.b16 %v242
      %v371 = vunpack.c.l.b16 %v243
      %v372 = vunpack.c.l.b16 %v244
      %v373 = vunpack.c.l.b16 %v245
      %v374 = vunpack.c.l.b16 %v246
      %v375 = vunpack.c.l.b16 %v247
      %v376 = vunpack.c.l.b16 %v248
      %v377 = vunpack.c.l.b16 %v249
      %v378 = vunpack.c.l.b16 %v250
      %v379 = vpack.c.b16 %v364, %v363
      %v380 = vpack.c.b16 %v366, %v365
      %v381 = vpack.c.b16 %v368, %v367
      %v382 = vpack.c.b16 %v370, %v369
      %v383 = vpack.c.b16 %v372, %v371
      %v384 = vpack.c.b16 %v374, %v373
      %v385 = vpack.c.b16 %v376, %v375
      %v386 = vpack.c.b16 %v378, %v377
      %395 = vmatprep.subr.bf16.mxu0 0
      %396 = vmatpush1.bf16.msra.mxu0 %v386
      %397 = vmatprep.subr.bf16.mxu0 0
      %398 = vmatpush1.bf16.msra.mxu0 %v385
      %399 = vmatprep.subr.bf16.mxu0 0
      %400 = vmatpush1.bf16.msra.mxu0 %v384
      %401 = vmatprep.subr.bf16.mxu0 0
      %402 = vmatpush1.bf16.msra.mxu0 %v383
      %403 = vmatprep.subr.bf16.mxu0 0
      %404 = vmatpush1.bf16.msra.mxu0 %v382
      %405 = vmatprep.subr.bf16.mxu0 0
      %406 = vmatpush1.bf16.msra.mxu0 %v381
      %407 = vmatprep.subr.bf16.mxu0 0
      %408 = vmatpush1.bf16.msra.mxu0 %v380
      %409 = vmatprep.subr.bf16.mxu0 0
      %410 = vmatpush1.bf16.msra.mxu0 %v379
      %411 = vmatprep.subr.bf16.mxu0 0
      %412 = vmatpush2.bf16.msra.mxu0 0
      %413 = vmatprep.subr.bf16.mxu0 0
      %414 = vmatpush2.bf16.msra.mxu0 0
      %415 = vmatprep.subr.bf16.mxu0 0
      %416 = vmatpush2.bf16.msra.mxu0 0
      %417 = vmatprep.subr.bf16.mxu0 0
      %418 = vmatpush2.bf16.msra.mxu0 0
      %419 = vmatprep.subr.bf16.mxu0 0
      %420 = vmatpush2.bf16.msra.mxu0 0
      %421 = vmatprep.subr.bf16.mxu0 0
      %422 = vmatpush2.bf16.msra.mxu0 0
      %423 = vmatprep.subr.bf16.mxu0 0
      %424 = vmatpush2.bf16.msra.mxu0 0
      %425 = vmatprep.subr.bf16.mxu0 0
      %426 = vmatpush2.bf16.msra.mxu0 0
      %427 = vmatprep.mubr.bf16.mxu0 0
      %428 = vmatmul.mubr.bf16.gmra.mxu0 %v315
      %v429 = vpop.f32.mrf.mxu0
      %v430 = vadd.f32 0.0, %v429
      %v431 = vpop.f32.mrf.mxu0
      %v432 = vpop.f32.mrf.mxu0
      %v433 = vadd.f32 0.0, %v432
      %v434 = vpop.f32.mrf.mxu0
      %435 = vmatprep.mubr.bf16.mxu0 0
      %436 = vmatmul.mubr.bf16.gmra.mxu0 %v316
      %v437 = vpop.f32.mrf.mxu0
      %v438 = vadd.f32 0.0, %v437
      %v439 = vpop.f32.mrf.mxu0
      %v440 = vpop.f32.mrf.mxu0
      %v441 = vadd.f32 0.0, %v440
      %v442 = vpop.f32.mrf.mxu0
      %443 = vmatprep.mubr.bf16.mxu0 0
      %444 = vmatmul.mubr.bf16.gmra.mxu0 %v317
      %v445 = vpop.f32.mrf.mxu0
      %v446 = vadd.f32 0.0, %v445
      %v447 = vpop.f32.mrf.mxu0
      %v448 = vpop.f32.mrf.mxu0
      %v449 = vadd.f32 0.0, %v448
      %v450 = vpop.f32.mrf.mxu0
      %451 = vmatprep.mubr.bf16.mxu0 0
      %452 = vmatmul.mubr.bf16.gmra.mxu0 %v318
      %v453 = vpop.f32.mrf.mxu0
      %v454 = vadd.f32 0.0, %v453
      %v455 = vpop.f32.mrf.mxu0
      %v456 = vpop.f32.mrf.mxu0
      %v457 = vadd.f32 0.0, %v456
      %v458 = vpop.f32.mrf.mxu0
      %459 = vmatprep.mubr.bf16.mxu0 0
      %460 = vmatmul.mubr.bf16.gmra.mxu0 %v319
      %v461 = vpop.f32.mrf.mxu0
      %v462 = vadd.f32 0.0, %v461
      %v463 = vpop.f32.mrf.mxu0
      %v464 = vpop.f32.mrf.mxu0
      %v465 = vadd.f32 0.0, %v464
      %v466 = vpop.f32.mrf.mxu0
      %467 = vmatprep.mubr.bf16.mxu0 0
      %468 = vmatmul.mubr.bf16.gmra.mxu0 %v320
      %v469 = vpop.f32.mrf.mxu0
      %v470 = vadd.f32 0.0, %v469
      %v471 = vpop.f32.mrf.mxu0
      %v472 = vpop.f32.mrf.mxu0
      %v473 = vadd.f32 0.0, %v472
      %v474 = vpop.f32.mrf.mxu0
      %475 = vmatprep.mubr.bf16.mxu0 0
      %476 = vmatmul.mubr.bf16.gmra.mxu0 %v321
      %v477 = vpop.f32.mrf.mxu0
      %v478 = vadd.f32 0.0, %v477
      %v479 = vpop.f32.mrf.mxu0
      %v480 = vpop.f32.mrf.mxu0
      %v481 = vadd.f32 0.0, %v480
      %v482 = vpop.f32.mrf.mxu0
      %483 = vmatprep.mubr.bf16.mxu0 0
      %484 = vmatmul.mubr.bf16.gmra.mxu0 %v322
      %v485 = vpop.f32.mrf.mxu0
      %v486 = vadd.f32 0.0, %v485
      %v487 = vpop.f32.mrf.mxu0
      %v488 = vpop.f32.mrf.mxu0
      %v489 = vadd.f32 0.0, %v488
      %v490 = vpop.f32.mrf.mxu0
      %491 = vmatprep.mubr.bf16.mxu0 0
      %492 = vmatmul.mubr.bf16.gmra.mxu0 %v323
      %v493 = vpop.f32.mrf.mxu0
      %v494 = vadd.f32 0.0, %v493
      %v495 = vpop.f32.mrf.mxu0
      %v496 = vpop.f32.mrf.mxu0
      %v497 = vadd.f32 0.0, %v496
      %v498 = vpop.f32.mrf.mxu0
      %499 = vmatprep.mubr.bf16.mxu0 0
      %500 = vmatmul.mubr.bf16.gmra.mxu0 %v324
      %v501 = vpop.f32.mrf.mxu0
      %v502 = vadd.f32 0.0, %v501
      %v503 = vpop.f32.mrf.mxu0
      %v504 = vpop.f32.mrf.mxu0
      %v505 = vadd.f32 0.0, %v504
      %v506 = vpop.f32.mrf.mxu0
      %507 = vmatprep.mubr.bf16.mxu0 0
      %508 = vmatmul.mubr.bf16.gmra.mxu0 %v325
      %v509 = vpop.f32.mrf.mxu0
      %v510 = vadd.f32 0.0, %v509
      %v511 = vpop.f32.mrf.mxu0
      %v512 = vpop.f32.mrf.mxu0
      %v513 = vadd.f32 0.0, %v512
      %v514 = vpop.f32.mrf.mxu0
      %515 = vmatprep.mubr.bf16.mxu0 0
      %516 = vmatmul.mubr.bf16.gmra.mxu0 %v326
      %v517 = vpop.f32.mrf.mxu0
      %v518 = vadd.f32 0.0, %v517
      %v519 = vpop.f32.mrf.mxu0
      %v520 = vpop.f32.mrf.mxu0
      %v521 = vadd.f32 0.0, %v520
      %v522 = vpop.f32.mrf.mxu0
      %523 = vmatprep.mubr.bf16.mxu0 0
      %524 = vmatmul.mubr.bf16.gmra.mxu0 %v327
      %v525 = vpop.f32.mrf.mxu0
      %v526 = vadd.f32 0.0, %v525
      %v527 = vpop.f32.mrf.mxu0
      %v528 = vpop.f32.mrf.mxu0
      %v529 = vadd.f32 0.0, %v528
      %v530 = vpop.f32.mrf.mxu0
      %531 = vmatprep.mubr.bf16.mxu0 0
      %532 = vmatmul.mubr.bf16.gmra.mxu0 %v328
      %v533 = vpop.f32.mrf.mxu0
      %v534 = vadd.f32 0.0, %v533
      %v535 = vpop.f32.mrf.mxu0
      %v536 = vpop.f32.mrf.mxu0
      %v537 = vadd.f32 0.0, %v536
      %v538 = vpop.f32.mrf.mxu0
      %539 = vmatprep.mubr.bf16.mxu0 0
      %540 = vmatmul.mubr.bf16.gmra.mxu0 %v329
      %v541 = vpop.f32.mrf.mxu0
      %v542 = vadd.f32 0.0, %v541
      %v543 = vpop.f32.mrf.mxu0
      %v544 = vpop.f32.mrf.mxu0
      %v545 = vadd.f32 0.0, %v544
      %v546 = vpop.f32.mrf.mxu0
      %547 = vmatprep.mubr.bf16.mxu0 0
      %548 = vmatmul.mubr.bf16.gmra.mxu0 %v330
      %v549 = vpop.f32.mrf.mxu0
      %v550 = vadd.f32 0.0, %v549
      %v551 = vpop.f32.mrf.mxu0
      %v552 = vpop.f32.mrf.mxu0
      %v553 = vadd.f32 0.0, %v552
      %v554 = vpop.f32.mrf.mxu0
      %555 = vdwg.mxu0
      %556 = vst [vmem:[%s194] sm:$0xff] %v430
      %557 = vst [vmem:[%s194 + $0x8] sm:$0xff] %v433
      %558 = vst [vmem:[%s194 + $0x10] sm:$0xff] %v438
      %559 = vst [vmem:[%s194 + $0x18] sm:$0xff] %v441
      %560 = vst [vmem:[%s194 + $0x20] sm:$0xff] %v446
      %561 = vst [vmem:[%s194 + $0x28] sm:$0xff] %v449
      %562 = vst [vmem:[%s194 + $0x30] sm:$0xff] %v454
      %563 = vst [vmem:[%s194 + $0x38] sm:$0xff] %v457
      %564 = vst [vmem:[%s194 + $0x40] sm:$0xff] %v462
      %565 = vst [vmem:[%s194 + $0x48] sm:$0xff] %v465
      %566 = vst [vmem:[%s194 + $0x50] sm:$0xff] %v470
      %567 = vst [vmem:[%s194 + $0x58] sm:$0xff] %v473
      %568 = vst [vmem:[%s194 + $0x60] sm:$0xff] %v478
      %569 = vst [vmem:[%s194 + $0x68] sm:$0xff] %v481
      %570 = vst [vmem:[%s194 + $0x70] sm:$0xff] %v486
      %571 = vst [vmem:[%s194 + $0x78] sm:$0xff] %v489
      %572 = vst [vmem:[%s194 + $0x80] sm:$0xff] %v494
      %573 = vst [vmem:[%s194 + $0x88] sm:$0xff] %v497
      %574 = vst [vmem:[%s194 + $0x90] sm:$0xff] %v502
      %575 = vst [vmem:[%s194 + $0x98] sm:$0xff] %v505
      %576 = vst [vmem:[%s194 + $0xa0] sm:$0xff] %v510
      %577 = vst [vmem:[%s194 + $0xa8] sm:$0xff] %v513
      %578 = vst [vmem:[%s194 + $0xb0] sm:$0xff] %v518
      %579 = vst [vmem:[%s194 + $0xb8] sm:$0xff] %v521
      %580 = vst [vmem:[%s194 + $0xc0] sm:$0xff] %v526
      %581 = vst [vmem:[%s194 + $0xc8] sm:$0xff] %v529
      %582 = vst [vmem:[%s194 + $0xd0] sm:$0xff] %v534
      %583 = vst [vmem:[%s194 + $0xd8] sm:$0xff] %v537
      %584 = vst [vmem:[%s194 + $0xe0] sm:$0xff] %v542
      %585 = vst [vmem:[%s194 + $0xe8] sm:$0xff] %v545
      %586 = vst [vmem:[%s194 + $0xf0] sm:$0xff] %v550
      %587 = vst [vmem:[%s194 + $0xf8] sm:$0xff] %v553
      %v588 = vld [vmem:[#allocation2] sm:$0x1]
      %v589 = vadd.f32 %v430, %v433
      %v590 = vadd.f32 %v589, %v438
      %v591 = vadd.f32 %v590, %v441
      %v592 = vadd.f32 %v591, %v446
      %v593 = vadd.f32 %v592, %v449
      %v594 = vadd.f32 %v593, %v454
      %v595 = vadd.f32 %v594, %v457
      %v596 = vadd.f32 %v595, %v462
      %v597 = vadd.f32 %v596, %v465
      %v598 = vadd.f32 %v597, %v470
      %v599 = vadd.f32 %v598, %v473
      %v600 = vadd.f32 %v599, %v478
      %v601 = vadd.f32 %v600, %v481
      %v602 = vadd.f32 %v601, %v486
      %v603 = vadd.f32 %v602, %v489
      %v604 = vadd.f32 %v603, %v494
      %v605 = vadd.f32 %v604, %v497
      %v606 = vadd.f32 %v605, %v502
      %v607 = vadd.f32 %v606, %v505
      %v608 = vadd.f32 %v607, %v510
      %v609 = vadd.f32 %v608, %v513
      %v610 = vadd.f32 %v609, %v518
      %v611 = vadd.f32 %v610, %v521
      %v612 = vadd.f32 %v611, %v526
      %v613 = vadd.f32 %v612, %v529
      %v614 = vadd.f32 %v613, %v534
      %v615 = vadd.f32 %v614, %v537
      %v616 = vadd.f32 %v615, %v542
      %v617 = vadd.f32 %v616, %v545
      %v618 = vadd.f32 %v617, %v550
      %v619 = vadd.f32 %v618, %v553
      %v620 = vrot.slane %v619, 4
      %v621 = vadd.f32 %v619, %v620
      %v622 = vrot.slane %v621, 2
      %v623 = vadd.f32 %v621, %v622
      %v624 = vrot.slane %v623, 1
      %v625 = vadd.f32 %v623, %v624
      %v626 = vadd.f32 %v588, %v625
      %627 = vst [vmem:[#allocation2] sm:$0x1] %v626
      %v628 = vld [vmem:[#allocation3] sm:$0x1]
      %v629 = vmul.f32 %v430, %v430
      %v630 = vmul.f32 %v433, %v433
      %v631 = vmul.f32 %v438, %v438
      %v632 = vmul.f32 %v441, %v441
      %v633 = vmul.f32 %v446, %v446
      %v634 = vmul.f32 %v449, %v449
      %v635 = vmul.f32 %v454, %v454
      %v636 = vmul.f32 %v457, %v457
      %v637 = vmul.f32 %v462, %v462
      %v638 = vmul.f32 %v465, %v465
      %v639 = vmul.f32 %v470, %v470
      %v640 = vmul.f32 %v473, %v473
      %v641 = vmul.f32 %v478, %v478
      %v642 = vmul.f32 %v481, %v481
      %v643 = vmul.f32 %v486, %v486
      %v644 = vmul.f32 %v489, %v489
      %v645 = vmul.f32 %v494, %v494
      %v646 = vmul.f32 %v497, %v497
      %v647 = vmul.f32 %v502, %v502
      %v648 = vmul.f32 %v505, %v505
      %v649 = vmul.f32 %v510, %v510
      %v650 = vmul.f32 %v513, %v513
      %v651 = vmul.f32 %v518, %v518
      %v652 = vmul.f32 %v521, %v521
      %v653 = vmul.f32 %v526, %v526
      %v654 = vmul.f32 %v529, %v529
      %v655 = vmul.f32 %v534, %v534
      %v656 = vmul.f32 %v537, %v537
      %v657 = vmul.f32 %v542, %v542
      %v658 = vmul.f32 %v545, %v545
      %v659 = vmul.f32 %v550, %v550
      %v660 = vmul.f32 %v553, %v553
      %v661 = vadd.f32 %v629, %v630
      %v662 = vadd.f32 %v661, %v631
      %v663 = vadd.f32 %v662, %v632
      %v664 = vadd.f32 %v663, %v633
      %v665 = vadd.f32 %v664, %v634
      %v666 = vadd.f32 %v665, %v635
      %v667 = vadd.f32 %v666, %v636
      %v668 = vadd.f32 %v667, %v637
      %v669 = vadd.f32 %v668, %v638
      %v670 = vadd.f32 %v669, %v639
      %v671 = vadd.f32 %v670, %v640
      %v672 = vadd.f32 %v671, %v641
      %v673 = vadd.f32 %v672, %v642
      %v674 = vadd.f32 %v673, %v643
      %v675 = vadd.f32 %v674, %v644
      %v676 = vadd.f32 %v675, %v645
      %v677 = vadd.f32 %v676, %v646
      %v678 = vadd.f32 %v677, %v647
      %v679 = vadd.f32 %v678, %v648
      %v680 = vadd.f32 %v679, %v649
      %v681 = vadd.f32 %v680, %v650
      %v682 = vadd.f32 %v681, %v651
      %v683 = vadd.f32 %v682, %v652
      %v684 = vadd.f32 %v683, %v653
      %v685 = vadd.f32 %v684, %v654
      %v686 = vadd.f32 %v685, %v655
      %v687 = vadd.f32 %v686, %v656
      %v688 = vadd.f32 %v687, %v657
      %v689 = vadd.f32 %v688, %v658
      %v690 = vadd.f32 %v689, %v659
      %v691 = vadd.f32 %v690, %v660
      %v692 = vrot.slane %v691, 4
      %v693 = vadd.f32 %v691, %v692
      %v694 = vrot.slane %v693, 2
      %v695 = vadd.f32 %v693, %v694
      %v696 = vrot.slane %v695, 1
      %v697 = vadd.f32 %v695, %v696
      %v698 = vadd.f32 %v628, %v697
      %699 = vst [vmem:[#allocation3] sm:$0x1] %v698
      %p700 = scmp.eq.s32.totalorder %s16, 1
      // Predicated region
      $region33: #{inception_forward.7} parent=27 // pred_check
        %p701 = pneg %p700
      $region34: #{inception_forward.7} parent=27 // pred_check_branch
        %703 = sbr.rel (%p701) target = $region36
      $region35: #{inception_forward.7} parent=27 // pred_region
        %v704 = vld [vmem:[#allocation2] sm:$0x1]
        %705 = vst [vmem:[%s3] sm:$0x1] %v704
        %v706 = vld [vmem:[#allocation3] sm:$0x1]
        %707 = vst [vmem:[%s4] sm:$0x1] %v706
      $region36: #{inception_forward.7} parent=27 // pred_fallthru
        _
      %s708 = smul.u32 32, %s16
      %p709 = scmp.lt.s32.totalorder %s708, 63
      %s710 = scalar_select %p709, %s708, 63
      %s711 = smul.addr %s710, 8
      %s712 = scalar_lea.vmem %s2, %s711
      // Predicated region
      $region37: #{inception_forward.7} parent=27 // pred_check
        %p713 = pneg %p81
      $region38: #{inception_forward.7} parent=27 // pred_check_branch
        %715 = sbr.rel (%p713) target = $region40
      $region39: #{inception_forward.7} parent=27 // pred_region
        %s716 = smul.u32 32, %s16
      $region40: #{inception_forward.7} parent=27 // pred_fallthru
        _
      // Predicated region
      $region41: #{inception_forward.7} parent=27 // pred_check
        %p717 = pneg %p102
      $region42: #{inception_forward.7} parent=27 // pred_check_branch
        %719 = sbr.rel (%p717) target = $region44
      $region43: #{inception_forward.7} parent=27 // pred_region
        _
      $region44: #{inception_forward.7} parent=27 // pred_fallthru
        _
      // Predicated region
      $region45: #{inception_forward.7} parent=27 // pred_check
        %p720 = pneg %p123
      $region46: #{inception_forward.7} parent=27 // pred_check_branch
        %722 = sbr.rel (%p720) target = $region48
      $region47: #{inception_forward.7} parent=27 // pred_region
        _
      $region48: #{inception_forward.7} parent=27 // pred_fallthru
        _
      // Predicated region
      $region49: #{inception_forward.7} parent=27 // pred_check
        %p723 = pneg %p102
      $region50: #{inception_forward.7} parent=27 // pred_check_branch
        %725 = sbr.rel (%p723) target = $region52
      $region51: #{inception_forward.7} parent=27 // pred_region
        _
      $region52: #{inception_forward.7} parent=27 // pred_fallthru
        _
      // Predicated region
      $region53: #{inception_forward.7} parent=27 // pred_check
        %p726 = pneg %p123
      $region54: #{inception_forward.7} parent=27 // pred_check_branch
        %728 = sbr.rel (%p726) target = $region56
      $region55: #{inception_forward.7} parent=27 // pred_region
        _
      $region56: #{inception_forward.7} parent=27 // pred_fallthru
        _
    $region28: #{inception_forward.7} parent=5 // pred_fallthru
      _
    %p729 = scmp.le.s32.totalorder 2, %s11
    // Predicated region
    $region57: #{inception_forward.7} parent=5 // pred_check
      %p730 = pneg %p729
    $region58: #{inception_forward.7} parent=5 // pred_check_branch
      %732 = sbr.rel (%p730) target = $region60
    $region59: #{inception_forward.7} parent=5 // pred_region
      %s733 = ssub.s32 %s11, 2
      // Predicated region
      $region61: #{inception_forward.7} parent=59 // pred_check
        %p734 = pneg %p87
      $region62: #{inception_forward.7} parent=59 // pred_check_branch
        %736 = sbr.rel (%p734) target = $region64
      $region63: #{inception_forward.7} parent=59 // pred_region
        %s737 = smul.u32 32, %s17
        %p738 = scmp.lt.s32.totalorder %s737, 63
        %s739 = scalar_select %p738, %s737, 63
        %s740 = smul.addr %s739, 8
        %s741 = scalar_lea.vmem %s2, %s740
      $region64: #{inception_forward.7} parent=59 // pred_fallthru
        _
    $region60: #{inception_forward.7} parent=5 // pred_fallthru
      _
  $region6: #{inception_forward.7} parent=0 // loop_footer
    %s15 = sadd.s32 1, %s11
  $region7: #{inception_forward.7} parent=0 // loop_footer_branch
    %10 = sbr.rel target = $region3
  $region8: #{inception_forward.7} parent=0 // loop_exit
    _

// kernel: inception_forward.8
$region0: #{inception_forward.8}
  #allocation0 [shape = 'u32[]', space=smem, size = 0x4, offset = 0x4, fixed_abs, tag = 'smem constant byte address 0x4 - core index']
  #allocation1 [shape = 'u32[144,128]{1,0:T(1,128)}', space=vmem, size = 0x12000, scoped, tag = 'internal scratch']
  #allocation2 [shape = 'f32[1,128]{1,0:T(1,128)}', space=vmem, size = 0x200, scoped, tag = 'scratch operand']
  #allocation3 [shape = 'f32[1,128]{1,0:T(1,128)}', space=vmem, size = 0x200, scoped, tag = 'scratch operand']
  %s0 = inlined_call_operand.vmem [shape: f32[2,18,18,128], index: 0, kind: input, shape index: {}]
  %s1 = inlined_call_operand.vmem [shape: f32[1,16,16,1], index: 1, kind: input, shape index: {}]
  %s2 = inlined_call_operand.vmem [shape: f32[2,16,16,128], index: 2, kind: output, shape index: {0}]
  %s3 = inlined_call_operand.vmem [shape: f32[1,128], index: 3, kind: output, shape index: {1}]
  %s4 = inlined_call_operand.vmem [shape: f32[1,128], index: 4, kind: output, shape index: {2}]
  %5 = xla_tuple %s2, %s3, %s4
  %s6 = sld [smem:[#allocation0]]
  $region65: #{inception_forward.8} parent=0
    _
  %s8 = ssub.s32 1, %s6
  %s9 = scalar_select 0, %s8, %s6
  loop: start=0, step=1, limit=4
  $region2: #{inception_forward.8} parent=0 // loop_pre_header
    _
  $region3: #{inception_forward.8} parent=0 // loop_header
    %s11 = sphi 0, %s15
    %p12 = scmp.ge.s32.totalorder %s11, 4
    %s21 = sphi 0, %s23
    %s24 = sphi 0, %s21
    %s25 = sphi 0, %s24
    %s41 = sphi 0, %s25
    %s45 = sphi 0, %s45
    %s47 = sphi 0, %s45
    %s48 = sphi 0, %s47
    %s62 = sphi 0, %s48
    %s68 = sphi 0, %s70
    %s71 = sphi 0, %s68
    %s72 = sphi 0, %s71
    %s88 = sphi 0, %s72
    %s92 = sphi 0, %s92
    %s94 = sphi 0, %s92
    %s95 = sphi 0, %s94
    %s109 = sphi 0, %s95
    %s113 = sphi 0, %s113
    %s115 = sphi 0, %s113
    %s116 = sphi 0, %s115
    %s130 = sphi 0, %s116
  $region4: #{inception_forward.8} parent=0 // loop_header_branch
    %14 = sbr.rel (%p12) target = $region8
  $region5: #{inception_forward.8} parent=0 // loop_body
    %s16 = ssub.s32 %s11, 1
    %s17 = ssub.s32 %s11, 2
    %s18 = sadd.s32 %s11, 1
    %s19 = ssub.s32 %s11, %s18
    %p20 = scmp.eq.s32.totalorder %s19, 0
    %s22 = sadd.s32 %s21, 1
    %s23 = scalar_select %p20, %s21, %s22
    %p26 = pneg %p20
    %p27 = scmp.eq.s32.totalorder %s11, 1
    %p28 = por %p26, %p27
    %p29 = scmp.ne.s32.totalorder %s21, %s24
    %p30 = scmp.eq.s32.totalorder %s11, 0
    %p31 = por %p29, %p30
    %p32 = scmp.ne.s32.totalorder %s21, %s24
    %p33 = scmp.eq.s32.totalorder %s16, 1
    %p34 = por %p32, %p33
    %p35 = scmp.ne.s32.totalorder %s24, %s25
    %p36 = scmp.eq.s32.totalorder %s16, 0
    %p37 = por %p35, %p36
    %p38 = scmp.ne.s32.totalorder %s24, %s25
    %p39 = scmp.eq.s32.totalorder %s17, 1
    %p40 = por %p38, %p39
    %p42 = scmp.ne.s32.totalorder %s25, %s41
    %p43 = scmp.eq.s32.totalorder %s17, 0
    %p44 = por %p42, %p43
    %s46 = sadd.s32 %s45, 1
    %p49 = scmp.eq.s32.totalorder %s11, 1
    %p50 = scmp.ne.s32.totalorder %s45, %s47
    %p51 = scmp.eq.s32.totalorder %s11, 0
    %p52 = por %p50, %p51
    %p53 = scmp.ne.s32.totalorder %s45, %s47
    %p54 = scmp.eq.s32.totalorder %s16, 1
    %p55 = por %p53, %p54
    %p56 = scmp.ne.s32.totalorder %s47, %s48
    %p57 = scmp.eq.s32.totalorder %s16, 0
    %p58 = por %p56, %p57
    %p59 = scmp.ne.s32.totalorder %s47, %s48
    %p60 = scmp.eq.s32.totalorder %s17, 1
    %p61 = por %p59, %p60
    %p63 = scmp.ne.s32.totalorder %s48, %s62
    %p64 = scmp.eq.s32.totalorder %s17, 0
    %p65 = por %p63, %p64
    %s66 = ssub.s32 %s11, %s18
    %p67 = scmp.eq.s32.totalorder %s66, 0
    %s69 = sadd.s32 %s68, 1
    %s70 = scalar_select %p67, %s68, %s69
    %p73 = pneg %p67
    %p74 = scmp.eq.s32.totalorder %s11, 1
    %p75 = por %p73, %p74
    %p76 = scmp.ne.s32.totalorder %s68, %s71
    %p77 = scmp.eq.s32.totalorder %s11, 0
    %p78 = por %p76, %p77
    %p79 = scmp.ne.s32.totalorder %s68, %s71
    %p80 = scmp.eq.s32.totalorder %s16, 1
    %p81 = por %p79, %p80
    %p82 = scmp.ne.s32.totalorder %s71, %s72
    %p83 = scmp.eq.s32.totalorder %s16, 0
    %p84 = por %p82, %p83
    %p85 = scmp.ne.s32.totalorder %s71, %s72
    %p86 = scmp.eq.s32.totalorder %s17, 1
    %p87 = por %p85, %p86
    %p89 = scmp.ne.s32.totalorder %s72, %s88
    %p90 = scmp.eq.s32.totalorder %s17, 0
    %p91 = por %p89, %p90
    %s93 = sadd.s32 %s92, 1
    %p96 = scmp.eq.s32.totalorder %s11, 1
    %p97 = scmp.ne.s32.totalorder %s92, %s94
    %p98 = scmp.eq.s32.totalorder %s11, 0
    %p99 = por %p97, %p98
    %p100 = scmp.ne.s32.totalorder %s92, %s94
    %p101 = scmp.eq.s32.totalorder %s16, 1
    %p102 = por %p100, %p101
    %p103 = scmp.ne.s32.totalorder %s94, %s95
    %p104 = scmp.eq.s32.totalorder %s16, 0
    %p105 = por %p103, %p104
    %p106 = scmp.ne.s32.totalorder %s94, %s95
    %p107 = scmp.eq.s32.totalorder %s17, 1
    %p108 = por %p106, %p107
    %p110 = scmp.ne.s32.totalorder %s95, %s109
    %p111 = scmp.eq.s32.totalorder %s17, 0
    %p112 = por %p110, %p111
    %s114 = sadd.s32 %s113, 1
    %p117 = scmp.eq.s32.totalorder %s11, 1
    %p118 = scmp.ne.s32.totalorder %s113, %s115
    %p119 = scmp.eq.s32.totalorder %s11, 0
    %p120 = por %p118, %p119
    %p121 = scmp.ne.s32.totalorder %s113, %s115
    %p122 = scmp.eq.s32.totalorder %s16, 1
    %p123 = por %p121, %p122
    %p124 = scmp.ne.s32.totalorder %s115, %s116
    %p125 = scmp.eq.s32.totalorder %s16, 0
    %p126 = por %p124, %p125
    %p127 = scmp.ne.s32.totalorder %s115, %s116
    %p128 = scmp.eq.s32.totalorder %s17, 1
    %p129 = por %p127, %p128
    %p131 = scmp.ne.s32.totalorder %s116, %s130
    %p132 = scmp.eq.s32.totalorder %s17, 0
    %p133 = por %p131, %p132
    %p134 = scmp.le.s32.totalorder 1, %s11
    %p135 = scmp.lt.s32.totalorder %s11, 3
    %p136 = pnand %p134, %p135
    %p137 = pneg %p136
    // Predicated region
    $region9: #{inception_forward.8} parent=5 // pred_check
      _
    $region10: #{inception_forward.8} parent=5 // pred_check_branch
      %139 = sbr.rel (%p136) target = $region12
    $region11: #{inception_forward.8} parent=5 // pred_region
      %s140 = ssub.s32 %s11, 1
      // Predicated region
      $region13: #{inception_forward.8} parent=11 // pred_check
        %p141 = pneg %p58
      $region14: #{inception_forward.8} parent=11 // pred_check_branch
        %143 = sbr.rel (%p141) target = $region16
      $region15: #{inception_forward.8} parent=11 // pred_region
        _
      $region16: #{inception_forward.8} parent=11 // pred_fallthru
        _
    $region12: #{inception_forward.8} parent=5 // pred_fallthru
      _
    %p144 = scmp.lt.s32.totalorder %s11, 2
    // Predicated region
    $region17: #{inception_forward.8} parent=5 // pred_check
      %p145 = pneg %p144
    $region18: #{inception_forward.8} parent=5 // pred_check_branch
      %147 = sbr.rel (%p145) target = $region20
    $region19: #{inception_forward.8} parent=5 // pred_region
      // Predicated region
      $region21: #{inception_forward.8} parent=19 // pred_check
        %p148 = pneg %p31
      $region22: #{inception_forward.8} parent=19 // pred_check_branch
        %150 = sbr.rel (%p148) target = $region24
      $region23: #{inception_forward.8} parent=19 // pred_region
        %p151 = scmp.lt.s32.totalorder %s11, 1
        %s152 = scalar_select %p151, %s11, 1
        %s153 = smul.addr %s152, 54
        %s154 = smul.addr %s153, 8
        %s155 = scalar_lea.vmem %s0, %s154
      $region24: #{inception_forward.8} parent=19 // pred_fallthru
        _
    $region20: #{inception_forward.8} parent=5 // pred_fallthru
      _
    %p156 = scmp.le.s32.totalorder 1, %s11
    %p157 = scmp.lt.s32.totalorder %s11, 3
    %p158 = pnand %p156, %p157
    %p159 = pneg %p158
    // Predicated region
    $region25: #{inception_forward.8} parent=5 // pred_check
      _
    $region26: #{inception_forward.8} parent=5 // pred_check_branch
      %161 = sbr.rel (%p158) target = $region28
    $region27: #{inception_forward.8} parent=5 // pred_region
      %s162 = ssub.s32 %s11, 1
      %p163 = scmp.lt.s32.totalorder %s16, 1
      %s164 = scalar_select %p163, %s16, 1
      %s165 = smul.addr %s164, 54
      %s166 = smul.addr %s165, 8
      %s167 = scalar_lea.vmem %s0, %s166
      %p168 = pneg %p37
      %p169 = pneg %p34
      %p170 = pneg %p58
      %p171 = pneg %p55
      %p172 = pneg %p84
      %p173 = pneg %p81
      %p174 = scmp.lt.s32.totalorder %s16, 1
      %s175 = scalar_select %p174, %s16, 1
      %s176 = smul.addr %s175, 32
      %s177 = smul.addr %s176, 8
      %s178 = scalar_lea.vmem %s2, %s177
      %p179 = pneg %p105
      %p180 = pneg %p102
      %p181 = pneg %p126
      %p182 = pneg %p123
      %p183 = scmp.lt.s32.totalorder %s16, 1
      %s184 = scalar_select %p183, %s16, 1
      %s185 = smul.addr %s184, 54
      %s186 = smul.addr %s185, 8
      %s187 = scalar_lea.vmem %s0, %s186
      %p188 = scmp.lt.s32.totalorder %s16, 1
      %s189 = scalar_select %p188, %s16, 1
      %s190 = smul.addr %s189, 32
      %s191 = smul.addr %s190, 8
      %s192 = scalar_lea.vmem %s2, %s191
      %p193 = scmp.eq.s32.totalorder %s16, 0
      // Predicated region
      $region29: #{inception_forward.8} parent=27 // pred_check
        %p194 = pneg %p193
      $region30: #{inception_forward.8} parent=27 // pred_check_branch
        %196 = sbr.rel (%p194) target = $region32
      $region31: #{inception_forward.8} parent=27 // pred_region
        %197 = vst [vmem:[#allocation2] sm:$0x1] 0.0
        %198 = vst [vmem:[#allocation3] sm:$0x1] 0.0
      $region32: #{inception_forward.8} parent=27 // pred_fallthru
        _
      %v199 = vld [vmem:[%s187] sm:$0xff]
      %v200 = vld [vmem:[%s187 + $0x8] sm:$0xff]
      %v201 = vld [vmem:[%s187 + $0x10] sm:$0x3]
      %v202 = vld [vmem:[%s187 + $0x18] sm:$0xff]
      %v203 = vld [vmem:[%s187 + $0x20] sm:$0xff]
      %v204 = vld [vmem:[%s187 + $0x28] sm:$0x3]
      %v205 = vld [vmem:[%s187 + $0x30] sm:$0xff]
      %v206 = vld [vmem:[%s187 + $0x38] sm:$0xff]
      %v207 = vld [vmem:[%s187 + $0x40] sm:$0x3]
      %v208 = vld [vmem:[%s187 + $0x48] sm:$0xff]
      %v209 = vld [vmem:[%s187 + $0x50] sm:$0xff]
      %v210 = vld [vmem:[%s187 + $0x58] sm:$0x3]
      %v211 = vld [vmem:[%s187 + $0x60] sm:$0xff]
      %v212 = vld [vmem:[%s187 + $0x68] sm:$0xff]
      %v213 = vld [vmem:[%s187 + $0x70] sm:$0x3]
      %v214 = vld [vmem:[%s187 + $0x78] sm:$0xff]
      %v215 = vld [vmem:[%s187 + $0x80] sm:$0xff]
      %v216 = vld [vmem:[%s187 + $0x88] sm:$0x3]
      %v217 = vld [vmem:[%s187 + $0x90] sm:$0xff]
      %v218 = vld [vmem:[%s187 + $0x98] sm:$0xff]
      %v219 = vld [vmem:[%s187 + $0xa0] sm:$0x3]
      %v220 = vld [vmem:[%s187 + $0xa8] sm:$0xff]
      %v221 = vld [vmem:[%s187 + $0xb0] sm:$0xff]
      %v222 = vld [vmem:[%s187 + $0xb8] sm:$0x3]
      %v223 = vld [vmem:[%s187 + $0xc0] sm:$0xff]
      %v224 = vld [vmem:[%s187 + $0xc8] sm:$0xff]
      %v225 = vld [vmem:[%s187 + $0xd0] sm:$0x3]
      %v226 = vld [vmem:[%s187 + $0xd8] sm:$0xff]
      %v227 = vld [vmem:[%s187 + $0xe0] sm:$0xff]
      %v228 = vld [vmem:[%s187 + $0xe8] sm:$0x3]
      %v229 = vld [vmem:[%s187 + $0xf0] sm:$0xff]
      %v230 = vld [vmem:[%s187 + $0xf8] sm:$0xff]
      %v231 = vld [vmem:[%s187 + $0x100] sm:$0x3]
      %v232 = vld [vmem:[%s187 + $0x108] sm:$0xff]
      %v233 = vld [vmem:[%s187 + $0x110] sm:$0xff]
      %v234 = vld [vmem:[%s187 + $0x118] sm:$0x3]
      %v235 = vld [vmem:[%s187 + $0x120] sm:$0xff]
      %v236 = vld [vmem:[%s187 + $0x128] sm:$0xff]
      %v237 = vld [vmem:[%s187 + $0x130] sm:$0x3]
      %v238 = vld [vmem:[%s187 + $0x138] sm:$0xff]
      %v239 = vld [vmem:[%s187 + $0x140] sm:$0xff]
      %v240 = vld [vmem:[%s187 + $0x148] sm:$0x3]
      %v241 = vld [vmem:[%s187 + $0x150] sm:$0xff]
      %v242 = vld [vmem:[%s187 + $0x158] sm:$0xff]
      %v243 = vld [vmem:[%s187 + $0x160] sm:$0x3]
      %v244 = vld [vmem:[%s187 + $0x168] sm:$0xff]
      %v245 = vld [vmem:[%s187 + $0x170] sm:$0xff]
      %v246 = vld [vmem:[%s187 + $0x178] sm:$0x3]
      %v247 = vld [vmem:[%s187 + $0x180] sm:$0xff]
      %v248 = vld [vmem:[%s187 + $0x188] sm:$0xff]
      %v249 = vld [vmem:[%s187 + $0x190] sm:$0x3]
      %v250 = vld [vmem:[%s187 + $0x198] sm:$0xff]
      %v251 = vld [vmem:[%s187 + $0x1a0] sm:$0xff]
      %v252 = vld [vmem:[%s187 + $0x1a8] sm:$0x3]
      %v253 = vadd.f32 %v199, 0.0
      %v254 = vadd.f32 %v200, 0.0
      %v255 = vadd.f32 %v202, 0.0
      %v256 = vadd.f32 %v203, 0.0
      %v257 = vadd.f32 %v205, 0.0
      %v258 = vadd.f32 %v206, 0.0
      %v259 = vadd.f32 %v208, 0.0
      %v260 = vadd.f32 %v209, 0.0
      %v261 = vadd.f32 %v211, 0.0
      %v262 = vadd.f32 %v212, 0.0
      %v263 = vadd.f32 %v214, 0.0
      %v264 = vadd.f32 %v215, 0.0
      %v265 = vadd.f32 %v217, 0.0
      %v266 = vadd.f32 %v218, 0.0
      %v267 = vadd.f32 %v220, 0.0
      %v268 = vadd.f32 %v221, 0.0
      %v269 = vadd.f32 %v223, 0.0
      %v270 = vadd.f32 %v224, 0.0
      %v271 = vadd.f32 %v226, 0.0
      %v272 = vadd.f32 %v227, 0.0
      %v273 = vadd.f32 %v229, 0.0
      %v274 = vadd.f32 %v230, 0.0
      %v275 = vadd.f32 %v232, 0.0
      %v276 = vadd.f32 %v233, 0.0
      %v277 = vadd.f32 %v235, 0.0
      %v278 = vadd.f32 %v236, 0.0
      %v279 = vadd.f32 %v238, 0.0
      %v280 = vadd.f32 %v239, 0.0
      %v281 = vadd.f32 %v241, 0.0
      %v282 = vadd.f32 %v242, 0.0
      %v283 = vadd.f32 %v244, 0.0
      %v284 = vadd.f32 %v245, 0.0
      %vm333 = vcmask 1046528
      %v334 = vrot.slane %v199, 1
      %v335 = vrot.slane %v200, 1
      %v336 = vsel %vm333, %v334, %v335
      %v337 = vrot.slane %v201, 1
      %v338 = vsel %vm333, %v335, %v337
      %v339 = vrot.slane %v202, 1
      %v340 = vrot.slane %v203, 1
      %v341 = vsel %vm333, %v339, %v340
      %v342 = vrot.slane %v204, 1
      %v343 = vsel %vm333, %v340, %v342
      %v344 = vrot.slane %v205, 1
      %v345 = vrot.slane %v206, 1
      %v346 = vsel %vm333, %v344, %v345
      %v347 = vrot.slane %v207, 1
      %v348 = vsel %vm333, %v345, %v347
      %v349 = vrot.slane %v208, 1
      %v350 = vrot.slane %v209, 1
      %v351 = vsel %vm333, %v349, %v350
      %v352 = vrot.slane %v210, 1
      %v353 = vsel %vm333, %v350, %v352
      %v354 = vrot.slane %v211, 1
      %v355 = vrot.slane %v212, 1
      %v356 = vsel %vm333, %v354, %v355
      %v357 = vrot.slane %v213, 1
      %v358 = vsel %vm333, %v355, %v357
      %v359 = vrot.slane %v214, 1
      %v360 = vrot.slane %v215, 1
      %v361 = vsel %vm333, %v359, %v360
      %v362 = vrot.slane %v216, 1
      %v363 = vsel %vm333, %v360, %v362
      %v364 = vrot.slane %v217, 1
      %v365 = vrot.slane %v218, 1
      %v366 = vsel %vm333, %v364, %v365
      %v367 = vrot.slane %v219, 1
      %v368 = vsel %vm333, %v365, %v367
      %v369 = vrot.slane %v220, 1
      %v370 = vrot.slane %v221, 1
      %v371 = vsel %vm333, %v369, %v370
      %v372 = vrot.slane %v222, 1
      %v373 = vsel %vm333, %v370, %v372
      %v374 = vrot.slane %v223, 1
      %v375 = vrot.slane %v224, 1
      %v376 = vsel %vm333, %v374, %v375
      %v377 = vrot.slane %v225, 1
      %v378 = vsel %vm333, %v375, %v377
      %v379 = vrot.slane %v226, 1
      %v380 = vrot.slane %v227, 1
      %v381 = vsel %vm333, %v379, %v380
      %v382 = vrot.slane %v228, 1
      %v383 = vsel %vm333, %v380, %v382
      %v384 = vrot.slane %v229, 1
      %v385 = vrot.slane %v230, 1
      %v386 = vsel %vm333, %v384, %v385
      %v387 = vrot.slane %v231, 1
      %v388 = vsel %vm333, %v385, %v387
      %v389 = vrot.slane %v232, 1
      %v390 = vrot.slane %v233, 1
      %v391 = vsel %vm333, %v389, %v390
      %v392 = vrot.slane %v234, 1
      %v393 = vsel %vm333, %v390, %v392
      %v394 = vrot.slane %v235, 1
      %v395 = vrot.slane %v236, 1
      %v396 = vsel %vm333, %v394, %v395
      %v397 = vrot.slane %v237, 1
      %v398 = vsel %vm333, %v395, %v397
      %v399 = vrot.slane %v238, 1
      %v400 = vrot.slane %v239, 1
      %v401 = vsel %vm333, %v399, %v400
      %v402 = vrot.slane %v240, 1
      %v403 = vsel %vm333, %v400, %v402
      %v404 = vrot.slane %v241, 1
      %v405 = vrot.slane %v242, 1
      %v406 = vsel %vm333, %v404, %v405
      %v407 = vrot.slane %v243, 1
      %v408 = vsel %vm333, %v405, %v407
      %v409 = vrot.slane %v244, 1
      %v410 = vrot.slane %v245, 1
      %v411 = vsel %vm333, %v409, %v410
      %v412 = vrot.slane %v246, 1
      %v413 = vsel %vm333, %v410, %v412
      %v446 = vadd.f32 %v253, %v336
      %v447 = vadd.f32 %v254, %v338
      %v448 = vadd.f32 %v255, %v341
      %v449 = vadd.f32 %v256, %v343
      %v450 = vadd.f32 %v257, %v346
      %v451 = vadd.f32 %v258, %v348
      %v452 = vadd.f32 %v259, %v351
      %v453 = vadd.f32 %v260, %v353
      %v454 = vadd.f32 %v261, %v356
      %v455 = vadd.f32 %v262, %v358
      %v456 = vadd.f32 %v263, %v361
      %v457 = vadd.f32 %v264, %v363
      %v458 = vadd.f32 %v265, %v366
      %v459 = vadd.f32 %v266, %v368
      %v460 = vadd.f32 %v267, %v371
      %v461 = vadd.f32 %v268, %v373
      %v462 = vadd.f32 %v269, %v376
      %v463 = vadd.f32 %v270, %v378
      %v464 = vadd.f32 %v271, %v381
      %v465 = vadd.f32 %v272, %v383
      %v466 = vadd.f32 %v273, %v386
      %v467 = vadd.f32 %v274, %v388
      %v468 = vadd.f32 %v275, %v391
      %v469 = vadd.f32 %v276, %v393
      %v470 = vadd.f32 %v277, %v396
      %v471 = vadd.f32 %v278, %v398
      %v472 = vadd.f32 %v279, %v401
      %v473 = vadd.f32 %v280, %v403
      %v474 = vadd.f32 %v281, %v406
      %v475 = vadd.f32 %v282, %v408
      %v476 = vadd.f32 %v283, %v411
      %v477 = vadd.f32 %v284, %v413
      %vm478 = vcmask 1045504
      %v479 = vrot.slane %v199, 2
      %v480 = vrot.slane %v200, 2
      %v481 = vsel %vm478, %v479, %v480
      %v482 = vrot.slane %v201, 2
      %v483 = vsel %vm478, %v480, %v482
      %v484 = vrot.slane %v202, 2
      %v485 = vrot.slane %v203, 2
      %v486 = vsel %vm478, %v484, %v485
      %v487 = vrot.slane %v204, 2
      %v488 = vsel %vm478, %v485, %v487
      %v489 = vrot.slane %v205, 2
      %v490 = vrot.slane %v206, 2
      %v491 = vsel %vm478, %v489, %v490
      %v492 = vrot.slane %v207, 2
      %v493 = vsel %vm478, %v490, %v492
      %v494 = vrot.slane %v208, 2
      %v495 = vrot.slane %v209, 2
      %v496 = vsel %vm478, %v494, %v495
      %v497 = vrot.slane %v210, 2
      %v498 = vsel %vm478, %v495, %v497
      %v499 = vrot.slane %v211, 2
      %v500 = vrot.slane %v212, 2
      %v501 = vsel %vm478, %v499, %v500
      %v502 = vrot.slane %v213, 2
      %v503 = vsel %vm478, %v500, %v502
      %v504 = vrot.slane %v214, 2
      %v505 = vrot.slane %v215, 2
      %v506 = vsel %vm478, %v504, %v505
      %v507 = vrot.slane %v216, 2
      %v508 = vsel %vm478, %v505, %v507
      %v509 = vrot.slane %v217, 2
      %v510 = vrot.slane %v218, 2
      %v511 = vsel %vm478, %v509, %v510
      %v512 = vrot.slane %v219, 2
      %v513 = vsel %vm478, %v510, %v512
      %v514 = vrot.slane %v220, 2
      %v515 = vrot.slane %v221, 2
      %v516 = vsel %vm478, %v514, %v515
      %v517 = vrot.slane %v222, 2
      %v518 = vsel %vm478, %v515, %v517
      %v519 = vrot.slane %v223, 2
      %v520 = vrot.slane %v224, 2
      %v521 = vsel %vm478, %v519, %v520
      %v522 = vrot.slane %v225, 2
      %v523 = vsel %vm478, %v520, %v522
      %v524 = vrot.slane %v226, 2
      %v525 = vrot.slane %v227, 2
      %v526 = vsel %vm478, %v524, %v525
      %v527 = vrot.slane %v228, 2
      %v528 = vsel %vm478, %v525, %v527
      %v529 = vrot.slane %v229, 2
      %v530 = vrot.slane %v230, 2
      %v531 = vsel %vm478, %v529, %v530
      %v532 = vrot.slane %v231, 2
      %v533 = vsel %vm478, %v530, %v532
      %v534 = vrot.slane %v232, 2
      %v535 = vrot.slane %v233, 2
      %v536 = vsel %vm478, %v534, %v535
      %v537 = vrot.slane %v234, 2
      %v538 = vsel %vm478, %v535, %v537
      %v539 = vrot.slane %v235, 2
      %v540 = vrot.slane %v236, 2
      %v541 = vsel %vm478, %v539, %v540
      %v542 = vrot.slane %v237, 2
      %v543 = vsel %vm478, %v540, %v542
      %v544 = vrot.slane %v238, 2
      %v545 = vrot.slane %v239, 2
      %v546 = vsel %vm478, %v544, %v545
      %v547 = vrot.slane %v240, 2
      %v548 = vsel %vm478, %v545, %v547
      %v549 = vrot.slane %v241, 2
      %v550 = vrot.slane %v242, 2
      %v551 = vsel %vm478, %v549, %v550
      %v552 = vrot.slane %v243, 2
      %v553 = vsel %vm478, %v550, %v552
      %v554 = vrot.slane %v244, 2
      %v555 = vrot.slane %v245, 2
      %v556 = vsel %vm478, %v554, %v555
      %v557 = vrot.slane %v246, 2
      %v558 = vsel %vm478, %v555, %v557
      %v591 = vadd.f32 %v446, %v481
      %v592 = vadd.f32 %v447, %v483
      %v593 = vadd.f32 %v448, %v486
      %v594 = vadd.f32 %v449, %v488
      %v595 = vadd.f32 %v450, %v491
      %v596 = vadd.f32 %v451, %v493
      %v597 = vadd.f32 %v452, %v496
      %v598 = vadd.f32 %v453, %v498
      %v599 = vadd.f32 %v454, %v501
      %v600 = vadd.f32 %v455, %v503
      %v601 = vadd.f32 %v456, %v506
      %v602 = vadd.f32 %v457, %v508
      %v603 = vadd.f32 %v458, %v511
      %v604 = vadd.f32 %v459, %v513
      %v605 = vadd.f32 %v460, %v516
      %v606 = vadd.f32 %v461, %v518
      %v607 = vadd.f32 %v462, %v521
      %v608 = vadd.f32 %v463, %v523
      %v609 = vadd.f32 %v464, %v526
      %v610 = vadd.f32 %v465, %v528
      %v611 = vadd.f32 %v466, %v531
      %v612 = vadd.f32 %v467, %v533
      %v613 = vadd.f32 %v468, %v536
      %v614 = vadd.f32 %v469, %v538
      %v615 = vadd.f32 %v470, %v541
      %v616 = vadd.f32 %v471, %v543
      %v617 = vadd.f32 %v472, %v546
      %v618 = vadd.f32 %v473, %v548
      %v619 = vadd.f32 %v474, %v551
      %v620 = vadd.f32 %v475, %v553
      %v621 = vadd.f32 %v476, %v556
      %v622 = vadd.f32 %v477, %v558
      %v623 = vadd.f32 %v591, %v202
      %v624 = vadd.f32 %v592, %v203
      %v625 = vadd.f32 %v593, %v205
      %v626 = vadd.f32 %v594, %v206
      %v627 = vadd.f32 %v595, %v208
      %v628 = vadd.f32 %v596, %v209
      %v629 = vadd.f32 %v597, %v211
      %v630 = vadd.f32 %v598, %v212
      %v631 = vadd.f32 %v599, %v214
      %v632 = vadd.f32 %v600, %v215
      %v633 = vadd.f32 %v601, %v217
      %v634 = vadd.f32 %v602, %v218
      %v635 = vadd.f32 %v603, %v220
      %v636 = vadd.f32 %v604, %v221
      %v637 = vadd.f32 %v605, %v223
      %v638 = vadd.f32 %v606, %v224
      %v639 = vadd.f32 %v607, %v226
      %v640 = vadd.f32 %v608, %v227
      %v641 = vadd.f32 %v609, %v229
      %v642 = vadd.f32 %v610, %v230
      %v643 = vadd.f32 %v611, %v232
      %v644 = vadd.f32 %v612, %v233
      %v645 = vadd.f32 %v613, %v235
      %v646 = vadd.f32 %v614, %v236
      %v647 = vadd.f32 %v615, %v238
      %v648 = vadd.f32 %v616, %v239
      %v649 = vadd.f32 %v617, %v241
      %v650 = vadd.f32 %v618, %v242
      %v651 = vadd.f32 %v619, %v244
      %v652 = vadd.f32 %v620, %v245
      %v653 = vadd.f32 %v621, %v247
      %v654 = vadd.f32 %v622, %v248
      %v658 = vrot.slane %v247, 1
      %v659 = vrot.slane %v248, 1
      %v660 = vsel %vm333, %v658, %v659
      %v661 = vrot.slane %v249, 1
      %v662 = vsel %vm333, %v659, %v661
      %v665 = vadd.f32 %v623, %v341
      %v666 = vadd.f32 %v624, %v343
      %v667 = vadd.f32 %v625, %v346
      %v668 = vadd.f32 %v626, %v348
      %v669 = vadd.f32 %v627, %v351
      %v670 = vadd.f32 %v628, %v353
      %v671 = vadd.f32 %v629, %v356
      %v672 = vadd.f32 %v630, %v358
      %v673 = vadd.f32 %v631, %v361
      %v674 = vadd.f32 %v632, %v363
      %v675 = vadd.f32 %v633, %v366
      %v676 = vadd.f32 %v634, %v368
      %v677 = vadd.f32 %v635, %v371
      %v678 = vadd.f32 %v636, %v373
      %v679 = vadd.f32 %v637, %v376
      %v680 = vadd.f32 %v638, %v378
      %v681 = vadd.f32 %v639, %v381
      %v682 = vadd.f32 %v640, %v383
      %v683 = vadd.f32 %v641, %v386
      %v684 = vadd.f32 %v642, %v388
      %v685 = vadd.f32 %v643, %v391
      %v686 = vadd.f32 %v644, %v393
      %v687 = vadd.f32 %v645, %v396
      %v688 = vadd.f32 %v646, %v398
      %v689 = vadd.f32 %v647, %v401
      %v690 = vadd.f32 %v648, %v403
      %v691 = vadd.f32 %v649, %v406
      %v692 = vadd.f32 %v650, %v408
      %v693 = vadd.f32 %v651, %v411
      %v694 = vadd.f32 %v652, %v413
      %v695 = vadd.f32 %v653, %v660
      %v696 = vadd.f32 %v654, %v662
      %v697 = vrot.slane %v247, 2
      %v698 = vrot.slane %v248, 2
      %v699 = vsel %vm478, %v697, %v698
      %v700 = vrot.slane %v249, 2
      %v701 = vsel %vm478, %v698, %v700
      %v704 = vadd.f32 %v665, %v486
      %v705 = vadd.f32 %v666, %v488
      %v706 = vadd.f32 %v667, %v491
      %v707 = vadd.f32 %v668, %v493
      %v708 = vadd.f32 %v669, %v496
      %v709 = vadd.f32 %v670, %v498
      %v710 = vadd.f32 %v671, %v501
      %v711 = vadd.f32 %v672, %v503
      %v712 = vadd.f32 %v673, %v506
      %v713 = vadd.f32 %v674, %v508
      %v714 = vadd.f32 %v675, %v511
      %v715 = vadd.f32 %v676, %v513
      %v716 = vadd.f32 %v677, %v516
      %v717 = vadd.f32 %v678, %v518
      %v718 = vadd.f32 %v679, %v521
      %v719 = vadd.f32 %v680, %v523
      %v720 = vadd.f32 %v681, %v526
      %v721 = vadd.f32 %v682, %v528
      %v722 = vadd.f32 %v683, %v531
      %v723 = vadd.f32 %v684, %v533
      %v724 = vadd.f32 %v685, %v536
      %v725 = vadd.f32 %v686, %v538
      %v726 = vadd.f32 %v687, %v541
      %v727 = vadd.f32 %v688, %v543
      %v728 = vadd.f32 %v689, %v546
      %v729 = vadd.f32 %v690, %v548
      %v730 = vadd.f32 %v691, %v551
      %v731 = vadd.f32 %v692, %v553
      %v732 = vadd.f32 %v693, %v556
      %v733 = vadd.f32 %v694, %v558
      %v734 = vadd.f32 %v695, %v699
      %v735 = vadd.f32 %v696, %v701
      %v736 = vadd.f32 %v704, %v205
      %v737 = vadd.f32 %v705, %v206
      %v738 = vadd.f32 %v706, %v208
      %v739 = vadd.f32 %v707, %v209
      %v740 = vadd.f32 %v708, %v211
      %v741 = vadd.f32 %v709, %v212
      %v742 = vadd.f32 %v710, %v214
      %v743 = vadd.f32 %v711, %v215
      %v744 = vadd.f32 %v712, %v217
      %v745 = vadd.f32 %v713, %v218
      %v746 = vadd.f32 %v714, %v220
      %v747 = vadd.f32 %v715, %v221
      %v748 = vadd.f32 %v716, %v223
      %v749 = vadd.f32 %v717, %v224
      %v750 = vadd.f32 %v718, %v226
      %v751 = vadd.f32 %v719, %v227
      %v752 = vadd.f32 %v720, %v229
      %v753 = vadd.f32 %v721, %v230
      %v754 = vadd.f32 %v722, %v232
      %v755 = vadd.f32 %v723, %v233
      %v756 = vadd.f32 %v724, %v235
      %v757 = vadd.f32 %v725, %v236
      %v758 = vadd.f32 %v726, %v238
      %v759 = vadd.f32 %v727, %v239
      %v760 = vadd.f32 %v728, %v241
      %v761 = vadd.f32 %v729, %v242
      %v762 = vadd.f32 %v730, %v244
      %v763 = vadd.f32 %v731, %v245
      %v764 = vadd.f32 %v732, %v247
      %v765 = vadd.f32 %v733, %v248
      %v766 = vadd.f32 %v734, %v250
      %v767 = vadd.f32 %v735, %v251
      %v771 = vrot.slane %v250, 1
      %v772 = vrot.slane %v251, 1
      %v773 = vsel %vm333, %v771, %v772
      %v774 = vrot.slane %v252, 1
      %v775 = vsel %vm333, %v772, %v774
      %v778 = vadd.f32 %v736, %v346
      %v779 = vadd.f32 %v737, %v348
      %v780 = vadd.f32 %v738, %v351
      %v781 = vadd.f32 %v739, %v353
      %v782 = vadd.f32 %v740, %v356
      %v783 = vadd.f32 %v741, %v358
      %v784 = vadd.f32 %v742, %v361
      %v785 = vadd.f32 %v743, %v363
      %v786 = vadd.f32 %v744, %v366
      %v787 = vadd.f32 %v745, %v368
      %v788 = vadd.f32 %v746, %v371
      %v789 = vadd.f32 %v747, %v373
      %v790 = vadd.f32 %v748, %v376
      %v791 = vadd.f32 %v749, %v378
      %v792 = vadd.f32 %v750, %v381
      %v793 = vadd.f32 %v751, %v383
      %v794 = vadd.f32 %v752, %v386
      %v795 = vadd.f32 %v753, %v388
      %v796 = vadd.f32 %v754, %v391
      %v797 = vadd.f32 %v755, %v393
      %v798 = vadd.f32 %v756, %v396
      %v799 = vadd.f32 %v757, %v398
      %v800 = vadd.f32 %v758, %v401
      %v801 = vadd.f32 %v759, %v403
      %v802 = vadd.f32 %v760, %v406
      %v803 = vadd.f32 %v761, %v408
      %v804 = vadd.f32 %v762, %v411
      %v805 = vadd.f32 %v763, %v413
      %v806 = vadd.f32 %v764, %v660
      %v807 = vadd.f32 %v765, %v662
      %v808 = vadd.f32 %v766, %v773
      %v809 = vadd.f32 %v767, %v775
      %v810 = vrot.slane %v250, 2
      %v811 = vrot.slane %v251, 2
      %v812 = vsel %vm478, %v810, %v811
      %v813 = vrot.slane %v252, 2
      %v814 = vsel %vm478, %v811, %v813
      %v817 = vadd.f32 %v778, %v491
      %v818 = vadd.f32 %v779, %v493
      %v819 = vadd.f32 %v780, %v496
      %v820 = vadd.f32 %v781, %v498
      %v821 = vadd.f32 %v782, %v501
      %v822 = vadd.f32 %v783, %v503
      %v823 = vadd.f32 %v784, %v506
      %v824 = vadd.f32 %v785, %v508
      %v825 = vadd.f32 %v786, %v511
      %v826 = vadd.f32 %v787, %v513
      %v827 = vadd.f32 %v788, %v516
      %v828 = vadd.f32 %v789, %v518
      %v829 = vadd.f32 %v790, %v521
      %v830 = vadd.f32 %v791, %v523
      %v831 = vadd.f32 %v792, %v526
      %v832 = vadd.f32 %v793, %v528
      %v833 = vadd.f32 %v794, %v531
      %v834 = vadd.f32 %v795, %v533
      %v835 = vadd.f32 %v796, %v536
      %v836 = vadd.f32 %v797, %v538
      %v837 = vadd.f32 %v798, %v541
      %v838 = vadd.f32 %v799, %v543
      %v839 = vadd.f32 %v800, %v546
      %v840 = vadd.f32 %v801, %v548
      %v841 = vadd.f32 %v802, %v551
      %v842 = vadd.f32 %v803, %v553
      %v843 = vadd.f32 %v804, %v556
      %v844 = vadd.f32 %v805, %v558
      %v845 = vadd.f32 %v806, %v699
      %v846 = vadd.f32 %v807, %v701
      %v847 = vadd.f32 %v808, %v812
      %v848 = vadd.f32 %v809, %v814
      %v849 = vld [vmem:[%s1] sm:$0xff]
      %v850 = vld [vmem:[%s1 + $0x8] sm:$0xff]
      %v851 = vld [vmem:[%s1 + $0x10] sm:$0xff]
      %v852 = vld [vmem:[%s1 + $0x18] sm:$0xff]
      %v853 = vld [vmem:[%s1 + $0x20] sm:$0xff]
      %v854 = vld [vmem:[%s1 + $0x28] sm:$0xff]
      %v855 = vld [vmem:[%s1 + $0x30] sm:$0xff]
      %v856 = vld [vmem:[%s1 + $0x38] sm:$0xff]
      %v857 = vld [vmem:[%s1 + $0x40] sm:$0xff]
      %v858 = vld [vmem:[%s1 + $0x48] sm:$0xff]
      %v859 = vld [vmem:[%s1 + $0x50] sm:$0xff]
      %v860 = vld [vmem:[%s1 + $0x58] sm:$0xff]
      %v861 = vld [vmem:[%s1 + $0x60] sm:$0xff]
      %v862 = vld [vmem:[%s1 + $0x68] sm:$0xff]
      %v863 = vld [vmem:[%s1 + $0x70] sm:$0xff]
      %v864 = vld [vmem:[%s1 + $0x78] sm:$0xff]
      %v865 = vld [vmem:[%s1 + $0x80] sm:$0xff]
      %v866 = vld [vmem:[%s1 + $0x88] sm:$0xff]
      %v867 = vld [vmem:[%s1 + $0x90] sm:$0xff]
      %v868 = vld [vmem:[%s1 + $0x98] sm:$0xff]
      %v869 = vld [vmem:[%s1 + $0xa0] sm:$0xff]
      %v870 = vld [vmem:[%s1 + $0xa8] sm:$0xff]
      %v871 = vld [vmem:[%s1 + $0xb0] sm:$0xff]
      %v872 = vld [vmem:[%s1 + $0xb8] sm:$0xff]
      %v873 = vld [vmem:[%s1 + $0xc0] sm:$0xff]
      %v874 = vld [vmem:[%s1 + $0xc8] sm:$0xff]
      %v875 = vld [vmem:[%s1 + $0xd0] sm:$0xff]
      %v876 = vld [vmem:[%s1 + $0xd8] sm:$0xff]
      %v877 = vld [vmem:[%s1 + $0xe0] sm:$0xff]
      %v878 = vld [vmem:[%s1 + $0xe8] sm:$0xff]
      %v879 = vld [vmem:[%s1 + $0xf0] sm:$0xff]
      %v880 = vld [vmem:[%s1 + $0xf8] sm:$0xff]
      %882 = vset.pattern.permute.xlu0 0
      %883 = vperm.xlu0 %882, %v849
      %v884 = vpop.permute.xlu0 %883
      %887 = vset.pattern.permute.xlu0 0
      %888 = vperm.xlu0 %887, %v850
      %v889 = vpop.permute.xlu0 %888
      %892 = vset.pattern.permute.xlu0 0
      %893 = vperm.xlu0 %892, %v851
      %v894 = vpop.permute.xlu0 %893
      %897 = vset.pattern.permute.xlu0 0
      %898 = vperm.xlu0 %897, %v852
      %v899 = vpop.permute.xlu0 %898
      %902 = vset.pattern.permute.xlu0 0
      %903 = vperm.xlu0 %902, %v853
      %v904 = vpop.permute.xlu0 %903
      %907 = vset.pattern.permute.xlu0 0
      %908 = vperm.xlu0 %907, %v854
      %v909 = vpop.permute.xlu0 %908
      %912 = vset.pattern.permute.xlu0 0
      %913 = vperm.xlu0 %912, %v855
      %v914 = vpop.permute.xlu0 %913
      %917 = vset.pattern.permute.xlu0 0
      %918 = vperm.xlu0 %917, %v856
      %v919 = vpop.permute.xlu0 %918
      %922 = vset.pattern.permute.xlu0 0
      %923 = vperm.xlu0 %922, %v857
      %v924 = vpop.permute.xlu0 %923
      %927 = vset.pattern.permute.xlu0 0
      %928 = vperm.xlu0 %927, %v858
      %v929 = vpop.permute.xlu0 %928
      %932 = vset.pattern.permute.xlu0 0
      %933 = vperm.xlu0 %932, %v859
      %v934 = vpop.permute.xlu0 %933
      %937 = vset.pattern.permute.xlu0 0
      %938 = vperm.xlu0 %937, %v860
      %v939 = vpop.permute.xlu0 %938
      %942 = vset.pattern.permute.xlu0 0
      %943 = vperm.xlu0 %942, %v861
      %v944 = vpop.permute.xlu0 %943
      %947 = vset.pattern.permute.xlu0 0
      %948 = vperm.xlu0 %947, %v862
      %v949 = vpop.permute.xlu0 %948
      %952 = vset.pattern.permute.xlu0 0
      %953 = vperm.xlu0 %952, %v863
      %v954 = vpop.permute.xlu0 %953
      %957 = vset.pattern.permute.xlu0 0
      %958 = vperm.xlu0 %957, %v864
      %v959 = vpop.permute.xlu0 %958
      %962 = vset.pattern.permute.xlu0 0
      %963 = vperm.xlu0 %962, %v865
      %v964 = vpop.permute.xlu0 %963
      %967 = vset.pattern.permute.xlu0 0
      %968 = vperm.xlu0 %967, %v866
      %v969 = vpop.permute.xlu0 %968
      %972 = vset.pattern.permute.xlu0 0
      %973 = vperm.xlu0 %972, %v867
      %v974 = vpop.permute.xlu0 %973
      %977 = vset.pattern.permute.xlu0 0
      %978 = vperm.xlu0 %977, %v868
      %v979 = vpop.permute.xlu0 %978
      %982 = vset.pattern.permute.xlu0 0
      %983 = vperm.xlu0 %982, %v869
      %v984 = vpop.permute.xlu0 %983
      %987 = vset.pattern.permute.xlu0 0
      %988 = vperm.xlu0 %987, %v870
      %v989 = vpop.permute.xlu0 %988
      %992 = vset.pattern.permute.xlu0 0
      %993 = vperm.xlu0 %992, %v871
      %v994 = vpop.permute.xlu0 %993
      %997 = vset.pattern.permute.xlu0 0
      %998 = vperm.xlu0 %997, %v872
      %v999 = vpop.permute.xlu0 %998
      %1002 = vset.pattern.permute.xlu0 0
      %1003 = vperm.xlu0 %1002, %v873
      %v1004 = vpop.permute.xlu0 %1003
      %1007 = vset.pattern.permute.xlu0 0
      %1008 = vperm.xlu0 %1007, %v874
      %v1009 = vpop.permute.xlu0 %1008
      %1012 = vset.pattern.permute.xlu0 0
      %1013 = vperm.xlu0 %1012, %v875
      %v1014 = vpop.permute.xlu0 %1013
      %1017 = vset.pattern.permute.xlu0 0
      %1018 = vperm.xlu0 %1017, %v876
      %v1019 = vpop.permute.xlu0 %1018
      %1022 = vset.pattern.permute.xlu0 0
      %1023 = vperm.xlu0 %1022, %v877
      %v1024 = vpop.permute.xlu0 %1023
      %1027 = vset.pattern.permute.xlu0 0
      %1028 = vperm.xlu0 %1027, %v878
      %v1029 = vpop.permute.xlu0 %1028
      %1032 = vset.pattern.permute.xlu0 0
      %1033 = vperm.xlu0 %1032, %v879
      %v1034 = vpop.permute.xlu0 %1033
      %1037 = vset.pattern.permute.xlu0 0
      %1038 = vperm.xlu0 %1037, %v880
      %v1039 = vpop.permute.xlu0 %1038
      %v1041 = vmul.f32 %v817, %v884
      %v1042 = vmul.f32 %v818, %v889
      %v1043 = vmul.f32 %v819, %v894
      %v1044 = vmul.f32 %v820, %v899
      %v1045 = vmul.f32 %v821, %v904
      %v1046 = vmul.f32 %v822, %v909
      %v1047 = vmul.f32 %v823, %v914
      %v1048 = vmul.f32 %v824, %v919
      %v1049 = vmul.f32 %v825, %v924
      %v1050 = vmul.f32 %v826, %v929
      %v1051 = vmul.f32 %v827, %v934
      %v1052 = vmul.f32 %v828, %v939
      %v1053 = vmul.f32 %v829, %v944
      %v1054 = vmul.f32 %v830, %v949
      %v1055 = vmul.f32 %v831, %v954
      %v1056 = vmul.f32 %v832, %v959
      %v1057 = vmul.f32 %v833, %v964
      %v1058 = vmul.f32 %v834, %v969
      %v1059 = vmul.f32 %v835, %v974
      %v1060 = vmul.f32 %v836, %v979
      %v1061 = vmul.f32 %v837, %v984
      %v1062 = vmul.f32 %v838, %v989
      %v1063 = vmul.f32 %v839, %v994
      %v1064 = vmul.f32 %v840, %v999
      %v1065 = vmul.f32 %v841, %v1004
      %v1066 = vmul.f32 %v842, %v1009
      %v1067 = vmul.f32 %v843, %v1014
      %v1068 = vmul.f32 %v844, %v1019
      %v1069 = vmul.f32 %v845, %v1024
      %v1070 = vmul.f32 %v846, %v1029
      %v1071 = vmul.f32 %v847, %v1034
      %v1072 = vmul.f32 %v848, %v1039
      %1073 = vst [vmem:[%s192] sm:$0xff] %v1041
      %1074 = vst [vmem:[%s192 + $0x8] sm:$0xff] %v1042
      %1075 = vst [vmem:[%s192 + $0x10] sm:$0xff] %v1043
      %1076 = vst [vmem:[%s192 + $0x18] sm:$0xff] %v1044
      %1077 = vst [vmem:[%s192 + $0x20] sm:$0xff] %v1045
      %1078 = vst [vmem:[%s192 + $0x28] sm:$0xff] %v1046
      %1079 = vst [vmem:[%s192 + $0x30] sm:$0xff] %v1047
      %1080 = vst [vmem:[%s192 + $0x38] sm:$0xff] %v1048
      %1081 = vst [vmem:[%s192 + $0x40] sm:$0xff] %v1049
      %1082 = vst [vmem:[%s192 + $0x48] sm:$0xff] %v1050
      %1083 = vst [vmem:[%s192 + $0x50] sm:$0xff] %v1051
      %1084 = vst [vmem:[%s192 + $0x58] sm:$0xff] %v1052
      %1085 = vst [vmem:[%s192 + $0x60] sm:$0xff] %v1053
      %1086 = vst [vmem:[%s192 + $0x68] sm:$0xff] %v1054
      %1087 = vst [vmem:[%s192 + $0x70] sm:$0xff] %v1055
      %1088 = vst [vmem:[%s192 + $0x78] sm:$0xff] %v1056
      %1089 = vst [vmem:[%s192 + $0x80] sm:$0xff] %v1057
      %1090 = vst [vmem:[%s192 + $0x88] sm:$0xff] %v1058
      %1091 = vst [vmem:[%s192 + $0x90] sm:$0xff] %v1059
      %1092 = vst [vmem:[%s192 + $0x98] sm:$0xff] %v1060
      %1093 = vst [vmem:[%s192 + $0xa0] sm:$0xff] %v1061
      %1094 = vst [vmem:[%s192 + $0xa8] sm:$0xff] %v1062
      %1095 = vst [vmem:[%s192 + $0xb0] sm:$0xff] %v1063
      %1096 = vst [vmem:[%s192 + $0xb8] sm:$0xff] %v1064
      %1097 = vst [vmem:[%s192 + $0xc0] sm:$0xff] %v1065
      %1098 = vst [vmem:[%s192 + $0xc8] sm:$0xff] %v1066
      %1099 = vst [vmem:[%s192 + $0xd0] sm:$0xff] %v1067
      %1100 = vst [vmem:[%s192 + $0xd8] sm:$0xff] %v1068
      %1101 = vst [vmem:[%s192 + $0xe0] sm:$0xff] %v1069
      %1102 = vst [vmem:[%s192 + $0xe8] sm:$0xff] %v1070
      %1103 = vst [vmem:[%s192 + $0xf0] sm:$0xff] %v1071
      %1104 = vst [vmem:[%s192 + $0xf8] sm:$0xff] %v1072
      %v1105 = vld [vmem:[#allocation2] sm:$0x1]
      %v1106 = vadd.f32 %v1041, %v1042
      %v1107 = vadd.f32 %v1106, %v1043
      %v1108 = vadd.f32 %v1107, %v1044
      %v1109 = vadd.f32 %v1108, %v1045
      %v1110 = vadd.f32 %v1109, %v1046
      %v1111 = vadd.f32 %v1110, %v1047
      %v1112 = vadd.f32 %v1111, %v1048
      %v1113 = vadd.f32 %v1112, %v1049
      %v1114 = vadd.f32 %v1113, %v1050
      %v1115 = vadd.f32 %v1114, %v1051
      %v1116 = vadd.f32 %v1115, %v1052
      %v1117 = vadd.f32 %v1116, %v1053
      %v1118 = vadd.f32 %v1117, %v1054
      %v1119 = vadd.f32 %v1118, %v1055
      %v1120 = vadd.f32 %v1119, %v1056
      %v1121 = vadd.f32 %v1120, %v1057
      %v1122 = vadd.f32 %v1121, %v1058
      %v1123 = vadd.f32 %v1122, %v1059
      %v1124 = vadd.f32 %v1123, %v1060
      %v1125 = vadd.f32 %v1124, %v1061
      %v1126 = vadd.f32 %v1125, %v1062
      %v1127 = vadd.f32 %v1126, %v1063
      %v1128 = vadd.f32 %v1127, %v1064
      %v1129 = vadd.f32 %v1128, %v1065
      %v1130 = vadd.f32 %v1129, %v1066
      %v1131 = vadd.f32 %v1130, %v1067
      %v1132 = vadd.f32 %v1131, %v1068
      %v1133 = vadd.f32 %v1132, %v1069
      %v1134 = vadd.f32 %v1133, %v1070
      %v1135 = vadd.f32 %v1134, %v1071
      %v1136 = vadd.f32 %v1135, %v1072
      %v1137 = vrot.slane %v1136, 4
      %v1138 = vadd.f32 %v1136, %v1137
      %v1139 = vrot.slane %v1138, 2
      %v1140 = vadd.f32 %v1138, %v1139
      %v1141 = vrot.slane %v1140, 1
      %v1142 = vadd.f32 %v1140, %v1141
      %v1143 = vadd.f32 %v1105, %v1142
      %1144 = vst [vmem:[#allocation2] sm:$0x1] %v1143
      %v1145 = vld [vmem:[#allocation3] sm:$0x1]
      %v1146 = vmul.f32 %v1041, %v1041
      %v1147 = vmul.f32 %v1042, %v1042
      %v1148 = vmul.f32 %v1043, %v1043
      %v1149 = vmul.f32 %v1044, %v1044
      %v1150 = vmul.f32 %v1045, %v1045
      %v1151 = vmul.f32 %v1046, %v1046
      %v1152 = vmul.f32 %v1047, %v1047
      %v1153 = vmul.f32 %v1048, %v1048
      %v1154 = vmul.f32 %v1049, %v1049
      %v1155 = vmul.f32 %v1050, %v1050
      %v1156 = vmul.f32 %v1051, %v1051
      %v1157 = vmul.f32 %v1052, %v1052
      %v1158 = vmul.f32 %v1053, %v1053
      %v1159 = vmul.f32 %v1054, %v1054
      %v1160 = vmul.f32 %v1055, %v1055
      %v1161 = vmul.f32 %v1056, %v1056
      %v1162 = vmul.f32 %v1057, %v1057
      %v1163 = vmul.f32 %v1058, %v1058
      %v1164 = vmul.f32 %v1059, %v1059
      %v1165 = vmul.f32 %v1060, %v1060
      %v1166 = vmul.f32 %v1061, %v1061
      %v1167 = vmul.f32 %v1062, %v1062
      %v1168 = vmul.f32 %v1063, %v1063
      %v1169 = vmul.f32 %v1064, %v1064
      %v1170 = vmul.f32 %v1065, %v1065
      %v1171 = vmul.f32 %v1066, %v1066
      %v1172 = vmul.f32 %v1067, %v1067
      %v1173 = vmul.f32 %v1068, %v1068
      %v1174 = vmul.f32 %v1069, %v1069
      %v1175 = vmul.f32 %v1070, %v1070
      %v1176 = vmul.f32 %v1071, %v1071
      %v1177 = vmul.f32 %v1072, %v1072
      %v1178 = vadd.f32 %v1146, %v1147
      %v1179 = vadd.f32 %v1178, %v1148
      %v1180 = vadd.f32 %v1179, %v1149
      %v1181 = vadd.f32 %v1180, %v1150
      %v1182 = vadd.f32 %v1181, %v1151
      %v1183 = vadd.f32 %v1182, %v1152
      %v1184 = vadd.f32 %v1183, %v1153
      %v1185 = vadd.f32 %v1184, %v1154
      %v1186 = vadd.f32 %v1185, %v1155
      %v1187 = vadd.f32 %v1186, %v1156
      %v1188 = vadd.f32 %v1187, %v1157
      %v1189 = vadd.f32 %v1188, %v1158
      %v1190 = vadd.f32 %v1189, %v1159
      %v1191 = vadd.f32 %v1190, %v1160
      %v1192 = vadd.f32 %v1191, %v1161
      %v1193 = vadd.f32 %v1192, %v1162
      %v1194 = vadd.f32 %v1193, %v1163
      %v1195 = vadd.f32 %v1194, %v1164
      %v1196 = vadd.f32 %v1195, %v1165
      %v1197 = vadd.f32 %v1196, %v1166
      %v1198 = vadd.f32 %v1197, %v1167
      %v1199 = vadd.f32 %v1198, %v1168
      %v1200 = vadd.f32 %v1199, %v1169
      %v1201 = vadd.f32 %v1200, %v1170
      %v1202 = vadd.f32 %v1201, %v1171
      %v1203 = vadd.f32 %v1202, %v1172
      %v1204 = vadd.f32 %v1203, %v1173
      %v1205 = vadd.f32 %v1204, %v1174
      %v1206 = vadd.f32 %v1205, %v1175
      %v1207 = vadd.f32 %v1206, %v1176
      %v1208 = vadd.f32 %v1207, %v1177
      %v1209 = vrot.slane %v1208, 4
      %v1210 = vadd.f32 %v1208, %v1209
      %v1211 = vrot.slane %v1210, 2
      %v1212 = vadd.f32 %v1210, %v1211
      %v1213 = vrot.slane %v1212, 1
      %v1214 = vadd.f32 %v1212, %v1213
      %v1215 = vadd.f32 %v1145, %v1214
      %1216 = vst [vmem:[#allocation3] sm:$0x1] %v1215
      %p1217 = scmp.eq.s32.totalorder %s16, 1
      // Predicated region
      $region33: #{inception_forward.8} parent=27 // pred_check
        %p1218 = pneg %p1217
      $region34: #{inception_forward.8} parent=27 // pred_check_branch
        %1220 = sbr.rel (%p1218) target = $region36
      $region35: #{inception_forward.8} parent=27 // pred_region
        %v1221 = vld [vmem:[#allocation2] sm:$0x1]
        %1222 = vst [vmem:[%s3] sm:$0x1] %v1221
        %v1223 = vld [vmem:[#allocation3] sm:$0x1]
        %1224 = vst [vmem:[%s4] sm:$0x1] %v1223
      $region36: #{inception_forward.8} parent=27 // pred_fallthru
        _
      %p1225 = scmp.lt.s32.totalorder %s16, 1
      %s1226 = scalar_select %p1225, %s16, 1
      %s1227 = smul.addr %s1226, 32
      %s1228 = smul.addr %s1227, 8
      %s1229 = scalar_lea.vmem %s2, %s1228
      // Predicated region
      $region37: #{inception_forward.8} parent=27 // pred_check
        %p1230 = pneg %p81
      $region38: #{inception_forward.8} parent=27 // pred_check_branch
        %1232 = sbr.rel (%p1230) target = $region40
      $region39: #{inception_forward.8} parent=27 // pred_region
        _
      $region40: #{inception_forward.8} parent=27 // pred_fallthru
        _
      // Predicated region
      $region41: #{inception_forward.8} parent=27 // pred_check
        %p1233 = pneg %p102
      $region42: #{inception_forward.8} parent=27 // pred_check_branch
        %1235 = sbr.rel (%p1233) target = $region44
      $region43: #{inception_forward.8} parent=27 // pred_region
        _
      $region44: #{inception_forward.8} parent=27 // pred_fallthru
        _
      // Predicated region
      $region45: #{inception_forward.8} parent=27 // pred_check
        %p1236 = pneg %p123
      $region46: #{inception_forward.8} parent=27 // pred_check_branch
        %1238 = sbr.rel (%p1236) target = $region48
      $region47: #{inception_forward.8} parent=27 // pred_region
        _
      $region48: #{inception_forward.8} parent=27 // pred_fallthru
        _
      // Predicated region
      $region49: #{inception_forward.8} parent=27 // pred_check
        %p1239 = pneg %p102
      $region50: #{inception_forward.8} parent=27 // pred_check_branch
        %1241 = sbr.rel (%p1239) target = $region52
      $region51: #{inception_forward.8} parent=27 // pred_region
        _
      $region52: #{inception_forward.8} parent=27 // pred_fallthru
        _
      // Predicated region
      $region53: #{inception_forward.8} parent=27 // pred_check
        %p1242 = pneg %p123
      $region54: #{inception_forward.8} parent=27 // pred_check_branch
        %1244 = sbr.rel (%p1242) target = $region56
      $region55: #{inception_forward.8} parent=27 // pred_region
        _
      $region56: #{inception_forward.8} parent=27 // pred_fallthru
        _
    $region28: #{inception_forward.8} parent=5 // pred_fallthru
      _
    %p1245 = scmp.le.s32.totalorder 2, %s11
    // Predicated region
    $region57: #{inception_forward.8} parent=5 // pred_check
      %p1246 = pneg %p1245
    $region58: #{inception_forward.8} parent=5 // pred_check_branch
      %1248 = sbr.rel (%p1246) target = $region60
    $region59: #{inception_forward.8} parent=5 // pred_region
      %s1249 = ssub.s32 %s11, 2
      // Predicated region
      $region61: #{inception_forward.8} parent=59 // pred_check
        %p1250 = pneg %p87
      $region62: #{inception_forward.8} parent=59 // pred_check_branch
        %1252 = sbr.rel (%p1250) target = $region64
      $region63: #{inception_forward.8} parent=59 // pred_region
        %p1253 = scmp.lt.s32.totalorder %s17, 1
        %s1254 = scalar_select %p1253, %s17, 1
        %s1255 = smul.addr %s1254, 32
        %s1256 = smul.addr %s1255, 8
        %s1257 = scalar_lea.vmem %s2, %s1256
      $region64: #{inception_forward.8} parent=59 // pred_fallthru
        _
    $region60: #{inception_forward.8} parent=5 // pred_fallthru
      _
  $region6: #{inception_forward.8} parent=0 // loop_footer
    %s15 = sadd.s32 1, %s11
  $region7: #{inception_forward.8} parent=0 // loop_footer_branch
    %10 = sbr.rel target = $region3
  $region8: #{inception_forward.8} parent=0 // loop_exit
    _

// kernel: inception_forward.9
$region0: #{inception_forward.9}
  #allocation0 [shape = 'u32[]', space=smem, size = 0x4, offset = 0x4, fixed_abs, tag = 'smem constant byte address 0x4 - core index']
  #allocation1 [shape = 'u32[144,128]{1,0:T(1,128)}', space=vmem, size = 0x12000, scoped, tag = 'internal scratch']
  %s0 = inlined_call_operand.vmem [shape: f32[512,128], index: 0, kind: input, shape index: {}]
  %s1 = inlined_call_operand.vmem [shape: f32[512,128], index: 1, kind: input, shape index: {}]
  %s2 = inlined_call_operand.vmem [shape: f32[1,128], index: 2, kind: input, shape index: {}]
  %s3 = inlined_call_operand.vmem [shape: f32[1,128], index: 3, kind: input, shape index: {}]
  %s4 = inlined_call_operand.vmem [shape: f32[1,128], index: 4, kind: input, shape index: {}]
  %s5 = inlined_call_operand.vmem [shape: f32[1,128], index: 5, kind: input, shape index: {}]
  %s6 = inlined_call_operand.vmem [shape: f32[1,128], index: 6, kind: input, shape index: {}]
  %s7 = inlined_call_operand.vmem [shape: f32[1,128], index: 7, kind: input, shape index: {}]
  %s8 = inlined_call_operand.vmem [shape: f32[512,128], index: 8, kind: output, shape index: {}]
  %s9 = sld [smem:[#allocation0]]
  $region65: #{inception_forward.9} parent=0
    _
  %s11 = ssub.s32 1, %s9
  %s12 = scalar_select 0, %s11, %s9
  loop: start=0, step=1, limit=4
  $region2: #{inception_forward.9} parent=0 // loop_pre_header
    _
  $region3: #{inception_forward.9} parent=0 // loop_header
    %s14 = sphi 0, %s18
    %p15 = scmp.ge.s32.totalorder %s14, 4
    %s24 = sphi 0, %s26
    %s27 = sphi 0, %s24
    %s28 = sphi 0, %s27
    %s44 = sphi 0, %s28
    %s50 = sphi 0, %s52
    %s53 = sphi 0, %s50
    %s54 = sphi 0, %s53
    %s70 = sphi 0, %s54
    %s74 = sphi 0, %s74
    %s76 = sphi 0, %s74
    %s77 = sphi 0, %s76
    %s91 = sphi 0, %s77
    %s95 = sphi 0, %s95
    %s97 = sphi 0, %s95
    %s98 = sphi 0, %s97
    %s112 = sphi 0, %s98
    %s116 = sphi 0, %s116
    %s118 = sphi 0, %s116
    %s119 = sphi 0, %s118
    %s133 = sphi 0, %s119
    %s137 = sphi 0, %s137
    %s139 = sphi 0, %s137
    %s140 = sphi 0, %s139
    %s154 = sphi 0, %s140
    %s158 = sphi 0, %s158
    %s160 = sphi 0, %s158
    %s161 = sphi 0, %s160
    %s175 = sphi 0, %s161
    %s179 = sphi 0, %s179
    %s181 = sphi 0, %s179
    %s182 = sphi 0, %s181
    %s196 = sphi 0, %s182
    %s202 = sphi 0, %s204
    %s205 = sphi 0, %s202
    %s206 = sphi 0, %s205
    %s222 = sphi 0, %s206
  $region4: #{inception_forward.9} parent=0 // loop_header_branch
    %17 = sbr.rel (%p15) target = $region8
  $region5: #{inception_forward.9} parent=0 // loop_body
    %s19 = ssub.s32 %s14, 1
    %s20 = ssub.s32 %s14, 2
    %s21 = sadd.s32 %s14, 1
    %s22 = ssub.s32 %s14, %s21
    %p23 = scmp.eq.s32.totalorder %s22, 0
    %s25 = sadd.s32 %s24, 1
    %s26 = scalar_select %p23, %s24, %s25
    %p29 = pneg %p23
    %p30 = scmp.eq.s32.totalorder %s14, 1
    %p31 = por %p29, %p30
    %p32 = scmp.ne.s32.totalorder %s24, %s27
    %p33 = scmp.eq.s32.totalorder %s14, 0
    %p34 = por %p32, %p33
    %p35 = scmp.ne.s32.totalorder %s24, %s27
    %p36 = scmp.eq.s32.totalorder %s19, 1
    %p37 = por %p35, %p36
    %p38 = scmp.ne.s32.totalorder %s27, %s28
    %p39 = scmp.eq.s32.totalorder %s19, 0
    %p40 = por %p38, %p39
    %p41 = scmp.ne.s32.totalorder %s27, %s28
    %p42 = scmp.eq.s32.totalorder %s20, 1
    %p43 = por %p41, %p42
    %p45 = scmp.ne.s32.totalorder %s28, %s44
    %p46 = scmp.eq.s32.totalorder %s20, 0
    %p47 = por %p45, %p46
    %s48 = ssub.s32 %s14, %s21
    %p49 = scmp.eq.s32.totalorder %s48, 0
    %s51 = sadd.s32 %s50, 1
    %s52 = scalar_select %p49, %s50, %s51
    %p55 = pneg %p49
    %p56 = scmp.eq.s32.totalorder %s14, 1
    %p57 = por %p55, %p56
    %p58 = scmp.ne.s32.totalorder %s50, %s53
    %p59 = scmp.eq.s32.totalorder %s14, 0
    %p60 = por %p58, %p59
    %p61 = scmp.ne.s32.totalorder %s50, %s53
    %p62 = scmp.eq.s32.totalorder %s19, 1
    %p63 = por %p61, %p62
    %p64 = scmp.ne.s32.totalorder %s53, %s54
    %p65 = scmp.eq.s32.totalorder %s19, 0
    %p66 = por %p64, %p65
    %p67 = scmp.ne.s32.totalorder %s53, %s54
    %p68 = scmp.eq.s32.totalorder %s20, 1
    %p69 = por %p67, %p68
    %p71 = scmp.ne.s32.totalorder %s54, %s70
    %p72 = scmp.eq.s32.totalorder %s20, 0
    %p73 = por %p71, %p72
    %s75 = sadd.s32 %s74, 1
    %p78 = scmp.eq.s32.totalorder %s14, 1
    %p79 = scmp.ne.s32.totalorder %s74, %s76
    %p80 = scmp.eq.s32.totalorder %s14, 0
    %p81 = por %p79, %p80
    %p82 = scmp.ne.s32.totalorder %s74, %s76
    %p83 = scmp.eq.s32.totalorder %s19, 1
    %p84 = por %p82, %p83
    %p85 = scmp.ne.s32.totalorder %s76, %s77
    %p86 = scmp.eq.s32.totalorder %s19, 0
    %p87 = por %p85, %p86
    %p88 = scmp.ne.s32.totalorder %s76, %s77
    %p89 = scmp.eq.s32.totalorder %s20, 1
    %p90 = por %p88, %p89
    %p92 = scmp.ne.s32.totalorder %s77, %s91
    %p93 = scmp.eq.s32.totalorder %s20, 0
    %p94 = por %p92, %p93
    %s96 = sadd.s32 %s95, 1
    %p99 = scmp.eq.s32.totalorder %s14, 1
    %p100 = scmp.ne.s32.totalorder %s95, %s97
    %p101 = scmp.eq.s32.totalorder %s14, 0
    %p102 = por %p100, %p101
    %p103 = scmp.ne.s32.totalorder %s95, %s97
    %p104 = scmp.eq.s32.totalorder %s19, 1
    %p105 = por %p103, %p104
    %p106 = scmp.ne.s32.totalorder %s97, %s98
    %p107 = scmp.eq.s32.totalorder %s19, 0
    %p108 = por %p106, %p107
    %p109 = scmp.ne.s32.totalorder %s97, %s98
    %p110 = scmp.eq.s32.totalorder %s20, 1
    %p111 = por %p109, %p110
    %p113 = scmp.ne.s32.totalorder %s98, %s112
    %p114 = scmp.eq.s32.totalorder %s20, 0
    %p115 = por %p113, %p114
    %s117 = sadd.s32 %s116, 1
    %p120 = scmp.eq.s32.totalorder %s14, 1
    %p121 = scmp.ne.s32.totalorder %s116, %s118
    %p122 = scmp.eq.s32.totalorder %s14, 0
    %p123 = por %p121, %p122
    %p124 = scmp.ne.s32.totalorder %s116, %s118
    %p125 = scmp.eq.s32.totalorder %s19, 1
    %p126 = por %p124, %p125
    %p127 = scmp.ne.s32.totalorder %s118, %s119
    %p128 = scmp.eq.s32.totalorder %s19, 0
    %p129 = por %p127, %p128
    %p130 = scmp.ne.s32.totalorder %s118, %s119
    %p131 = scmp.eq.s32.totalorder %s20, 1
    %p132 = por %p130, %p131
    %p134 = scmp.ne.s32.totalorder %s119, %s133
    %p135 = scmp.eq.s32.totalorder %s20, 0
    %p136 = por %p134, %p135
    %s138 = sadd.s32 %s137, 1
    %p141 = scmp.eq.s32.totalorder %s14, 1
    %p142 = scmp.ne.s32.totalorder %s137, %s139
    %p143 = scmp.eq.s32.totalorder %s14, 0
    %p144 = por %p142, %p143
    %p145 = scmp.ne.s32.totalorder %s137, %s139
    %p146 = scmp.eq.s32.totalorder %s19, 1
    %p147 = por %p145, %p146
    %p148 = scmp.ne.s32.totalorder %s139, %s140
    %p149 = scmp.eq.s32.totalorder %s19, 0
    %p150 = por %p148, %p149
    %p151 = scmp.ne.s32.totalorder %s139, %s140
    %p152 = scmp.eq.s32.totalorder %s20, 1
    %p153 = por %p151, %p152
    %p155 = scmp.ne.s32.totalorder %s140, %s154
    %p156 = scmp.eq.s32.totalorder %s20, 0
    %p157 = por %p155, %p156
    %s159 = sadd.s32 %s158, 1
    %p162 = scmp.eq.s32.totalorder %s14, 1
    %p163 = scmp.ne.s32.totalorder %s158, %s160
    %p164 = scmp.eq.s32.totalorder %s14, 0
    %p165 = por %p163, %p164
    %p166 = scmp.ne.s32.totalorder %s158, %s160
    %p167 = scmp.eq.s32.totalorder %s19, 1
    %p168 = por %p166, %p167
    %p169 = scmp.ne.s32.totalorder %s160, %s161
    %p170 = scmp.eq.s32.totalorder %s19, 0
    %p171 = por %p169, %p170
    %p172 = scmp.ne.s32.totalorder %s160, %s161
    %p173 = scmp.eq.s32.totalorder %s20, 1
    %p174 = por %p172, %p173
    %p176 = scmp.ne.s32.totalorder %s161, %s175
    %p177 = scmp.eq.s32.totalorder %s20, 0
    %p178 = por %p176, %p177
    %s180 = sadd.s32 %s179, 1
    %p183 = scmp.eq.s32.totalorder %s14, 1
    %p184 = scmp.ne.s32.totalorder %s179, %s181
    %p185 = scmp.eq.s32.totalorder %s14, 0
    %p186 = por %p184, %p185
    %p187 = scmp.ne.s32.totalorder %s179, %s181
    %p188 = scmp.eq.s32.totalorder %s19, 1
    %p189 = por %p187, %p188
    %p190 = scmp.ne.s32.totalorder %s181, %s182
    %p191 = scmp.eq.s32.totalorder %s19, 0
    %p192 = por %p190, %p191
    %p193 = scmp.ne.s32.totalorder %s181, %s182
    %p194 = scmp.eq.s32.totalorder %s20, 1
    %p195 = por %p193, %p194
    %p197 = scmp.ne.s32.totalorder %s182, %s196
    %p198 = scmp.eq.s32.totalorder %s20, 0
    %p199 = por %p197, %p198
    %s200 = ssub.s32 %s14, %s21
    %p201 = scmp.eq.s32.totalorder %s200, 0
    %s203 = sadd.s32 %s202, 1
    %s204 = scalar_select %p201, %s202, %s203
    %p207 = pneg %p201
    %p208 = scmp.eq.s32.totalorder %s14, 1
    %p209 = por %p207, %p208
    %p210 = scmp.ne.s32.totalorder %s202, %s205
    %p211 = scmp.eq.s32.totalorder %s14, 0
    %p212 = por %p210, %p211
    %p213 = scmp.ne.s32.totalorder %s202, %s205
    %p214 = scmp.eq.s32.totalorder %s19, 1
    %p215 = por %p213, %p214
    %p216 = scmp.ne.s32.totalorder %s205, %s206
    %p217 = scmp.eq.s32.totalorder %s19, 0
    %p218 = por %p216, %p217
    %p219 = scmp.ne.s32.totalorder %s205, %s206
    %p220 = scmp.eq.s32.totalorder %s20, 1
    %p221 = por %p219, %p220
    %p223 = scmp.ne.s32.totalorder %s206, %s222
    %p224 = scmp.eq.s32.totalorder %s20, 0
    %p225 = por %p223, %p224
    %p226 = scmp.le.s32.totalorder 1, %s14
    %p227 = scmp.lt.s32.totalorder %s14, 3
    %p228 = pnand %p226, %p227
    %p229 = pneg %p228
    // Predicated region
    $region9: #{inception_forward.9} parent=5 // pred_check
      _
    $region10: #{inception_forward.9} parent=5 // pred_check_branch
      %231 = sbr.rel (%p228) target = $region12
    $region11: #{inception_forward.9} parent=5 // pred_region
      %s232 = ssub.s32 %s14, 1
      // Predicated region
      $region13: #{inception_forward.9} parent=11 // pred_check
        %p233 = pneg %p87
      $region14: #{inception_forward.9} parent=11 // pred_check_branch
        %235 = sbr.rel (%p233) target = $region16
      $region15: #{inception_forward.9} parent=11 // pred_region
        _
      $region16: #{inception_forward.9} parent=11 // pred_fallthru
        _
      // Predicated region
      $region17: #{inception_forward.9} parent=11 // pred_check
        %p236 = pneg %p108
      $region18: #{inception_forward.9} parent=11 // pred_check_branch
        %238 = sbr.rel (%p236) target = $region20
      $region19: #{inception_forward.9} parent=11 // pred_region
        _
      $region20: #{inception_forward.9} parent=11 // pred_fallthru
        _
      // Predicated region
      $region21: #{inception_forward.9} parent=11 // pred_check
        %p239 = pneg %p129
      $region22: #{inception_forward.9} parent=11 // pred_check_branch
        %241 = sbr.rel (%p239) target = $region24
      $region23: #{inception_forward.9} parent=11 // pred_region
        _
      $region24: #{inception_forward.9} parent=11 // pred_fallthru
        _
      // Predicated region
      $region25: #{inception_forward.9} parent=11 // pred_check
        %p242 = pneg %p150
      $region26: #{inception_forward.9} parent=11 // pred_check_branch
        %244 = sbr.rel (%p242) target = $region28
      $region27: #{inception_forward.9} parent=11 // pred_region
        _
      $region28: #{inception_forward.9} parent=11 // pred_fallthru
        _
      // Predicated region
      $region29: #{inception_forward.9} parent=11 // pred_check
        %p245 = pneg %p171
      $region30: #{inception_forward.9} parent=11 // pred_check_branch
        %247 = sbr.rel (%p245) target = $region32
      $region31: #{inception_forward.9} parent=11 // pred_region
        _
      $region32: #{inception_forward.9} parent=11 // pred_fallthru
        _
      // Predicated region
      $region33: #{inception_forward.9} parent=11 // pred_check
        %p248 = pneg %p192
      $region34: #{inception_forward.9} parent=11 // pred_check_branch
        %250 = sbr.rel (%p248) target = $region36
      $region35: #{inception_forward.9} parent=11 // pred_region
        _
      $region36: #{inception_forward.9} parent=11 // pred_fallthru
        _
    $region12: #{inception_forward.9} parent=5 // pred_fallthru
      _
    %p251 = scmp.lt.s32.totalorder %s14, 2
    // Predicated region
    $region37: #{inception_forward.9} parent=5 // pred_check
      %p252 = pneg %p251
    $region38: #{inception_forward.9} parent=5 // pred_check_branch
      %254 = sbr.rel (%p252) target = $region40
    $region39: #{inception_forward.9} parent=5 // pred_region
      // Predicated region
      $region41: #{inception_forward.9} parent=39 // pred_check
        %p255 = pneg %p34
      $region42: #{inception_forward.9} parent=39 // pred_check_branch
        %257 = sbr.rel (%p255) target = $region44
      $region43: #{inception_forward.9} parent=39 // pred_region
        %s258 = smul.u32 32, %s14
        %p259 = scmp.lt.s32.totalorder %s258, 63
        %s260 = scalar_select %p259, %s258, 63
        %s261 = smul.addr %s260, 8
        %s262 = scalar_lea.vmem %s0, %s261
        %s263 = smul.u32 32, %s14
      $region44: #{inception_forward.9} parent=39 // pred_fallthru
        _
      // Predicated region
      $region45: #{inception_forward.9} parent=39 // pred_check
        %p264 = pneg %p60
      $region46: #{inception_forward.9} parent=39 // pred_check_branch
        %266 = sbr.rel (%p264) target = $region48
      $region47: #{inception_forward.9} parent=39 // pred_region
        %s267 = smul.u32 32, %s14
        %p268 = scmp.lt.s32.totalorder %s267, 63
        %s269 = scalar_select %p268, %s267, 63
        %s270 = smul.addr %s269, 8
        %s271 = scalar_lea.vmem %s1, %s270
        %s272 = smul.u32 32, %s14
      $region48: #{inception_forward.9} parent=39 // pred_fallthru
        _
    $region40: #{inception_forward.9} parent=5 // pred_fallthru
      _
    %p273 = scmp.le.s32.totalorder 1, %s14
    %p274 = scmp.lt.s32.totalorder %s14, 3
    %p275 = pnand %p273, %p274
    %p276 = pneg %p275
    // Predicated region
    $region49: #{inception_forward.9} parent=5 // pred_check
      _
    $region50: #{inception_forward.9} parent=5 // pred_check_branch
      %278 = sbr.rel (%p275) target = $region52
    $region51: #{inception_forward.9} parent=5 // pred_region
      %s279 = ssub.s32 %s14, 1
      %s280 = smul.u32 32, %s19
      %p281 = scmp.lt.s32.totalorder %s280, 63
      %s282 = scalar_select %p281, %s280, 63
      %s283 = smul.addr %s282, 8
      %s284 = scalar_lea.vmem %s0, %s283
      %p285 = pneg %p40
      %p286 = pneg %p37
      %s287 = smul.u32 32, %s19
      %p288 = scmp.lt.s32.totalorder %s287, 63
      %s289 = scalar_select %p288, %s287, 63
      %s290 = smul.addr %s289, 8
      %s291 = scalar_lea.vmem %s1, %s290
      %p292 = pneg %p66
      %p293 = pneg %p63
      %p294 = pneg %p87
      %p295 = pneg %p84
      %p296 = pneg %p108
      %p297 = pneg %p105
      %p298 = pneg %p129
      %p299 = pneg %p126
      %p300 = pneg %p150
      %p301 = pneg %p147
      %p302 = pneg %p171
      %p303 = pneg %p168
      %p304 = pneg %p192
      %p305 = pneg %p189
      %p306 = pneg %p218
      %p307 = pneg %p215
      %s308 = smul.u32 32, %s19
      %p309 = scmp.lt.s32.totalorder %s308, 63
      %s310 = scalar_select %p309, %s308, 63
      %s311 = smul.addr %s310, 8
      %s312 = scalar_lea.vmem %s8, %s311
      %s313 = smul.u32 32, %s19
      %p314 = scmp.lt.s32.totalorder %s313, 63
      %s315 = scalar_select %p314, %s313, 63
      %s316 = smul.addr %s315, 8
      %s317 = scalar_lea.vmem %s0, %s316
      %s318 = smul.u32 32, %s19
      %s319 = smul.u32 32, %s19
      %p320 = scmp.lt.s32.totalorder %s319, 63
      %s321 = scalar_select %p320, %s319, 63
      %s322 = smul.addr %s321, 8
      %s323 = scalar_lea.vmem %s1, %s322
      %s324 = smul.u32 32, %s19
      %s325 = smul.u32 32, %s19
      %p326 = scmp.lt.s32.totalorder %s325, 63
      %s327 = scalar_select %p326, %s325, 63
      %s328 = smul.addr %s327, 8
      %s329 = scalar_lea.vmem %s8, %s328
      %s330 = smul.u32 32, %s19
      %v331 = vlaneseq
      %v332 = vand.u32 %v331, 127
      %vm333 = vcmp.lt.s32.totalorder %v332, 8
      %v334 = vld [vmem:[%s4] sm:$0x1]
      %v335 = vld [vmem:[%s2] sm:$0x1]
      %v336 = vsel %vm333, %v334, %v335
      %v337 = vld [vmem:[%s5] sm:$0x1]
      %v338 = vld [vmem:[%s3] sm:$0x1]
      %v339 = vsel %vm333, %v337, %v338
      %v340 = vmul.f32 %v336, 0.001953125
      %v341 = vmul.f32 %v339, 0.001953125
      %v342 = vmul.f32 %v340, %v340
      %v343 = vsub.f32 %v341, %v342
      %v344 = vmax.f32 %v343, 0.0
      %v345 = vadd.f32 %v344, 1e-05
      %v346 = vrsqrt.pop %v345
      %v347 = vld [vmem:[%s6] sm:$0x1]
      %v348 = vmul.f32 %v346, %v347
      %v349 = vld [vmem:[%s323] sm:$0xff]
      %v350 = vld [vmem:[%s323 + $0x8] sm:$0xff]
      %v351 = vld [vmem:[%s323 + $0x10] sm:$0xff]
      %v352 = vld [vmem:[%s323 + $0x18] sm:$0xff]
      %v353 = vld [vmem:[%s323 + $0x20] sm:$0xff]
      %v354 = vld [vmem:[%s323 + $0x28] sm:$0xff]
      %v355 = vld [vmem:[%s323 + $0x30] sm:$0xff]
      %v356 = vld [vmem:[%s323 + $0x38] sm:$0xff]
      %v357 = vld [vmem:[%s323 + $0x40] sm:$0xff]
      %v358 = vld [vmem:[%s323 + $0x48] sm:$0xff]
      %v359 = vld [vmem:[%s323 + $0x50] sm:$0xff]
      %v360 = vld [vmem:[%s323 + $0x58] sm:$0xff]
      %v361 = vld [vmem:[%s323 + $0x60] sm:$0xff]
      %v362 = vld [vmem:[%s323 + $0x68] sm:$0xff]
      %v363 = vld [vmem:[%s323 + $0x70] sm:$0xff]
      %v364 = vld [vmem:[%s323 + $0x78] sm:$0xff]
      %v365 = vld [vmem:[%s323 + $0x80] sm:$0xff]
      %v366 = vld [vmem:[%s323 + $0x88] sm:$0xff]
      %v367 = vld [vmem:[%s323 + $0x90] sm:$0xff]
      %v368 = vld [vmem:[%s323 + $0x98] sm:$0xff]
      %v369 = vld [vmem:[%s323 + $0xa0] sm:$0xff]
      %v370 = vld [vmem:[%s323 + $0xa8] sm:$0xff]
      %v371 = vld [vmem:[%s323 + $0xb0] sm:$0xff]
      %v372 = vld [vmem:[%s323 + $0xb8] sm:$0xff]
      %v373 = vld [vmem:[%s323 + $0xc0] sm:$0xff]
      %v374 = vld [vmem:[%s323 + $0xc8] sm:$0xff]
      %v375 = vld [vmem:[%s323 + $0xd0] sm:$0xff]
      %v376 = vld [vmem:[%s323 + $0xd8] sm:$0xff]
      %v377 = vld [vmem:[%s323 + $0xe0] sm:$0xff]
      %v378 = vld [vmem:[%s323 + $0xe8] sm:$0xff]
      %v379 = vld [vmem:[%s323 + $0xf0] sm:$0xff]
      %v380 = vld [vmem:[%s323 + $0xf8] sm:$0xff]
      %v381 = vld [vmem:[%s317] sm:$0xff]
      %v382 = vld [vmem:[%s317 + $0x8] sm:$0xff]
      %v383 = vld [vmem:[%s317 + $0x10] sm:$0xff]
      %v384 = vld [vmem:[%s317 + $0x18] sm:$0xff]
      %v385 = vld [vmem:[%s317 + $0x20] sm:$0xff]
      %v386 = vld [vmem:[%s317 + $0x28] sm:$0xff]
      %v387 = vld [vmem:[%s317 + $0x30] sm:$0xff]
      %v388 = vld [vmem:[%s317 + $0x38] sm:$0xff]
      %v389 = vld [vmem:[%s317 + $0x40] sm:$0xff]
      %v390 = vld [vmem:[%s317 + $0x48] sm:$0xff]
      %v391 = vld [vmem:[%s317 + $0x50] sm:$0xff]
      %v392 = vld [vmem:[%s317 + $0x58] sm:$0xff]
      %v393 = vld [vmem:[%s317 + $0x60] sm:$0xff]
      %v394 = vld [vmem:[%s317 + $0x68] sm:$0xff]
      %v395 = vld [vmem:[%s317 + $0x70] sm:$0xff]
      %v396 = vld [vmem:[%s317 + $0x78] sm:$0xff]
      %v397 = vld [vmem:[%s317 + $0x80] sm:$0xff]
      %v398 = vld [vmem:[%s317 + $0x88] sm:$0xff]
      %v399 = vld [vmem:[%s317 + $0x90] sm:$0xff]
      %v400 = vld [vmem:[%s317 + $0x98] sm:$0xff]
      %v401 = vld [vmem:[%s317 + $0xa0] sm:$0xff]
      %v402 = vld [vmem:[%s317 + $0xa8] sm:$0xff]
      %v403 = vld [vmem:[%s317 + $0xb0] sm:$0xff]
      %v404 = vld [vmem:[%s317 + $0xb8] sm:$0xff]
      %v405 = vld [vmem:[%s317 + $0xc0] sm:$0xff]
      %v406 = vld [vmem:[%s317 + $0xc8] sm:$0xff]
      %v407 = vld [vmem:[%s317 + $0xd0] sm:$0xff]
      %v408 = vld [vmem:[%s317 + $0xd8] sm:$0xff]
      %v409 = vld [vmem:[%s317 + $0xe0] sm:$0xff]
      %v410 = vld [vmem:[%s317 + $0xe8] sm:$0xff]
      %v411 = vld [vmem:[%s317 + $0xf0] sm:$0xff]
      %v412 = vld [vmem:[%s317 + $0xf8] sm:$0xff]
      %v413 = vsel %vm333, 1, 0
      %vm414 = vcmp.eq.s32.totalorder %v413, 1
      %v415 = vsel %vm414, %v349, %v381
      %v416 = vsel %vm414, %v350, %v382
      %v417 = vsel %vm414, %v351, %v383
      %v418 = vsel %vm414, %v352, %v384
      %v419 = vsel %vm414, %v353, %v385
      %v420 = vsel %vm414, %v354, %v386
      %v421 = vsel %vm414, %v355, %v387
      %v422 = vsel %vm414, %v356, %v388
      %v423 = vsel %vm414, %v357, %v389
      %v424 = vsel %vm414, %v358, %v390
      %v425 = vsel %vm414, %v359, %v391
      %v426 = vsel %vm414, %v360, %v392
      %v427 = vsel %vm414, %v361, %v393
      %v428 = vsel %vm414, %v362, %v394
      %v429 = vsel %vm414, %v363, %v395
      %v430 = vsel %vm414, %v364, %v396
      %v431 = vsel %vm414, %v365, %v397
      %v432 = vsel %vm414, %v366, %v398
      %v433 = vsel %vm414, %v367, %v399
      %v434 = vsel %vm414, %v368, %v400
      %v435 = vsel %vm414, %v369, %v401
      %v436 = vsel %vm414, %v370, %v402
      %v437 = vsel %vm414, %v371, %v403
      %v438 = vsel %vm414, %v372, %v404
      %v439 = vsel %vm414, %v373, %v405
      %v440 = vsel %vm414, %v374, %v406
      %v441 = vsel %vm414, %v375, %v407
      %v442 = vsel %vm414, %v376, %v408
      %v443 = vsel %vm414, %v377, %v409
      %v444 = vsel %vm414, %v378, %v410
      %v445 = vsel %vm414, %v379, %v411
      %v446 = vsel %vm414, %v380, %v412
      %v447 = vlaneseq
      %v448 = vshrl.u32 %v447, 7
      %v449 = vsub.s32 0, %v448
      %v450 = vrot.slane %v340, %v449
      %v451 = vsub.f32 %v415, %v450
      %v452 = vsub.f32 %v416, %v450
      %v453 = vsub.f32 %v417, %v450
      %v454 = vsub.f32 %v418, %v450
      %v455 = vsub.f32 %v419, %v450
      %v456 = vsub.f32 %v420, %v450
      %v457 = vsub.f32 %v421, %v450
      %v458 = vsub.f32 %v422, %v450
      %v459 = vsub.f32 %v423, %v450
      %v460 = vsub.f32 %v424, %v450
      %v461 = vsub.f32 %v425, %v450
      %v462 = vsub.f32 %v426, %v450
      %v463 = vsub.f32 %v427, %v450
      %v464 = vsub.f32 %v428, %v450
      %v465 = vsub.f32 %v429, %v450
      %v466 = vsub.f32 %v430, %v450
      %v467 = vsub.f32 %v431, %v450
      %v468 = vsub.f32 %v432, %v450
      %v469 = vsub.f32 %v433, %v450
      %v470 = vsub.f32 %v434, %v450
      %v471 = vsub.f32 %v435, %v450
      %v472 = vsub.f32 %v436, %v450
      %v473 = vsub.f32 %v437, %v450
      %v474 = vsub.f32 %v438, %v450
      %v475 = vsub.f32 %v439, %v450
      %v476 = vsub.f32 %v440, %v450
      %v477 = vsub.f32 %v441, %v450
      %v478 = vsub.f32 %v442, %v450
      %v479 = vsub.f32 %v443, %v450
      %v480 = vsub.f32 %v444, %v450
      %v481 = vsub.f32 %v445, %v450
      %v482 = vsub.f32 %v446, %v450
      %v483 = vlaneseq
      %v484 = vshrl.u32 %v483, 7
      %v485 = vsub.s32 0, %v484
      %v486 = vrot.slane %v348, %v485
      %v487 = vmul.f32 %v451, %v486
      %v488 = vmul.f32 %v452, %v486
      %v489 = vmul.f32 %v453, %v486
      %v490 = vmul.f32 %v454, %v486
      %v491 = vmul.f32 %v455, %v486
      %v492 = vmul.f32 %v456, %v486
      %v493 = vmul.f32 %v457, %v486
      %v494 = vmul.f32 %v458, %v486
      %v495 = vmul.f32 %v459, %v486
      %v496 = vmul.f32 %v460, %v486
      %v497 = vmul.f32 %v461, %v486
      %v498 = vmul.f32 %v462, %v486
      %v499 = vmul.f32 %v463, %v486
      %v500 = vmul.f32 %v464, %v486
      %v501 = vmul.f32 %v465, %v486
      %v502 = vmul.f32 %v466, %v486
      %v503 = vmul.f32 %v467, %v486
      %v504 = vmul.f32 %v468, %v486
      %v505 = vmul.f32 %v469, %v486
      %v506 = vmul.f32 %v470, %v486
      %v507 = vmul.f32 %v471, %v486
      %v508 = vmul.f32 %v472, %v486
      %v509 = vmul.f32 %v473, %v486
      %v510 = vmul.f32 %v474, %v486
      %v511 = vmul.f32 %v475, %v486
      %v512 = vmul.f32 %v476, %v486
      %v513 = vmul.f32 %v477, %v486
      %v514 = vmul.f32 %v478, %v486
      %v515 = vmul.f32 %v479, %v486
      %v516 = vmul.f32 %v480, %v486
      %v517 = vmul.f32 %v481, %v486
      %v518 = vmul.f32 %v482, %v486
      %v519 = vld [vmem:[%s7] sm:$0x1]
      %v521 = vlaneseq
      %v522 = vshrl.u32 %v521, 7
      %v523 = vsub.s32 0, %v522
      %v524 = vrot.slane %v519, %v523
      %v526 = vadd.f32 %v487, %v524
      %v527 = vadd.f32 %v488, %v524
      %v528 = vadd.f32 %v489, %v524
      %v529 = vadd.f32 %v490, %v524
      %v530 = vadd.f32 %v491, %v524
      %v531 = vadd.f32 %v492, %v524
      %v532 = vadd.f32 %v493, %v524
      %v533 = vadd.f32 %v494, %v524
      %v534 = vadd.f32 %v495, %v524
      %v535 = vadd.f32 %v496, %v524
      %v536 = vadd.f32 %v497, %v524
      %v537 = vadd.f32 %v498, %v524
      %v538 = vadd.f32 %v499, %v524
      %v539 = vadd.f32 %v500, %v524
      %v540 = vadd.f32 %v501, %v524
      %v541 = vadd.f32 %v502, %v524
      %v542 = vadd.f32 %v503, %v524
      %v543 = vadd.f32 %v504, %v524
      %v544 = vadd.f32 %v505, %v524
      %v545 = vadd.f32 %v506, %v524
      %v546 = vadd.f32 %v507, %v524
      %v547 = vadd.f32 %v508, %v524
      %v548 = vadd.f32 %v509, %v524
      %v549 = vadd.f32 %v510, %v524
      %v550 = vadd.f32 %v511, %v524
      %v551 = vadd.f32 %v512, %v524
      %v552 = vadd.f32 %v513, %v524
      %v553 = vadd.f32 %v514, %v524
      %v554 = vadd.f32 %v515, %v524
      %v555 = vadd.f32 %v516, %v524
      %v556 = vadd.f32 %v517, %v524
      %v557 = vadd.f32 %v518, %v524
      %vm558 = vcmp.ge.f32.partialorder %v526, 0.0
      %vm559 = vcmp.ge.f32.partialorder %v527, 0.0
      %vm560 = vcmp.ge.f32.partialorder %v528, 0.0
      %vm561 = vcmp.ge.f32.partialorder %v529, 0.0
      %vm562 = vcmp.ge.f32.partialorder %v530, 0.0
      %vm563 = vcmp.ge.f32.partialorder %v531, 0.0
      %vm564 = vcmp.ge.f32.partialorder %v532, 0.0
      %vm565 = vcmp.ge.f32.partialorder %v533, 0.0
      %vm566 = vcmp.ge.f32.partialorder %v534, 0.0
      %vm567 = vcmp.ge.f32.partialorder %v535, 0.0
      %vm568 = vcmp.ge.f32.partialorder %v536, 0.0
      %vm569 = vcmp.ge.f32.partialorder %v537, 0.0
      %vm570 = vcmp.ge.f32.partialorder %v538, 0.0
      %vm571 = vcmp.ge.f32.partialorder %v539, 0.0
      %vm572 = vcmp.ge.f32.partialorder %v540, 0.0
      %vm573 = vcmp.ge.f32.partialorder %v541, 0.0
      %vm574 = vcmp.ge.f32.partialorder %v542, 0.0
      %vm575 = vcmp.ge.f32.partialorder %v543, 0.0
      %vm576 = vcmp.ge.f32.partialorder %v544, 0.0
      %vm577 = vcmp.ge.f32.partialorder %v545, 0.0
      %vm578 = vcmp.ge.f32.partialorder %v546, 0.0
      %vm579 = vcmp.ge.f32.partialorder %v547, 0.0
      %vm580 = vcmp.ge.f32.partialorder %v548, 0.0
      %vm581 = vcmp.ge.f32.partialorder %v549, 0.0
      %vm582 = vcmp.ge.f32.partialorder %v550, 0.0
      %vm583 = vcmp.ge.f32.partialorder %v551, 0.0
      %vm584 = vcmp.ge.f32.partialorder %v552, 0.0
      %vm585 = vcmp.ge.f32.partialorder %v553, 0.0
      %vm586 = vcmp.ge.f32.partialorder %v554, 0.0
      %vm587 = vcmp.ge.f32.partialorder %v555, 0.0
      %vm588 = vcmp.ge.f32.partialorder %v556, 0.0
      %vm589 = vcmp.ge.f32.partialorder %v557, 0.0
      %v590 = vmul.f32 %v526, 0.01
      %v591 = vmul.f32 %v527, 0.01
      %v592 = vmul.f32 %v528, 0.01
      %v593 = vmul.f32 %v529, 0.01
      %v594 = vmul.f32 %v530, 0.01
      %v595 = vmul.f32 %v531, 0.01
      %v596 = vmul.f32 %v532, 0.01
      %v597 = vmul.f32 %v533, 0.01
      %v598 = vmul.f32 %v534, 0.01
      %v599 = vmul.f32 %v535, 0.01
      %v600 = vmul.f32 %v536, 0.01
      %v601 = vmul.f32 %v537, 0.01
      %v602 = vmul.f32 %v538, 0.01
      %v603 = vmul.f32 %v539, 0.01
      %v604 = vmul.f32 %v540, 0.01
      %v605 = vmul.f32 %v541, 0.01
      %v606 = vmul.f32 %v542, 0.01
      %v607 = vmul.f32 %v543, 0.01
      %v608 = vmul.f32 %v544, 0.01
      %v609 = vmul.f32 %v545, 0.01
      %v610 = vmul.f32 %v546, 0.01
      %v611 = vmul.f32 %v547, 0.01
      %v612 = vmul.f32 %v548, 0.01
      %v613 = vmul.f32 %v549, 0.01
      %v614 = vmul.f32 %v550, 0.01
      %v615 = vmul.f32 %v551, 0.01
      %v616 = vmul.f32 %v552, 0.01
      %v617 = vmul.f32 %v553, 0.01
      %v618 = vmul.f32 %v554, 0.01
      %v619 = vmul.f32 %v555, 0.01
      %v620 = vmul.f32 %v556, 0.01
      %v621 = vmul.f32 %v557, 0.01
      %v622 = vsel %vm558, %v526, %v590
      %v623 = vsel %vm559, %v527, %v591
      %v624 = vsel %vm560, %v528, %v592
      %v625 = vsel %vm561, %v529, %v593
      %v626 = vsel %vm562, %v530, %v594
      %v627 = vsel %vm563, %v531, %v595
      %v628 = vsel %vm564, %v532, %v596
      %v629 = vsel %vm565, %v533, %v597
      %v630 = vsel %vm566, %v534, %v598
      %v631 = vsel %vm567, %v535, %v599
      %v632 = vsel %vm568, %v536, %v600
      %v633 = vsel %vm569, %v537, %v601
      %v634 = vsel %vm570, %v538, %v602
      %v635 = vsel %vm571, %v539, %v603
      %v636 = vsel %vm572, %v540, %v604
      %v637 = vsel %vm573, %v541, %v605
      %v638 = vsel %vm574, %v542, %v606
      %v639 = vsel %vm575, %v543, %v607
      %v640 = vsel %vm576, %v544, %v608
      %v641 = vsel %vm577, %v545, %v609
      %v642 = vsel %vm578, %v546, %v610
      %v643 = vsel %vm579, %v547, %v611
      %v644 = vsel %vm580, %v548, %v612
      %v645 = vsel %vm581, %v549, %v613
      %v646 = vsel %vm582, %v550, %v614
      %v647 = vsel %vm583, %v551, %v615
      %v648 = vsel %vm584, %v552, %v616
      %v649 = vsel %vm585, %v553, %v617
      %v650 = vsel %vm586, %v554, %v618
      %v651 = vsel %vm587, %v555, %v619
      %v652 = vsel %vm588, %v556, %v620
      %v653 = vsel %vm589, %v557, %v621
      %654 = vst [vmem:[%s329] sm:$0xff] %v622
      %655 = vst [vmem:[%s329 + $0x8] sm:$0xff] %v623
      %656 = vst [vmem:[%s329 + $0x10] sm:$0xff] %v624
      %657 = vst [vmem:[%s329 + $0x18] sm:$0xff] %v625
      %658 = vst [vmem:[%s329 + $0x20] sm:$0xff] %v626
      %659 = vst [vmem:[%s329 + $0x28] sm:$0xff] %v627
      %660 = vst [vmem:[%s329 + $0x30] sm:$0xff] %v628
      %661 = vst [vmem:[%s329 + $0x38] sm:$0xff] %v629
      %662 = vst [vmem:[%s329 + $0x40] sm:$0xff] %v630
      %663 = vst [vmem:[%s329 + $0x48] sm:$0xff] %v631
      %664 = vst [vmem:[%s329 + $0x50] sm:$0xff] %v632
      %665 = vst [vmem:[%s329 + $0x58] sm:$0xff] %v633
      %666 = vst [vmem:[%s329 + $0x60] sm:$0xff] %v634
      %667 = vst [vmem:[%s329 + $0x68] sm:$0xff] %v635
      %668 = vst [vmem:[%s329 + $0x70] sm:$0xff] %v636
      %669 = vst [vmem:[%s329 + $0x78] sm:$0xff] %v637
      %670 = vst [vmem:[%s329 + $0x80] sm:$0xff] %v638
      %671 = vst [vmem:[%s329 + $0x88] sm:$0xff] %v639
      %672 = vst [vmem:[%s329 + $0x90] sm:$0xff] %v640
      %673 = vst [vmem:[%s329 + $0x98] sm:$0xff] %v641
      %674 = vst [vmem:[%s329 + $0xa0] sm:$0xff] %v642
      %675 = vst [vmem:[%s329 + $0xa8] sm:$0xff] %v643
      %676 = vst [vmem:[%s329 + $0xb0] sm:$0xff] %v644
      %677 = vst [vmem:[%s329 + $0xb8] sm:$0xff] %v645
      %678 = vst [vmem:[%s329 + $0xc0] sm:$0xff] %v646
      %679 = vst [vmem:[%s329 + $0xc8] sm:$0xff] %v647
      %680 = vst [vmem:[%s329 + $0xd0] sm:$0xff] %v648
      %681 = vst [vmem:[%s329 + $0xd8] sm:$0xff] %v649
      %682 = vst [vmem:[%s329 + $0xe0] sm:$0xff] %v650
      %683 = vst [vmem:[%s329 + $0xe8] sm:$0xff] %v651
      %684 = vst [vmem:[%s329 + $0xf0] sm:$0xff] %v652
      %685 = vst [vmem:[%s329 + $0xf8] sm:$0xff] %v653
      %s686 = smul.u32 32, %s19
      %p687 = scmp.lt.s32.totalorder %s686, 63
      %s688 = scalar_select %p687, %s686, 63
      %s689 = smul.addr %s688, 8
      %s690 = scalar_lea.vmem %s8, %s689
      // Predicated region
      $region53: #{inception_forward.9} parent=51 // pred_check
        %p691 = pneg %p215
      $region54: #{inception_forward.9} parent=51 // pred_check_branch
        %693 = sbr.rel (%p691) target = $region56
      $region55: #{inception_forward.9} parent=51 // pred_region
        %s694 = smul.u32 32, %s19
      $region56: #{inception_forward.9} parent=51 // pred_fallthru
        _
    $region52: #{inception_forward.9} parent=5 // pred_fallthru
      _
    %p695 = scmp.le.s32.totalorder 2, %s14
    // Predicated region
    $region57: #{inception_forward.9} parent=5 // pred_check
      %p696 = pneg %p695
    $region58: #{inception_forward.9} parent=5 // pred_check_branch
      %698 = sbr.rel (%p696) target = $region60
    $region59: #{inception_forward.9} parent=5 // pred_region
      %s699 = ssub.s32 %s14, 2
      // Predicated region
      $region61: #{inception_forward.9} parent=59 // pred_check
        %p700 = pneg %p221
      $region62: #{inception_forward.9} parent=59 // pred_check_branch
        %702 = sbr.rel (%p700) target = $region64
      $region63: #{inception_forward.9} parent=59 // pred_region
        %s703 = smul.u32 32, %s20
        %p704 = scmp.lt.s32.totalorder %s703, 63
        %s705 = scalar_select %p704, %s703, 63
        %s706 = smul.addr %s705, 8
        %s707 = scalar_lea.vmem %s8, %s706
      $region64: #{inception_forward.9} parent=59 // pred_fallthru
        _
    $region60: #{inception_forward.9} parent=5 // pred_fallthru
      _
  $region6: #{inception_forward.9} parent=0 // loop_footer
    %s18 = sadd.s32 1, %s14
  $region7: #{inception_forward.9} parent=0 // loop_footer_branch
    %13 = sbr.rel target = $region3
  $region8: #{inception_forward.9} parent=0 // loop_exit
    _

// kernel: inception_forward.10
$region0: #{inception_forward.10}
  #allocation0 [shape = 'u32[]', space=smem, size = 0x4, offset = 0x4, fixed_abs, tag = 'smem constant byte address 0x4 - core index']
  #allocation1 [shape = 'u32[144,128]{1,0:T(1,128)}', space=vmem, size = 0x12000, scoped, tag = 'internal scratch']
  #allocation2 [shape = 'f32[1,128]{1,0:T(1,128)}', space=vmem, size = 0x200, scoped, tag = 'scratch operand']
  #allocation3 [shape = 'f32[1,128]{1,0:T(1,128)}', space=vmem, size = 0x200, scoped, tag = 'scratch operand']
  %s0 = inlined_call_operand.vmem [shape: bf16[512,256], index: 0, kind: input, shape index: {}]
  %s1 = inlined_call_operand.vmem [shape: bf16[256,128], index: 1, kind: input, shape index: {}]
  %s2 = inlined_call_operand.vmem [shape: f32[512,128], index: 2, kind: output, shape index: {0}]
  %s3 = inlined_call_operand.vmem [shape: f32[1,128], index: 3, kind: output, shape index: {1}]
  %s4 = inlined_call_operand.vmem [shape: f32[1,128], index: 4, kind: output, shape index: {2}]
  %5 = xla_tuple %s2, %s3, %s4
  %s6 = sld [smem:[#allocation0]]
  $region65: #{inception_forward.10} parent=0
    _
  %s8 = ssub.s32 1, %s6
  %s9 = scalar_select 0, %s8, %s6
  loop: start=0, step=1, limit=4
  $region2: #{inception_forward.10} parent=0 // loop_pre_header
    _
  $region3: #{inception_forward.10} parent=0 // loop_header
    %s11 = sphi 0, %s15
    %p12 = scmp.ge.s32.totalorder %s11, 4
    %s21 = sphi 0, %s23
    %s24 = sphi 0, %s21
    %s25 = sphi 0, %s24
    %s41 = sphi 0, %s25
    %s45 = sphi 0, %s45
    %s47 = sphi 0, %s45
    %s48 = sphi 0, %s47
    %s62 = sphi 0, %s48
    %s68 = sphi 0, %s70
    %s71 = sphi 0, %s68
    %s72 = sphi 0, %s71
    %s88 = sphi 0, %s72
    %s92 = sphi 0, %s92
    %s94 = sphi 0, %s92
    %s95 = sphi 0, %s94
    %s109 = sphi 0, %s95
    %s113 = sphi 0, %s113
    %s115 = sphi 0, %s113
    %s116 = sphi 0, %s115
    %s130 = sphi 0, %s116
  $region4: #{inception_forward.10} parent=0 // loop_header_branch
    %14 = sbr.rel (%p12) target = $region8
  $region5: #{inception_forward.10} parent=0 // loop_body
    %s16 = ssub.s32 %s11, 1
    %s17 = ssub.s32 %s11, 2
    %s18 = sadd.s32 %s11, 1
    %s19 = ssub.s32 %s11, %s18
    %p20 = scmp.eq.s32.totalorder %s19, 0
    %s22 = sadd.s32 %s21, 1
    %s23 = scalar_select %p20, %s21, %s22
    %p26 = pneg %p20
    %p27 = scmp.eq.s32.totalorder %s11, 1
    %p28 = por %p26, %p27
    %p29 = scmp.ne.s32.totalorder %s21, %s24
    %p30 = scmp.eq.s32.totalorder %s11, 0
    %p31 = por %p29, %p30
    %p32 = scmp.ne.s32.totalorder %s21, %s24
    %p33 = scmp.eq.s32.totalorder %s16, 1
    %p34 = por %p32, %p33
    %p35 = scmp.ne.s32.totalorder %s24, %s25
    %p36 = scmp.eq.s32.totalorder %s16, 0
    %p37 = por %p35, %p36
    %p38 = scmp.ne.s32.totalorder %s24, %s25
    %p39 = scmp.eq.s32.totalorder %s17, 1
    %p40 = por %p38, %p39
    %p42 = scmp.ne.s32.totalorder %s25, %s41
    %p43 = scmp.eq.s32.totalorder %s17, 0
    %p44 = por %p42, %p43
    %s46 = sadd.s32 %s45, 1
    %p49 = scmp.eq.s32.totalorder %s11, 1
    %p50 = scmp.ne.s32.totalorder %s45, %s47
    %p51 = scmp.eq.s32.totalorder %s11, 0
    %p52 = por %p50, %p51
    %p53 = scmp.ne.s32.totalorder %s45, %s47
    %p54 = scmp.eq.s32.totalorder %s16, 1
    %p55 = por %p53, %p54
    %p56 = scmp.ne.s32.totalorder %s47, %s48
    %p57 = scmp.eq.s32.totalorder %s16, 0
    %p58 = por %p56, %p57
    %p59 = scmp.ne.s32.totalorder %s47, %s48
    %p60 = scmp.eq.s32.totalorder %s17, 1
    %p61 = por %p59, %p60
    %p63 = scmp.ne.s32.totalorder %s48, %s62
    %p64 = scmp.eq.s32.totalorder %s17, 0
    %p65 = por %p63, %p64
    %s66 = ssub.s32 %s11, %s18
    %p67 = scmp.eq.s32.totalorder %s66, 0
    %s69 = sadd.s32 %s68, 1
    %s70 = scalar_select %p67, %s68, %s69
    %p73 = pneg %p67
    %p74 = scmp.eq.s32.totalorder %s11, 1
    %p75 = por %p73, %p74
    %p76 = scmp.ne.s32.totalorder %s68, %s71
    %p77 = scmp.eq.s32.totalorder %s11, 0
    %p78 = por %p76, %p77
    %p79 = scmp.ne.s32.totalorder %s68, %s71
    %p80 = scmp.eq.s32.totalorder %s16, 1
    %p81 = por %p79, %p80
    %p82 = scmp.ne.s32.totalorder %s71, %s72
    %p83 = scmp.eq.s32.totalorder %s16, 0
    %p84 = por %p82, %p83
    %p85 = scmp.ne.s32.totalorder %s71, %s72
    %p86 = scmp.eq.s32.totalorder %s17, 1
    %p87 = por %p85, %p86
    %p89 = scmp.ne.s32.totalorder %s72, %s88
    %p90 = scmp.eq.s32.totalorder %s17, 0
    %p91 = por %p89, %p90
    %s93 = sadd.s32 %s92, 1
    %p96 = scmp.eq.s32.totalorder %s11, 1
    %p97 = scmp.ne.s32.totalorder %s92, %s94
    %p98 = scmp.eq.s32.totalorder %s11, 0
    %p99 = por %p97, %p98
    %p100 = scmp.ne.s32.totalorder %s92, %s94
    %p101 = scmp.eq.s32.totalorder %s16, 1
    %p102 = por %p100, %p101
    %p103 = scmp.ne.s32.totalorder %s94, %s95
    %p104 = scmp.eq.s32.totalorder %s16, 0
    %p105 = por %p103, %p104
    %p106 = scmp.ne.s32.totalorder %s94, %s95
    %p107 = scmp.eq.s32.totalorder %s17, 1
    %p108 = por %p106, %p107
    %p110 = scmp.ne.s32.totalorder %s95, %s109
    %p111 = scmp.eq.s32.totalorder %s17, 0
    %p112 = por %p110, %p111
    %s114 = sadd.s32 %s113, 1
    %p117 = scmp.eq.s32.totalorder %s11, 1
    %p118 = scmp.ne.s32.totalorder %s113, %s115
    %p119 = scmp.eq.s32.totalorder %s11, 0
    %p120 = por %p118, %p119
    %p121 = scmp.ne.s32.totalorder %s113, %s115
    %p122 = scmp.eq.s32.totalorder %s16, 1
    %p123 = por %p121, %p122
    %p124 = scmp.ne.s32.totalorder %s115, %s116
    %p125 = scmp.eq.s32.totalorder %s16, 0
    %p126 = por %p124, %p125
    %p127 = scmp.ne.s32.totalorder %s115, %s116
    %p128 = scmp.eq.s32.totalorder %s17, 1
    %p129 = por %p127, %p128
    %p131 = scmp.ne.s32.totalorder %s116, %s130
    %p132 = scmp.eq.s32.totalorder %s17, 0
    %p133 = por %p131, %p132
    %p134 = scmp.le.s32.totalorder 1, %s11
    %p135 = scmp.lt.s32.totalorder %s11, 3
    %p136 = pnand %p134, %p135
    %p137 = pneg %p136
    // Predicated region
    $region9: #{inception_forward.10} parent=5 // pred_check
      _
    $region10: #{inception_forward.10} parent=5 // pred_check_branch
      %139 = sbr.rel (%p136) target = $region12
    $region11: #{inception_forward.10} parent=5 // pred_region
      %s140 = ssub.s32 %s11, 1
      // Predicated region
      $region13: #{inception_forward.10} parent=11 // pred_check
        %p141 = pneg %p58
      $region14: #{inception_forward.10} parent=11 // pred_check_branch
        %143 = sbr.rel (%p141) target = $region16
      $region15: #{inception_forward.10} parent=11 // pred_region
        _
      $region16: #{inception_forward.10} parent=11 // pred_fallthru
        _
    $region12: #{inception_forward.10} parent=5 // pred_fallthru
      _
    %p144 = scmp.lt.s32.totalorder %s11, 2
    // Predicated region
    $region17: #{inception_forward.10} parent=5 // pred_check
      %p145 = pneg %p144
    $region18: #{inception_forward.10} parent=5 // pred_check_branch
      %147 = sbr.rel (%p145) target = $region20
    $region19: #{inception_forward.10} parent=5 // pred_region
      // Predicated region
      $region21: #{inception_forward.10} parent=19 // pred_check
        %p148 = pneg %p31
      $region22: #{inception_forward.10} parent=19 // pred_check_branch
        %150 = sbr.rel (%p148) target = $region24
      $region23: #{inception_forward.10} parent=19 // pred_region
        %s151 = smul.u32 32, %s11
        %p152 = scmp.lt.s32.totalorder %s151, 63
        %s153 = scalar_select %p152, %s151, 63
        %s154 = smul.addr %s153, 2
        %s155 = smul.addr %s154, 4
        %s156 = scalar_lea.vmem %s0, %s155
        %s157 = smul.u32 32, %s11
      $region24: #{inception_forward.10} parent=19 // pred_fallthru
        _
    $region20: #{inception_forward.10} parent=5 // pred_fallthru
      _
    %p158 = scmp.le.s32.totalorder 1, %s11
    %p159 = scmp.lt.s32.totalorder %s11, 3
    %p160 = pnand %p158, %p159
    %p161 = pneg %p160
    // Predicated region
    $region25: #{inception_forward.10} parent=5 // pred_check
      _
    $region26: #{inception_forward.10} parent=5 // pred_check_branch
      %163 = sbr.rel (%p160) target = $region28
    $region27: #{inception_forward.10} parent=5 // pred_region
      %s164 = ssub.s32 %s11, 1
      %s165 = smul.u32 32, %s16
      %p166 = scmp.lt.s32.totalorder %s165, 63
      %s167 = scalar_select %p166, %s165, 63
      %s168 = smul.addr %s167, 2
      %s169 = smul.addr %s168, 4
      %s170 = scalar_lea.vmem %s0, %s169
      %p171 = pneg %p37
      %p172 = pneg %p34
      %p173 = pneg %p58
      %p174 = pneg %p55
      %p175 = pneg %p84
      %p176 = pneg %p81
      %s177 = smul.u32 32, %s16
      %p178 = scmp.lt.s32.totalorder %s177, 63
      %s179 = scalar_select %p178, %s177, 63
      %s180 = smul.addr %s179, 8
      %s181 = scalar_lea.vmem %s2, %s180
      %p182 = pneg %p105
      %p183 = pneg %p102
      %p184 = pneg %p126
      %p185 = pneg %p123
      %s186 = smul.u32 32, %s16
      %p187 = scmp.lt.s32.totalorder %s186, 63
      %s188 = scalar_select %p187, %s186, 63
      %s189 = smul.addr %s188, 2
      %s190 = smul.addr %s189, 4
      %s191 = scalar_lea.vmem %s0, %s190
      %s192 = smul.u32 32, %s16
      %s193 = smul.u32 32, %s16
      %p194 = scmp.lt.s32.totalorder %s193, 63
      %s195 = scalar_select %p194, %s193, 63
      %s196 = smul.addr %s195, 8
      %s197 = scalar_lea.vmem %s2, %s196
      %s198 = smul.u32 32, %s16
      %p200 = scmp.eq.s32.totalorder %s16, 0
      // Predicated region
      $region29: #{inception_forward.10} parent=27 // pred_check
        %p201 = pneg %p200
      $region30: #{inception_forward.10} parent=27 // pred_check_branch
        %203 = sbr.rel (%p201) target = $region32
      $region31: #{inception_forward.10} parent=27 // pred_region
        %204 = vst [vmem:[#allocation2] sm:$0x1] 0.0
        %205 = vst [vmem:[#allocation3] sm:$0x1] 0.0
      $region32: #{inception_forward.10} parent=27 // pred_fallthru
        _
      %v206 = vld [vmem:[%s191] sm:$0xff]
      %v207 = vld [vmem:[%s191 + $0x8] sm:$0xff]
      %v208 = vld [vmem:[%s191 + $0x10] sm:$0xff]
      %v209 = vld [vmem:[%s191 + $0x18] sm:$0xff]
      %v210 = vld [vmem:[%s191 + $0x20] sm:$0xff]
      %v211 = vld [vmem:[%s191 + $0x28] sm:$0xff]
      %v212 = vld [vmem:[%s191 + $0x30] sm:$0xff]
      %v213 = vld [vmem:[%s191 + $0x38] sm:$0xff]
      %v214 = vld [vmem:[%s191 + $0x40] sm:$0xff]
      %v215 = vld [vmem:[%s191 + $0x48] sm:$0xff]
      %v216 = vld [vmem:[%s191 + $0x50] sm:$0xff]
      %v217 = vld [vmem:[%s191 + $0x58] sm:$0xff]
      %v218 = vld [vmem:[%s191 + $0x60] sm:$0xff]
      %v219 = vld [vmem:[%s191 + $0x68] sm:$0xff]
      %v220 = vld [vmem:[%s191 + $0x70] sm:$0xff]
      %v221 = vld [vmem:[%s191 + $0x78] sm:$0xff]
      %v222 = vld [vmem:[%s191 + $0x80] sm:$0xff]
      %v223 = vld [vmem:[%s191 + $0x88] sm:$0xff]
      %v224 = vld [vmem:[%s191 + $0x90] sm:$0xff]
      %v225 = vld [vmem:[%s191 + $0x98] sm:$0xff]
      %v226 = vld [vmem:[%s191 + $0xa0] sm:$0xff]
      %v227 = vld [vmem:[%s191 + $0xa8] sm:$0xff]
      %v228 = vld [vmem:[%s191 + $0xb0] sm:$0xff]
      %v229 = vld [vmem:[%s191 + $0xb8] sm:$0xff]
      %v230 = vld [vmem:[%s191 + $0xc0] sm:$0xff]
      %v231 = vld [vmem:[%s191 + $0xc8] sm:$0xff]
      %v232 = vld [vmem:[%s191 + $0xd0] sm:$0xff]
      %v233 = vld [vmem:[%s191 + $0xd8] sm:$0xff]
      %v234 = vld [vmem:[%s191 + $0xe0] sm:$0xff]
      %v235 = vld [vmem:[%s191 + $0xe8] sm:$0xff]
      %v236 = vld [vmem:[%s191 + $0xf0] sm:$0xff]
      %v237 = vld [vmem:[%s191 + $0xf8] sm:$0xff]
      %v238 = vld [vmem:[%s1] sm:$0xf]
      %v239 = vld [vmem:[%s1 + $0x4] sm:$0xf]
      %v240 = vld [vmem:[%s1 + $0x8] sm:$0xf]
      %v241 = vld [vmem:[%s1 + $0xc] sm:$0xf]
      %v242 = vld [vmem:[%s1 + $0x10] sm:$0xf]
      %v243 = vld [vmem:[%s1 + $0x14] sm:$0xf]
      %v244 = vld [vmem:[%s1 + $0x18] sm:$0xf]
      %v245 = vld [vmem:[%s1 + $0x1c] sm:$0xf]
      %v246 = vld [vmem:[%s1 + $0x20] sm:$0xf]
      %v247 = vld [vmem:[%s1 + $0x24] sm:$0xf]
      %v248 = vld [vmem:[%s1 + $0x28] sm:$0xf]
      %v249 = vld [vmem:[%s1 + $0x2c] sm:$0xf]
      %v250 = vld [vmem:[%s1 + $0x30] sm:$0xf]
      %v251 = vld [vmem:[%s1 + $0x34] sm:$0xf]
      %v252 = vld [vmem:[%s1 + $0x38] sm:$0xf]
      %v253 = vld [vmem:[%s1 + $0x3c] sm:$0xf]
      %v254 = vld [vmem:[%s1 + $0x40] sm:$0xf]
      %v255 = vld [vmem:[%s1 + $0x44] sm:$0xf]
      %v256 = vld [vmem:[%s1 + $0x48] sm:$0xf]
      %v257 = vld [vmem:[%s1 + $0x4c] sm:$0xf]
      %v258 = vld [vmem:[%s1 + $0x50] sm:$0xf]
      %v259 = vld [vmem:[%s1 + $0x54] sm:$0xf]
      %v260 = vld [vmem:[%s1 + $0x58] sm:$0xf]
      %v261 = vld [vmem:[%s1 + $0x5c] sm:$0xf]
      %v262 = vld [vmem:[%s1 + $0x60] sm:$0xf]
      %v263 = vld [vmem:[%s1 + $0x64] sm:$0xf]
      %v264 = vld [vmem:[%s1 + $0x68] sm:$0xf]
      %v265 = vld [vmem:[%s1 + $0x6c] sm:$0xf]
      %v266 = vld [vmem:[%s1 + $0x70] sm:$0xf]
      %v267 = vld [vmem:[%s1 + $0x74] sm:$0xf]
      %v268 = vld [vmem:[%s1 + $0x78] sm:$0xf]
      %v269 = vld [vmem:[%s1 + $0x7c] sm:$0xf]
      %v302 = vunpack.c.l.b16 %v206
      %v303 = vunpack.c.h.b16 %v206
      %v304 = vunpack.c.l.b16 %v207
      %v305 = vunpack.c.h.b16 %v207
      %v306 = vunpack.c.l.b16 %v208
      %v307 = vunpack.c.h.b16 %v208
      %v308 = vunpack.c.l.b16 %v209
      %v309 = vunpack.c.h.b16 %v209
      %v310 = vunpack.c.l.b16 %v210
      %v311 = vunpack.c.h.b16 %v210
      %v312 = vunpack.c.l.b16 %v211
      %v313 = vunpack.c.h.b16 %v211
      %v314 = vunpack.c.l.b16 %v212
      %v315 = vunpack.c.h.b16 %v212
      %v316 = vunpack.c.l.b16 %v213
      %v317 = vunpack.c.h.b16 %v213
      %v318 = vunpack.c.l.b16 %v214
      %v319 = vunpack.c.h.b16 %v214
      %v320 = vunpack.c.l.b16 %v215
      %v321 = vunpack.c.h.b16 %v215
      %v322 = vunpack.c.l.b16 %v216
      %v323 = vunpack.c.h.b16 %v216
      %v324 = vunpack.c.l.b16 %v217
      %v325 = vunpack.c.h.b16 %v217
      %v326 = vunpack.c.l.b16 %v218
      %v327 = vunpack.c.h.b16 %v218
      %v328 = vunpack.c.l.b16 %v219
      %v329 = vunpack.c.h.b16 %v219
      %v330 = vunpack.c.l.b16 %v220
      %v331 = vunpack.c.h.b16 %v220
      %v332 = vunpack.c.l.b16 %v221
      %v333 = vunpack.c.h.b16 %v221
      %v334 = vunpack.c.l.b16 %v222
      %v335 = vunpack.c.h.b16 %v222
      %v336 = vunpack.c.l.b16 %v223
      %v337 = vunpack.c.h.b16 %v223
      %v338 = vunpack.c.l.b16 %v224
      %v339 = vunpack.c.h.b16 %v224
      %v340 = vunpack.c.l.b16 %v225
      %v341 = vunpack.c.h.b16 %v225
      %v342 = vunpack.c.l.b16 %v226
      %v343 = vunpack.c.h.b16 %v226
      %v344 = vunpack.c.l.b16 %v227
      %v345 = vunpack.c.h.b16 %v227
      %v346 = vunpack.c.l.b16 %v228
      %v347 = vunpack.c.h.b16 %v228
      %v348 = vunpack.c.l.b16 %v229
      %v349 = vunpack.c.h.b16 %v229
      %v350 = vunpack.c.l.b16 %v230
      %v351 = vunpack.c.h.b16 %v230
      %v352 = vunpack.c.l.b16 %v231
      %v353 = vunpack.c.h.b16 %v231
      %v354 = vunpack.c.l.b16 %v232
      %v355 = vunpack.c.h.b16 %v232
      %v356 = vunpack.c.l.b16 %v233
      %v357 = vunpack.c.h.b16 %v233
      %v358 = vunpack.c.l.b16 %v234
      %v359 = vunpack.c.h.b16 %v234
      %v360 = vunpack.c.l.b16 %v235
      %v361 = vunpack.c.h.b16 %v235
      %v362 = vunpack.c.l.b16 %v236
      %v363 = vunpack.c.h.b16 %v236
      %v364 = vunpack.c.l.b16 %v237
      %v365 = vunpack.c.h.b16 %v237
      %v366 = vpack.c.b16 %v304, %v302
      %v367 = vpack.c.b16 %v305, %v303
      %v368 = vpack.c.b16 %v308, %v306
      %v369 = vpack.c.b16 %v309, %v307
      %v370 = vpack.c.b16 %v312, %v310
      %v371 = vpack.c.b16 %v313, %v311
      %v372 = vpack.c.b16 %v316, %v314
      %v373 = vpack.c.b16 %v317, %v315
      %v374 = vpack.c.b16 %v320, %v318
      %v375 = vpack.c.b16 %v321, %v319
      %v376 = vpack.c.b16 %v324, %v322
      %v377 = vpack.c.b16 %v325, %v323
      %v378 = vpack.c.b16 %v328, %v326
      %v379 = vpack.c.b16 %v329, %v327
      %v380 = vpack.c.b16 %v332, %v330
      %v381 = vpack.c.b16 %v333, %v331
      %v382 = vpack.c.b16 %v336, %v334
      %v383 = vpack.c.b16 %v337, %v335
      %v384 = vpack.c.b16 %v340, %v338
      %v385 = vpack.c.b16 %v341, %v339
      %v386 = vpack.c.b16 %v344, %v342
      %v387 = vpack.c.b16 %v345, %v343
      %v388 = vpack.c.b16 %v348, %v346
      %v389 = vpack.c.b16 %v349, %v347
      %v390 = vpack.c.b16 %v352, %v350
      %v391 = vpack.c.b16 %v353, %v351
      %v392 = vpack.c.b16 %v356, %v354
      %v393 = vpack.c.b16 %v357, %v355
      %v394 = vpack.c.b16 %v360, %v358
      %v395 = vpack.c.b16 %v361, %v359
      %v396 = vpack.c.b16 %v364, %v362
      %v397 = vpack.c.b16 %v365, %v363
      %v462 = vunpack.c.l.b16 %v238
      %v463 = vunpack.c.l.b16 %v239
      %v464 = vunpack.c.l.b16 %v240
      %v465 = vunpack.c.l.b16 %v241
      %v466 = vunpack.c.l.b16 %v242
      %v467 = vunpack.c.l.b16 %v243
      %v468 = vunpack.c.l.b16 %v244
      %v469 = vunpack.c.l.b16 %v245
      %v470 = vunpack.c.l.b16 %v246
      %v471 = vunpack.c.l.b16 %v247
      %v472 = vunpack.c.l.b16 %v248
      %v473 = vunpack.c.l.b16 %v249
      %v474 = vunpack.c.l.b16 %v250
      %v475 = vunpack.c.l.b16 %v251
      %v476 = vunpack.c.l.b16 %v252
      %v477 = vunpack.c.l.b16 %v253
      %v478 = vunpack.c.l.b16 %v254
      %v479 = vunpack.c.l.b16 %v255
      %v480 = vunpack.c.l.b16 %v256
      %v481 = vunpack.c.l.b16 %v257
      %v482 = vunpack.c.l.b16 %v258
      %v483 = vunpack.c.l.b16 %v259
      %v484 = vunpack.c.l.b16 %v260
      %v485 = vunpack.c.l.b16 %v261
      %v486 = vunpack.c.l.b16 %v262
      %v487 = vunpack.c.l.b16 %v263
      %v488 = vunpack.c.l.b16 %v264
      %v489 = vunpack.c.l.b16 %v265
      %v490 = vunpack.c.l.b16 %v266
      %v491 = vunpack.c.l.b16 %v267
      %v492 = vunpack.c.l.b16 %v268
      %v493 = vunpack.c.l.b16 %v269
      %v494 = vpack.c.b16 %v463, %v462
      %v495 = vpack.c.b16 %v465, %v464
      %v496 = vpack.c.b16 %v467, %v466
      %v497 = vpack.c.b16 %v469, %v468
      %v498 = vpack.c.b16 %v471, %v470
      %v499 = vpack.c.b16 %v473, %v472
      %v500 = vpack.c.b16 %v475, %v474
      %v501 = vpack.c.b16 %v477, %v476
      %v502 = vpack.c.b16 %v479, %v478
      %v503 = vpack.c.b16 %v481, %v480
      %v504 = vpack.c.b16 %v483, %v482
      %v505 = vpack.c.b16 %v485, %v484
      %v506 = vpack.c.b16 %v487, %v486
      %v507 = vpack.c.b16 %v489, %v488
      %v508 = vpack.c.b16 %v491, %v490
      %v509 = vpack.c.b16 %v493, %v492
      %526 = vmatprep.subr.bf16.mxu0 0
      %527 = vmatpush1.bf16.msra.mxu0 %v501
      %528 = vmatprep.subr.bf16.mxu0 0
      %529 = vmatpush1.bf16.msra.mxu0 %v500
      %530 = vmatprep.subr.bf16.mxu0 0
      %531 = vmatpush1.bf16.msra.mxu0 %v499
      %532 = vmatprep.subr.bf16.mxu0 0
      %533 = vmatpush1.bf16.msra.mxu0 %v498
      %534 = vmatprep.subr.bf16.mxu0 0
      %535 = vmatpush1.bf16.msra.mxu0 %v497
      %536 = vmatprep.subr.bf16.mxu0 0
      %537 = vmatpush1.bf16.msra.mxu0 %v496
      %538 = vmatprep.subr.bf16.mxu0 0
      %539 = vmatpush1.bf16.msra.mxu0 %v495
      %540 = vmatprep.subr.bf16.mxu0 0
      %541 = vmatpush1.bf16.msra.mxu0 %v494
      %542 = vmatprep.subr.bf16.mxu0 0
      %543 = vmatpush2.bf16.msra.mxu0 %v509
      %544 = vmatprep.subr.bf16.mxu0 0
      %545 = vmatpush2.bf16.msra.mxu0 %v508
      %546 = vmatprep.subr.bf16.mxu0 0
      %547 = vmatpush2.bf16.msra.mxu0 %v507
      %548 = vmatprep.subr.bf16.mxu0 0
      %549 = vmatpush2.bf16.msra.mxu0 %v506
      %550 = vmatprep.subr.bf16.mxu0 0
      %551 = vmatpush2.bf16.msra.mxu0 %v505
      %552 = vmatprep.subr.bf16.mxu0 0
      %553 = vmatpush2.bf16.msra.mxu0 %v504
      %554 = vmatprep.subr.bf16.mxu0 0
      %555 = vmatpush2.bf16.msra.mxu0 %v503
      %556 = vmatprep.subr.bf16.mxu0 0
      %557 = vmatpush2.bf16.msra.mxu0 %v502
      %558 = vmatprep.mubr.bf16.mxu0 %v367
      %559 = vmatmul.mubr.bf16.gmra.mxu0 %v366
      %v560 = vpop.f32.mrf.mxu0
      %v561 = vadd.f32 0.0, %v560
      %v562 = vpop.f32.mrf.mxu0
      %v563 = vpop.f32.mrf.mxu0
      %v564 = vadd.f32 0.0, %v563
      %v565 = vpop.f32.mrf.mxu0
      %566 = vmatprep.mubr.bf16.mxu0 %v369
      %567 = vmatmul.mubr.bf16.gmra.mxu0 %v368
      %v568 = vpop.f32.mrf.mxu0
      %v569 = vadd.f32 0.0, %v568
      %v570 = vpop.f32.mrf.mxu0
      %v571 = vpop.f32.mrf.mxu0
      %v572 = vadd.f32 0.0, %v571
      %v573 = vpop.f32.mrf.mxu0
      %574 = vmatprep.mubr.bf16.mxu0 %v371
      %575 = vmatmul.mubr.bf16.gmra.mxu0 %v370
      %v576 = vpop.f32.mrf.mxu0
      %v577 = vadd.f32 0.0, %v576
      %v578 = vpop.f32.mrf.mxu0
      %v579 = vpop.f32.mrf.mxu0
      %v580 = vadd.f32 0.0, %v579
      %v581 = vpop.f32.mrf.mxu0
      %582 = vmatprep.mubr.bf16.mxu0 %v373
      %583 = vmatmul.mubr.bf16.gmra.mxu0 %v372
      %v584 = vpop.f32.mrf.mxu0
      %v585 = vadd.f32 0.0, %v584
      %v586 = vpop.f32.mrf.mxu0
      %v587 = vpop.f32.mrf.mxu0
      %v588 = vadd.f32 0.0, %v587
      %v589 = vpop.f32.mrf.mxu0
      %590 = vmatprep.mubr.bf16.mxu0 %v375
      %591 = vmatmul.mubr.bf16.gmra.mxu0 %v374
      %v592 = vpop.f32.mrf.mxu0
      %v593 = vadd.f32 0.0, %v592
      %v594 = vpop.f32.mrf.mxu0
      %v595 = vpop.f32.mrf.mxu0
      %v596 = vadd.f32 0.0, %v595
      %v597 = vpop.f32.mrf.mxu0
      %598 = vmatprep.mubr.bf16.mxu0 %v377
      %599 = vmatmul.mubr.bf16.gmra.mxu0 %v376
      %v600 = vpop.f32.mrf.mxu0
      %v601 = vadd.f32 0.0, %v600
      %v602 = vpop.f32.mrf.mxu0
      %v603 = vpop.f32.mrf.mxu0
      %v604 = vadd.f32 0.0, %v603
      %v605 = vpop.f32.mrf.mxu0
      %606 = vmatprep.mubr.bf16.mxu0 %v379
      %607 = vmatmul.mubr.bf16.gmra.mxu0 %v378
      %v608 = vpop.f32.mrf.mxu0
      %v609 = vadd.f32 0.0, %v608
      %v610 = vpop.f32.mrf.mxu0
      %v611 = vpop.f32.mrf.mxu0
      %v612 = vadd.f32 0.0, %v611
      %v613 = vpop.f32.mrf.mxu0
      %614 = vmatprep.mubr.bf16.mxu0 %v381
      %615 = vmatmul.mubr.bf16.gmra.mxu0 %v380
      %v616 = vpop.f32.mrf.mxu0
      %v617 = vadd.f32 0.0, %v616
      %v618 = vpop.f32.mrf.mxu0
      %v619 = vpop.f32.mrf.mxu0
      %v620 = vadd.f32 0.0, %v619
      %v621 = vpop.f32.mrf.mxu0
      %622 = vmatprep.mubr.bf16.mxu0 %v383
      %623 = vmatmul.mubr.bf16.gmra.mxu0 %v382
      %v624 = vpop.f32.mrf.mxu0
      %v625 = vadd.f32 0.0, %v624
      %v626 = vpop.f32.mrf.mxu0
      %v627 = vpop.f32.mrf.mxu0
      %v628 = vadd.f32 0.0, %v627
      %v629 = vpop.f32.mrf.mxu0
      %630 = vmatprep.mubr.bf16.mxu0 %v385
      %631 = vmatmul.mubr.bf16.gmra.mxu0 %v384
      %v632 = vpop.f32.mrf.mxu0
      %v633 = vadd.f32 0.0, %v632
      %v634 = vpop.f32.mrf.mxu0
      %v635 = vpop.f32.mrf.mxu0
      %v636 = vadd.f32 0.0, %v635
      %v637 = vpop.f32.mrf.mxu0
      %638 = vmatprep.mubr.bf16.mxu0 %v387
      %639 = vmatmul.mubr.bf16.gmra.mxu0 %v386
      %v640 = vpop.f32.mrf.mxu0
      %v641 = vadd.f32 0.0, %v640
      %v642 = vpop.f32.mrf.mxu0
      %v643 = vpop.f32.mrf.mxu0
      %v644 = vadd.f32 0.0, %v643
      %v645 = vpop.f32.mrf.mxu0
      %646 = vmatprep.mubr.bf16.mxu0 %v389
      %647 = vmatmul.mubr.bf16.gmra.mxu0 %v388
      %v648 = vpop.f32.mrf.mxu0
      %v649 = vadd.f32 0.0, %v648
      %v650 = vpop.f32.mrf.mxu0
      %v651 = vpop.f32.mrf.mxu0
      %v652 = vadd.f32 0.0, %v651
      %v653 = vpop.f32.mrf.mxu0
      %654 = vmatprep.mubr.bf16.mxu0 %v391
      %655 = vmatmul.mubr.bf16.gmra.mxu0 %v390
      %v656 = vpop.f32.mrf.mxu0
      %v657 = vadd.f32 0.0, %v656
      %v658 = vpop.f32.mrf.mxu0
      %v659 = vpop.f32.mrf.mxu0
      %v660 = vadd.f32 0.0, %v659
      %v661 = vpop.f32.mrf.mxu0
      %662 = vmatprep.mubr.bf16.mxu0 %v393
      %663 = vmatmul.mubr.bf16.gmra.mxu0 %v392
      %v664 = vpop.f32.mrf.mxu0
      %v665 = vadd.f32 0.0, %v664
      %v666 = vpop.f32.mrf.mxu0
      %v667 = vpop.f32.mrf.mxu0
      %v668 = vadd.f32 0.0, %v667
      %v669 = vpop.f32.mrf.mxu0
      %670 = vmatprep.mubr.bf16.mxu0 %v395
      %671 = vmatmul.mubr.bf16.gmra.mxu0 %v394
      %v672 = vpop.f32.mrf.mxu0
      %v673 = vadd.f32 0.0, %v672
      %v674 = vpop.f32.mrf.mxu0
      %v675 = vpop.f32.mrf.mxu0
      %v676 = vadd.f32 0.0, %v675
      %v677 = vpop.f32.mrf.mxu0
      %678 = vmatprep.mubr.bf16.mxu0 %v397
      %679 = vmatmul.mubr.bf16.gmra.mxu0 %v396
      %v680 = vpop.f32.mrf.mxu0
      %v681 = vadd.f32 0.0, %v680
      %v682 = vpop.f32.mrf.mxu0
      %v683 = vpop.f32.mrf.mxu0
      %v684 = vadd.f32 0.0, %v683
      %v685 = vpop.f32.mrf.mxu0
      %686 = vdwg.mxu0
      %687 = vst [vmem:[%s197] sm:$0xff] %v561
      %688 = vst [vmem:[%s197 + $0x8] sm:$0xff] %v564
      %689 = vst [vmem:[%s197 + $0x10] sm:$0xff] %v569
      %690 = vst [vmem:[%s197 + $0x18] sm:$0xff] %v572
      %691 = vst [vmem:[%s197 + $0x20] sm:$0xff] %v577
      %692 = vst [vmem:[%s197 + $0x28] sm:$0xff] %v580
      %693 = vst [vmem:[%s197 + $0x30] sm:$0xff] %v585
      %694 = vst [vmem:[%s197 + $0x38] sm:$0xff] %v588
      %695 = vst [vmem:[%s197 + $0x40] sm:$0xff] %v593
      %696 = vst [vmem:[%s197 + $0x48] sm:$0xff] %v596
      %697 = vst [vmem:[%s197 + $0x50] sm:$0xff] %v601
      %698 = vst [vmem:[%s197 + $0x58] sm:$0xff] %v604
      %699 = vst [vmem:[%s197 + $0x60] sm:$0xff] %v609
      %700 = vst [vmem:[%s197 + $0x68] sm:$0xff] %v612
      %701 = vst [vmem:[%s197 + $0x70] sm:$0xff] %v617
      %702 = vst [vmem:[%s197 + $0x78] sm:$0xff] %v620
      %703 = vst [vmem:[%s197 + $0x80] sm:$0xff] %v625
      %704 = vst [vmem:[%s197 + $0x88] sm:$0xff] %v628
      %705 = vst [vmem:[%s197 + $0x90] sm:$0xff] %v633
      %706 = vst [vmem:[%s197 + $0x98] sm:$0xff] %v636
      %707 = vst [vmem:[%s197 + $0xa0] sm:$0xff] %v641
      %708 = vst [vmem:[%s197 + $0xa8] sm:$0xff] %v644
      %709 = vst [vmem:[%s197 + $0xb0] sm:$0xff] %v649
      %710 = vst [vmem:[%s197 + $0xb8] sm:$0xff] %v652
      %711 = vst [vmem:[%s197 + $0xc0] sm:$0xff] %v657
      %712 = vst [vmem:[%s197 + $0xc8] sm:$0xff] %v660
      %713 = vst [vmem:[%s197 + $0xd0] sm:$0xff] %v665
      %714 = vst [vmem:[%s197 + $0xd8] sm:$0xff] %v668
      %715 = vst [vmem:[%s197 + $0xe0] sm:$0xff] %v673
      %716 = vst [vmem:[%s197 + $0xe8] sm:$0xff] %v676
      %717 = vst [vmem:[%s197 + $0xf0] sm:$0xff] %v681
      %718 = vst [vmem:[%s197 + $0xf8] sm:$0xff] %v684
      %v719 = vld [vmem:[#allocation2] sm:$0x1]
      %v720 = vadd.f32 %v561, %v564
      %v721 = vadd.f32 %v720, %v569
      %v722 = vadd.f32 %v721, %v572
      %v723 = vadd.f32 %v722, %v577
      %v724 = vadd.f32 %v723, %v580
      %v725 = vadd.f32 %v724, %v585
      %v726 = vadd.f32 %v725, %v588
      %v727 = vadd.f32 %v726, %v593
      %v728 = vadd.f32 %v727, %v596
      %v729 = vadd.f32 %v728, %v601
      %v730 = vadd.f32 %v729, %v604
      %v731 = vadd.f32 %v730, %v609
      %v732 = vadd.f32 %v731, %v612
      %v733 = vadd.f32 %v732, %v617
      %v734 = vadd.f32 %v733, %v620
      %v735 = vadd.f32 %v734, %v625
      %v736 = vadd.f32 %v735, %v628
      %v737 = vadd.f32 %v736, %v633
      %v738 = vadd.f32 %v737, %v636
      %v739 = vadd.f32 %v738, %v641
      %v740 = vadd.f32 %v739, %v644
      %v741 = vadd.f32 %v740, %v649
      %v742 = vadd.f32 %v741, %v652
      %v743 = vadd.f32 %v742, %v657
      %v744 = vadd.f32 %v743, %v660
      %v745 = vadd.f32 %v744, %v665
      %v746 = vadd.f32 %v745, %v668
      %v747 = vadd.f32 %v746, %v673
      %v748 = vadd.f32 %v747, %v676
      %v749 = vadd.f32 %v748, %v681
      %v750 = vadd.f32 %v749, %v684
      %v751 = vrot.slane %v750, 4
      %v752 = vadd.f32 %v750, %v751
      %v753 = vrot.slane %v752, 2
      %v754 = vadd.f32 %v752, %v753
      %v755 = vrot.slane %v754, 1
      %v756 = vadd.f32 %v754, %v755
      %v757 = vadd.f32 %v719, %v756
      %758 = vst [vmem:[#allocation2] sm:$0x1] %v757
      %v759 = vld [vmem:[#allocation3] sm:$0x1]
      %v760 = vmul.f32 %v561, %v561
      %v761 = vmul.f32 %v564, %v564
      %v762 = vmul.f32 %v569, %v569
      %v763 = vmul.f32 %v572, %v572
      %v764 = vmul.f32 %v577, %v577
      %v765 = vmul.f32 %v580, %v580
      %v766 = vmul.f32 %v585, %v585
      %v767 = vmul.f32 %v588, %v588
      %v768 = vmul.f32 %v593, %v593
      %v769 = vmul.f32 %v596, %v596
      %v770 = vmul.f32 %v601, %v601
      %v771 = vmul.f32 %v604, %v604
      %v772 = vmul.f32 %v609, %v609
      %v773 = vmul.f32 %v612, %v612
      %v774 = vmul.f32 %v617, %v617
      %v775 = vmul.f32 %v620, %v620
      %v776 = vmul.f32 %v625, %v625
      %v777 = vmul.f32 %v628, %v628
      %v778 = vmul.f32 %v633, %v633
      %v779 = vmul.f32 %v636, %v636
      %v780 = vmul.f32 %v641, %v641
      %v781 = vmul.f32 %v644, %v644
      %v782 = vmul.f32 %v649, %v649
      %v783 = vmul.f32 %v652, %v652
      %v784 = vmul.f32 %v657, %v657
      %v785 = vmul.f32 %v660, %v660
      %v786 = vmul.f32 %v665, %v665
      %v787 = vmul.f32 %v668, %v668
      %v788 = vmul.f32 %v673, %v673
      %v789 = vmul.f32 %v676, %v676
      %v790 = vmul.f32 %v681, %v681
      %v791 = vmul.f32 %v684, %v684
      %v792 = vadd.f32 %v760, %v761
      %v793 = vadd.f32 %v792, %v762
      %v794 = vadd.f32 %v793, %v763
      %v795 = vadd.f32 %v794, %v764
      %v796 = vadd.f32 %v795, %v765
      %v797 = vadd.f32 %v796, %v766
      %v798 = vadd.f32 %v797, %v767
      %v799 = vadd.f32 %v798, %v768
      %v800 = vadd.f32 %v799, %v769
      %v801 = vadd.f32 %v800, %v770
      %v802 = vadd.f32 %v801, %v771
      %v803 = vadd.f32 %v802, %v772
      %v804 = vadd.f32 %v803, %v773
      %v805 = vadd.f32 %v804, %v774
      %v806 = vadd.f32 %v805, %v775
      %v807 = vadd.f32 %v806, %v776
      %v808 = vadd.f32 %v807, %v777
      %v809 = vadd.f32 %v808, %v778
      %v810 = vadd.f32 %v809, %v779
      %v811 = vadd.f32 %v810, %v780
      %v812 = vadd.f32 %v811, %v781
      %v813 = vadd.f32 %v812, %v782
      %v814 = vadd.f32 %v813, %v783
      %v815 = vadd.f32 %v814, %v784
      %v816 = vadd.f32 %v815, %v785
      %v817 = vadd.f32 %v816, %v786
      %v818 = vadd.f32 %v817, %v787
      %v819 = vadd.f32 %v818, %v788
      %v820 = vadd.f32 %v819, %v789
      %v821 = vadd.f32 %v820, %v790
      %v822 = vadd.f32 %v821, %v791
      %v823 = vrot.slane %v822, 4
      %v824 = vadd.f32 %v822, %v823
      %v825 = vrot.slane %v824, 2
      %v826 = vadd.f32 %v824, %v825
      %v827 = vrot.slane %v826, 1
      %v828 = vadd.f32 %v826, %v827
      %v829 = vadd.f32 %v759, %v828
      %830 = vst [vmem:[#allocation3] sm:$0x1] %v829
      %p831 = scmp.eq.s32.totalorder %s16, 1
      // Predicated region
      $region33: #{inception_forward.10} parent=27 // pred_check
        %p832 = pneg %p831
      $region34: #{inception_forward.10} parent=27 // pred_check_branch
        %834 = sbr.rel (%p832) target = $region36
      $region35: #{inception_forward.10} parent=27 // pred_region
        %v835 = vld [vmem:[#allocation2] sm:$0x1]
        %836 = vst [vmem:[%s3] sm:$0x1] %v835
        %v837 = vld [vmem:[#allocation3] sm:$0x1]
        %838 = vst [vmem:[%s4] sm:$0x1] %v837
      $region36: #{inception_forward.10} parent=27 // pred_fallthru
        _
      %s839 = smul.u32 32, %s16
      %p840 = scmp.lt.s32.totalorder %s839, 63
      %s841 = scalar_select %p840, %s839, 63
      %s842 = smul.addr %s841, 8
      %s843 = scalar_lea.vmem %s2, %s842
      // Predicated region
      $region37: #{inception_forward.10} parent=27 // pred_check
        %p844 = pneg %p81
      $region38: #{inception_forward.10} parent=27 // pred_check_branch
        %846 = sbr.rel (%p844) target = $region40
      $region39: #{inception_forward.10} parent=27 // pred_region
        %s847 = smul.u32 32, %s16
      $region40: #{inception_forward.10} parent=27 // pred_fallthru
        _
      // Predicated region
      $region41: #{inception_forward.10} parent=27 // pred_check
        %p848 = pneg %p102
      $region42: #{inception_forward.10} parent=27 // pred_check_branch
        %850 = sbr.rel (%p848) target = $region44
      $region43: #{inception_forward.10} parent=27 // pred_region
        _
      $region44: #{inception_forward.10} parent=27 // pred_fallthru
        _
      // Predicated region
      $region45: #{inception_forward.10} parent=27 // pred_check
        %p851 = pneg %p123
      $region46: #{inception_forward.10} parent=27 // pred_check_branch
        %853 = sbr.rel (%p851) target = $region48
      $region47: #{inception_forward.10} parent=27 // pred_region
        _
      $region48: #{inception_forward.10} parent=27 // pred_fallthru
        _
      // Predicated region
      $region49: #{inception_forward.10} parent=27 // pred_check
        %p854 = pneg %p102
      $region50: #{inception_forward.10} parent=27 // pred_check_branch
        %856 = sbr.rel (%p854) target = $region52
      $region51: #{inception_forward.10} parent=27 // pred_region
        _
      $region52: #{inception_forward.10} parent=27 // pred_fallthru
        _
      // Predicated region
      $region53: #{inception_forward.10} parent=27 // pred_check
        %p857 = pneg %p123
      $region54: #{inception_forward.10} parent=27 // pred_check_branch
        %859 = sbr.rel (%p857) target = $region56
      $region55: #{inception_forward.10} parent=27 // pred_region
        _
      $region56: #{inception_forward.10} parent=27 // pred_fallthru
        _
    $region28: #{inception_forward.10} parent=5 // pred_fallthru
      _
    %p860 = scmp.le.s32.totalorder 2, %s11
    // Predicated region
    $region57: #{inception_forward.10} parent=5 // pred_check
      %p861 = pneg %p860
    $region58: #{inception_forward.10} parent=5 // pred_check_branch
      %863 = sbr.rel (%p861) target = $region60
    $region59: #{inception_forward.10} parent=5 // pred_region
      %s864 = ssub.s32 %s11, 2
      // Predicated region
      $region61: #{inception_forward.10} parent=59 // pred_check
        %p865 = pneg %p87
      $region62: #{inception_forward.10} parent=59 // pred_check_branch
        %867 = sbr.rel (%p865) target = $region64
      $region63: #{inception_forward.10} parent=59 // pred_region
        %s868 = smul.u32 32, %s17
        %p869 = scmp.lt.s32.totalorder %s868, 63
        %s870 = scalar_select %p869, %s868, 63
        %s871 = smul.addr %s870, 8
        %s872 = scalar_lea.vmem %s2, %s871
      $region64: #{inception_forward.10} parent=59 // pred_fallthru
        _
    $region60: #{inception_forward.10} parent=5 // pred_fallthru
      _
  $region6: #{inception_forward.10} parent=0 // loop_footer
    %s15 = sadd.s32 1, %s11
  $region7: #{inception_forward.10} parent=0 // loop_footer_branch
    %10 = sbr.rel target = $region3
  $region8: #{inception_forward.10} parent=0 // loop_exit
    _

// kernel: inception_forward.11
$region0: #{inception_forward.11}
  #allocation0 [shape = 'u32[]', space=smem, size = 0x4, offset = 0x4, fixed_abs, tag = 'smem constant byte address 0x4 - core index']
  #allocation1 [shape = 'u32[144,128]{1,0:T(1,128)}', space=vmem, size = 0x12000, scoped, tag = 'internal scratch']
  %s0 = inlined_call_operand.vmem [shape: f32[512,128], index: 0, kind: input, shape index: {}]
  %s1 = inlined_call_operand.vmem [shape: f32[1,128], index: 1, kind: input, shape index: {}]
  %s2 = inlined_call_operand.vmem [shape: f32[1,128], index: 2, kind: input, shape index: {}]
  %s3 = inlined_call_operand.vmem [shape: f32[1,128], index: 3, kind: input, shape index: {}]
  %s4 = inlined_call_operand.vmem [shape: f32[1,128], index: 4, kind: input, shape index: {}]
  %s5 = inlined_call_operand.vmem [shape: f32[512,128], index: 5, kind: output, shape index: {}]
  %s6 = sld [smem:[#allocation0]]
  $region53: #{inception_forward.11} parent=0
    _
  %s8 = ssub.s32 1, %s6
  %s9 = scalar_select 0, %s8, %s6
  loop: start=0, step=1, limit=4
  $region2: #{inception_forward.11} parent=0 // loop_pre_header
    _
  $region3: #{inception_forward.11} parent=0 // loop_header
    %s11 = sphi 0, %s15
    %p12 = scmp.ge.s32.totalorder %s11, 4
    %s21 = sphi 0, %s23
    %s24 = sphi 0, %s21
    %s25 = sphi 0, %s24
    %s41 = sphi 0, %s25
    %s45 = sphi 0, %s45
    %s47 = sphi 0, %s45
    %s48 = sphi 0, %s47
    %s62 = sphi 0, %s48
    %s66 = sphi 0, %s66
    %s68 = sphi 0, %s66
    %s69 = sphi 0, %s68
    %s83 = sphi 0, %s69
    %s87 = sphi 0, %s87
    %s89 = sphi 0, %s87
    %s90 = sphi 0, %s89
    %s104 = sphi 0, %s90
    %s108 = sphi 0, %s108
    %s110 = sphi 0, %s108
    %s111 = sphi 0, %s110
    %s125 = sphi 0, %s111
    %s131 = sphi 0, %s133
    %s134 = sphi 0, %s131
    %s135 = sphi 0, %s134
    %s151 = sphi 0, %s135
  $region4: #{inception_forward.11} parent=0 // loop_header_branch
    %14 = sbr.rel (%p12) target = $region8
  $region5: #{inception_forward.11} parent=0 // loop_body
    %s16 = ssub.s32 %s11, 1
    %s17 = ssub.s32 %s11, 2
    %s18 = sadd.s32 %s11, 1
    %s19 = ssub.s32 %s11, %s18
    %p20 = scmp.eq.s32.totalorder %s19, 0
    %s22 = sadd.s32 %s21, 1
    %s23 = scalar_select %p20, %s21, %s22
    %p26 = pneg %p20
    %p27 = scmp.eq.s32.totalorder %s11, 1
    %p28 = por %p26, %p27
    %p29 = scmp.ne.s32.totalorder %s21, %s24
    %p30 = scmp.eq.s32.totalorder %s11, 0
    %p31 = por %p29, %p30
    %p32 = scmp.ne.s32.totalorder %s21, %s24
    %p33 = scmp.eq.s32.totalorder %s16, 1
    %p34 = por %p32, %p33
    %p35 = scmp.ne.s32.totalorder %s24, %s25
    %p36 = scmp.eq.s32.totalorder %s16, 0
    %p37 = por %p35, %p36
    %p38 = scmp.ne.s32.totalorder %s24, %s25
    %p39 = scmp.eq.s32.totalorder %s17, 1
    %p40 = por %p38, %p39
    %p42 = scmp.ne.s32.totalorder %s25, %s41
    %p43 = scmp.eq.s32.totalorder %s17, 0
    %p44 = por %p42, %p43
    %s46 = sadd.s32 %s45, 1
    %p49 = scmp.eq.s32.totalorder %s11, 1
    %p50 = scmp.ne.s32.totalorder %s45, %s47
    %p51 = scmp.eq.s32.totalorder %s11, 0
    %p52 = por %p50, %p51
    %p53 = scmp.ne.s32.totalorder %s45, %s47
    %p54 = scmp.eq.s32.totalorder %s16, 1
    %p55 = por %p53, %p54
    %p56 = scmp.ne.s32.totalorder %s47, %s48
    %p57 = scmp.eq.s32.totalorder %s16, 0
    %p58 = por %p56, %p57
    %p59 = scmp.ne.s32.totalorder %s47, %s48
    %p60 = scmp.eq.s32.totalorder %s17, 1
    %p61 = por %p59, %p60
    %p63 = scmp.ne.s32.totalorder %s48, %s62
    %p64 = scmp.eq.s32.totalorder %s17, 0
    %p65 = por %p63, %p64
    %s67 = sadd.s32 %s66, 1
    %p70 = scmp.eq.s32.totalorder %s11, 1
    %p71 = scmp.ne.s32.totalorder %s66, %s68
    %p72 = scmp.eq.s32.totalorder %s11, 0
    %p73 = por %p71, %p72
    %p74 = scmp.ne.s32.totalorder %s66, %s68
    %p75 = scmp.eq.s32.totalorder %s16, 1
    %p76 = por %p74, %p75
    %p77 = scmp.ne.s32.totalorder %s68, %s69
    %p78 = scmp.eq.s32.totalorder %s16, 0
    %p79 = por %p77, %p78
    %p80 = scmp.ne.s32.totalorder %s68, %s69
    %p81 = scmp.eq.s32.totalorder %s17, 1
    %p82 = por %p80, %p81
    %p84 = scmp.ne.s32.totalorder %s69, %s83
    %p85 = scmp.eq.s32.totalorder %s17, 0
    %p86 = por %p84, %p85
    %s88 = sadd.s32 %s87, 1
    %p91 = scmp.eq.s32.totalorder %s11, 1
    %p92 = scmp.ne.s32.totalorder %s87, %s89
    %p93 = scmp.eq.s32.totalorder %s11, 0
    %p94 = por %p92, %p93
    %p95 = scmp.ne.s32.totalorder %s87, %s89
    %p96 = scmp.eq.s32.totalorder %s16, 1
    %p97 = por %p95, %p96
    %p98 = scmp.ne.s32.totalorder %s89, %s90
    %p99 = scmp.eq.s32.totalorder %s16, 0
    %p100 = por %p98, %p99
    %p101 = scmp.ne.s32.totalorder %s89, %s90
    %p102 = scmp.eq.s32.totalorder %s17, 1
    %p103 = por %p101, %p102
    %p105 = scmp.ne.s32.totalorder %s90, %s104
    %p106 = scmp.eq.s32.totalorder %s17, 0
    %p107 = por %p105, %p106
    %s109 = sadd.s32 %s108, 1
    %p112 = scmp.eq.s32.totalorder %s11, 1
    %p113 = scmp.ne.s32.totalorder %s108, %s110
    %p114 = scmp.eq.s32.totalorder %s11, 0
    %p115 = por %p113, %p114
    %p116 = scmp.ne.s32.totalorder %s108, %s110
    %p117 = scmp.eq.s32.totalorder %s16, 1
    %p118 = por %p116, %p117
    %p119 = scmp.ne.s32.totalorder %s110, %s111
    %p120 = scmp.eq.s32.totalorder %s16, 0
    %p121 = por %p119, %p120
    %p122 = scmp.ne.s32.totalorder %s110, %s111
    %p123 = scmp.eq.s32.totalorder %s17, 1
    %p124 = por %p122, %p123
    %p126 = scmp.ne.s32.totalorder %s111, %s125
    %p127 = scmp.eq.s32.totalorder %s17, 0
    %p128 = por %p126, %p127
    %s129 = ssub.s32 %s11, %s18
    %p130 = scmp.eq.s32.totalorder %s129, 0
    %s132 = sadd.s32 %s131, 1
    %s133 = scalar_select %p130, %s131, %s132
    %p136 = pneg %p130
    %p137 = scmp.eq.s32.totalorder %s11, 1
    %p138 = por %p136, %p137
    %p139 = scmp.ne.s32.totalorder %s131, %s134
    %p140 = scmp.eq.s32.totalorder %s11, 0
    %p141 = por %p139, %p140
    %p142 = scmp.ne.s32.totalorder %s131, %s134
    %p143 = scmp.eq.s32.totalorder %s16, 1
    %p144 = por %p142, %p143
    %p145 = scmp.ne.s32.totalorder %s134, %s135
    %p146 = scmp.eq.s32.totalorder %s16, 0
    %p147 = por %p145, %p146
    %p148 = scmp.ne.s32.totalorder %s134, %s135
    %p149 = scmp.eq.s32.totalorder %s17, 1
    %p150 = por %p148, %p149
    %p152 = scmp.ne.s32.totalorder %s135, %s151
    %p153 = scmp.eq.s32.totalorder %s17, 0
    %p154 = por %p152, %p153
    %p155 = scmp.le.s32.totalorder 1, %s11
    %p156 = scmp.lt.s32.totalorder %s11, 3
    %p157 = pnand %p155, %p156
    %p158 = pneg %p157
    // Predicated region
    $region9: #{inception_forward.11} parent=5 // pred_check
      _
    $region10: #{inception_forward.11} parent=5 // pred_check_branch
      %160 = sbr.rel (%p157) target = $region12
    $region11: #{inception_forward.11} parent=5 // pred_region
      %s161 = ssub.s32 %s11, 1
      // Predicated region
      $region13: #{inception_forward.11} parent=11 // pred_check
        %p162 = pneg %p58
      $region14: #{inception_forward.11} parent=11 // pred_check_branch
        %164 = sbr.rel (%p162) target = $region16
      $region15: #{inception_forward.11} parent=11 // pred_region
        _
      $region16: #{inception_forward.11} parent=11 // pred_fallthru
        _
      // Predicated region
      $region17: #{inception_forward.11} parent=11 // pred_check
        %p165 = pneg %p79
      $region18: #{inception_forward.11} parent=11 // pred_check_branch
        %167 = sbr.rel (%p165) target = $region20
      $region19: #{inception_forward.11} parent=11 // pred_region
        _
      $region20: #{inception_forward.11} parent=11 // pred_fallthru
        _
      // Predicated region
      $region21: #{inception_forward.11} parent=11 // pred_check
        %p168 = pneg %p100
      $region22: #{inception_forward.11} parent=11 // pred_check_branch
        %170 = sbr.rel (%p168) target = $region24
      $region23: #{inception_forward.11} parent=11 // pred_region
        _
      $region24: #{inception_forward.11} parent=11 // pred_fallthru
        _
      // Predicated region
      $region25: #{inception_forward.11} parent=11 // pred_check
        %p171 = pneg %p121
      $region26: #{inception_forward.11} parent=11 // pred_check_branch
        %173 = sbr.rel (%p171) target = $region28
      $region27: #{inception_forward.11} parent=11 // pred_region
        _
      $region28: #{inception_forward.11} parent=11 // pred_fallthru
        _
    $region12: #{inception_forward.11} parent=5 // pred_fallthru
      _
    %p174 = scmp.lt.s32.totalorder %s11, 2
    // Predicated region
    $region29: #{inception_forward.11} parent=5 // pred_check
      %p175 = pneg %p174
    $region30: #{inception_forward.11} parent=5 // pred_check_branch
      %177 = sbr.rel (%p175) target = $region32
    $region31: #{inception_forward.11} parent=5 // pred_region
      // Predicated region
      $region33: #{inception_forward.11} parent=31 // pred_check
        %p178 = pneg %p31
      $region34: #{inception_forward.11} parent=31 // pred_check_branch
        %180 = sbr.rel (%p178) target = $region36
      $region35: #{inception_forward.11} parent=31 // pred_region
        %s181 = smul.u32 32, %s11
        %p182 = scmp.lt.s32.totalorder %s181, 63
        %s183 = scalar_select %p182, %s181, 63
        %s184 = smul.addr %s183, 8
        %s185 = scalar_lea.vmem %s0, %s184
        %s186 = smul.u32 32, %s11
      $region36: #{inception_forward.11} parent=31 // pred_fallthru
        _
    $region32: #{inception_forward.11} parent=5 // pred_fallthru
      _
    %p187 = scmp.le.s32.totalorder 1, %s11
    %p188 = scmp.lt.s32.totalorder %s11, 3
    %p189 = pnand %p187, %p188
    %p190 = pneg %p189
    // Predicated region
    $region37: #{inception_forward.11} parent=5 // pred_check
      _
    $region38: #{inception_forward.11} parent=5 // pred_check_branch
      %192 = sbr.rel (%p189) target = $region40
    $region39: #{inception_forward.11} parent=5 // pred_region
      %s193 = ssub.s32 %s11, 1
      %s194 = smul.u32 32, %s16
      %p195 = scmp.lt.s32.totalorder %s194, 63
      %s196 = scalar_select %p195, %s194, 63
      %s197 = smul.addr %s196, 8
      %s198 = scalar_lea.vmem %s0, %s197
      %p199 = pneg %p37
      %p200 = pneg %p34
      %p201 = pneg %p58
      %p202 = pneg %p55
      %p203 = pneg %p79
      %p204 = pneg %p76
      %p205 = pneg %p100
      %p206 = pneg %p97
      %p207 = pneg %p121
      %p208 = pneg %p118
      %p209 = pneg %p147
      %p210 = pneg %p144
      %s211 = smul.u32 32, %s16
      %p212 = scmp.lt.s32.totalorder %s211, 63
      %s213 = scalar_select %p212, %s211, 63
      %s214 = smul.addr %s213, 8
      %s215 = scalar_lea.vmem %s5, %s214
      %s216 = smul.u32 32, %s16
      %p217 = scmp.lt.s32.totalorder %s216, 63
      %s218 = scalar_select %p217, %s216, 63
      %s219 = smul.addr %s218, 8
      %s220 = scalar_lea.vmem %s0, %s219
      %s221 = smul.u32 32, %s16
      %s222 = smul.u32 32, %s16
      %p223 = scmp.lt.s32.totalorder %s222, 63
      %s224 = scalar_select %p223, %s222, 63
      %s225 = smul.addr %s224, 8
      %s226 = scalar_lea.vmem %s5, %s225
      %s227 = smul.u32 32, %s16
      %v228 = vld [vmem:[%s1] sm:$0x1]
      %v229 = vmul.f32 %v228, 0.001953125
      %v230 = vld [vmem:[%s2] sm:$0x1]
      %v231 = vmul.f32 %v230, 0.001953125
      %v232 = vmul.f32 %v229, %v229
      %v233 = vsub.f32 %v231, %v232
      %v234 = vmax.f32 %v233, 0.0
      %v235 = vadd.f32 %v234, 1e-05
      %v236 = vrsqrt.pop %v235
      %v237 = vld [vmem:[%s3] sm:$0x1]
      %v238 = vmul.f32 %v236, %v237
      %v239 = vld [vmem:[%s220] sm:$0xff]
      %v240 = vld [vmem:[%s220 + $0x8] sm:$0xff]
      %v241 = vld [vmem:[%s220 + $0x10] sm:$0xff]
      %v242 = vld [vmem:[%s220 + $0x18] sm:$0xff]
      %v243 = vld [vmem:[%s220 + $0x20] sm:$0xff]
      %v244 = vld [vmem:[%s220 + $0x28] sm:$0xff]
      %v245 = vld [vmem:[%s220 + $0x30] sm:$0xff]
      %v246 = vld [vmem:[%s220 + $0x38] sm:$0xff]
      %v247 = vld [vmem:[%s220 + $0x40] sm:$0xff]
      %v248 = vld [vmem:[%s220 + $0x48] sm:$0xff]
      %v249 = vld [vmem:[%s220 + $0x50] sm:$0xff]
      %v250 = vld [vmem:[%s220 + $0x58] sm:$0xff]
      %v251 = vld [vmem:[%s220 + $0x60] sm:$0xff]
      %v252 = vld [vmem:[%s220 + $0x68] sm:$0xff]
      %v253 = vld [vmem:[%s220 + $0x70] sm:$0xff]
      %v254 = vld [vmem:[%s220 + $0x78] sm:$0xff]
      %v255 = vld [vmem:[%s220 + $0x80] sm:$0xff]
      %v256 = vld [vmem:[%s220 + $0x88] sm:$0xff]
      %v257 = vld [vmem:[%s220 + $0x90] sm:$0xff]
      %v258 = vld [vmem:[%s220 + $0x98] sm:$0xff]
      %v259 = vld [vmem:[%s220 + $0xa0] sm:$0xff]
      %v260 = vld [vmem:[%s220 + $0xa8] sm:$0xff]
      %v261 = vld [vmem:[%s220 + $0xb0] sm:$0xff]
      %v262 = vld [vmem:[%s220 + $0xb8] sm:$0xff]
      %v263 = vld [vmem:[%s220 + $0xc0] sm:$0xff]
      %v264 = vld [vmem:[%s220 + $0xc8] sm:$0xff]
      %v265 = vld [vmem:[%s220 + $0xd0] sm:$0xff]
      %v266 = vld [vmem:[%s220 + $0xd8] sm:$0xff]
      %v267 = vld [vmem:[%s220 + $0xe0] sm:$0xff]
      %v268 = vld [vmem:[%s220 + $0xe8] sm:$0xff]
      %v269 = vld [vmem:[%s220 + $0xf0] sm:$0xff]
      %v270 = vld [vmem:[%s220 + $0xf8] sm:$0xff]
      %v272 = vlaneseq
      %v273 = vshrl.u32 %v272, 7
      %v274 = vsub.s32 0, %v273
      %v275 = vrot.slane %v229, %v274
      %v277 = vsub.f32 %v239, %v275
      %v278 = vsub.f32 %v240, %v275
      %v279 = vsub.f32 %v241, %v275
      %v280 = vsub.f32 %v242, %v275
      %v281 = vsub.f32 %v243, %v275
      %v282 = vsub.f32 %v244, %v275
      %v283 = vsub.f32 %v245, %v275
      %v284 = vsub.f32 %v246, %v275
      %v285 = vsub.f32 %v247, %v275
      %v286 = vsub.f32 %v248, %v275
      %v287 = vsub.f32 %v249, %v275
      %v288 = vsub.f32 %v250, %v275
      %v289 = vsub.f32 %v251, %v275
      %v290 = vsub.f32 %v252, %v275
      %v291 = vsub.f32 %v253, %v275
      %v292 = vsub.f32 %v254, %v275
      %v293 = vsub.f32 %v255, %v275
      %v294 = vsub.f32 %v256, %v275
      %v295 = vsub.f32 %v257, %v275
      %v296 = vsub.f32 %v258, %v275
      %v297 = vsub.f32 %v259, %v275
      %v298 = vsub.f32 %v260, %v275
      %v299 = vsub.f32 %v261, %v275
      %v300 = vsub.f32 %v262, %v275
      %v301 = vsub.f32 %v263, %v275
      %v302 = vsub.f32 %v264, %v275
      %v303 = vsub.f32 %v265, %v275
      %v304 = vsub.f32 %v266, %v275
      %v305 = vsub.f32 %v267, %v275
      %v306 = vsub.f32 %v268, %v275
      %v307 = vsub.f32 %v269, %v275
      %v308 = vsub.f32 %v270, %v275
      %v310 = vlaneseq
      %v311 = vshrl.u32 %v310, 7
      %v312 = vsub.s32 0, %v311
      %v313 = vrot.slane %v238, %v312
      %v315 = vmul.f32 %v277, %v313
      %v316 = vmul.f32 %v278, %v313
      %v317 = vmul.f32 %v279, %v313
      %v318 = vmul.f32 %v280, %v313
      %v319 = vmul.f32 %v281, %v313
      %v320 = vmul.f32 %v282, %v313
      %v321 = vmul.f32 %v283, %v313
      %v322 = vmul.f32 %v284, %v313
      %v323 = vmul.f32 %v285, %v313
      %v324 = vmul.f32 %v286, %v313
      %v325 = vmul.f32 %v287, %v313
      %v326 = vmul.f32 %v288, %v313
      %v327 = vmul.f32 %v289, %v313
      %v328 = vmul.f32 %v290, %v313
      %v329 = vmul.f32 %v291, %v313
      %v330 = vmul.f32 %v292, %v313
      %v331 = vmul.f32 %v293, %v313
      %v332 = vmul.f32 %v294, %v313
      %v333 = vmul.f32 %v295, %v313
      %v334 = vmul.f32 %v296, %v313
      %v335 = vmul.f32 %v297, %v313
      %v336 = vmul.f32 %v298, %v313
      %v337 = vmul.f32 %v299, %v313
      %v338 = vmul.f32 %v300, %v313
      %v339 = vmul.f32 %v301, %v313
      %v340 = vmul.f32 %v302, %v313
      %v341 = vmul.f32 %v303, %v313
      %v342 = vmul.f32 %v304, %v313
      %v343 = vmul.f32 %v305, %v313
      %v344 = vmul.f32 %v306, %v313
      %v345 = vmul.f32 %v307, %v313
      %v346 = vmul.f32 %v308, %v313
      %v347 = vld [vmem:[%s4] sm:$0x1]
      %v349 = vlaneseq
      %v350 = vshrl.u32 %v349, 7
      %v351 = vsub.s32 0, %v350
      %v352 = vrot.slane %v347, %v351
      %v354 = vadd.f32 %v315, %v352
      %v355 = vadd.f32 %v316, %v352
      %v356 = vadd.f32 %v317, %v352
      %v357 = vadd.f32 %v318, %v352
      %v358 = vadd.f32 %v319, %v352
      %v359 = vadd.f32 %v320, %v352
      %v360 = vadd.f32 %v321, %v352
      %v361 = vadd.f32 %v322, %v352
      %v362 = vadd.f32 %v323, %v352
      %v363 = vadd.f32 %v324, %v352
      %v364 = vadd.f32 %v325, %v352
      %v365 = vadd.f32 %v326, %v352
      %v366 = vadd.f32 %v327, %v352
      %v367 = vadd.f32 %v328, %v352
      %v368 = vadd.f32 %v329, %v352
      %v369 = vadd.f32 %v330, %v352
      %v370 = vadd.f32 %v331, %v352
      %v371 = vadd.f32 %v332, %v352
      %v372 = vadd.f32 %v333, %v352
      %v373 = vadd.f32 %v334, %v352
      %v374 = vadd.f32 %v335, %v352
      %v375 = vadd.f32 %v336, %v352
      %v376 = vadd.f32 %v337, %v352
      %v377 = vadd.f32 %v338, %v352
      %v378 = vadd.f32 %v339, %v352
      %v379 = vadd.f32 %v340, %v352
      %v380 = vadd.f32 %v341, %v352
      %v381 = vadd.f32 %v342, %v352
      %v382 = vadd.f32 %v343, %v352
      %v383 = vadd.f32 %v344, %v352
      %v384 = vadd.f32 %v345, %v352
      %v385 = vadd.f32 %v346, %v352
      %vm386 = vcmp.ge.f32.partialorder %v354, 0.0
      %vm387 = vcmp.ge.f32.partialorder %v355, 0.0
      %vm388 = vcmp.ge.f32.partialorder %v356, 0.0
      %vm389 = vcmp.ge.f32.partialorder %v357, 0.0
      %vm390 = vcmp.ge.f32.partialorder %v358, 0.0
      %vm391 = vcmp.ge.f32.partialorder %v359, 0.0
      %vm392 = vcmp.ge.f32.partialorder %v360, 0.0
      %vm393 = vcmp.ge.f32.partialorder %v361, 0.0
      %vm394 = vcmp.ge.f32.partialorder %v362, 0.0
      %vm395 = vcmp.ge.f32.partialorder %v363, 0.0
      %vm396 = vcmp.ge.f32.partialorder %v364, 0.0
      %vm397 = vcmp.ge.f32.partialorder %v365, 0.0
      %vm398 = vcmp.ge.f32.partialorder %v366, 0.0
      %vm399 = vcmp.ge.f32.partialorder %v367, 0.0
      %vm400 = vcmp.ge.f32.partialorder %v368, 0.0
      %vm401 = vcmp.ge.f32.partialorder %v369, 0.0
      %vm402 = vcmp.ge.f32.partialorder %v370, 0.0
      %vm403 = vcmp.ge.f32.partialorder %v371, 0.0
      %vm404 = vcmp.ge.f32.partialorder %v372, 0.0
      %vm405 = vcmp.ge.f32.partialorder %v373, 0.0
      %vm406 = vcmp.ge.f32.partialorder %v374, 0.0
      %vm407 = vcmp.ge.f32.partialorder %v375, 0.0
      %vm408 = vcmp.ge.f32.partialorder %v376, 0.0
      %vm409 = vcmp.ge.f32.partialorder %v377, 0.0
      %vm410 = vcmp.ge.f32.partialorder %v378, 0.0
      %vm411 = vcmp.ge.f32.partialorder %v379, 0.0
      %vm412 = vcmp.ge.f32.partialorder %v380, 0.0
      %vm413 = vcmp.ge.f32.partialorder %v381, 0.0
      %vm414 = vcmp.ge.f32.partialorder %v382, 0.0
      %vm415 = vcmp.ge.f32.partialorder %v383, 0.0
      %vm416 = vcmp.ge.f32.partialorder %v384, 0.0
      %vm417 = vcmp.ge.f32.partialorder %v385, 0.0
      %v418 = vmul.f32 %v354, 0.01
      %v419 = vmul.f32 %v355, 0.01
      %v420 = vmul.f32 %v356, 0.01
      %v421 = vmul.f32 %v357, 0.01
      %v422 = vmul.f32 %v358, 0.01
      %v423 = vmul.f32 %v359, 0.01
      %v424 = vmul.f32 %v360, 0.01
      %v425 = vmul.f32 %v361, 0.01
      %v426 = vmul.f32 %v362, 0.01
      %v427 = vmul.f32 %v363, 0.01
      %v428 = vmul.f32 %v364, 0.01
      %v429 = vmul.f32 %v365, 0.01
      %v430 = vmul.f32 %v366, 0.01
      %v431 = vmul.f32 %v367, 0.01
      %v432 = vmul.f32 %v368, 0.01
      %v433 = vmul.f32 %v369, 0.01
      %v434 = vmul.f32 %v370, 0.01
      %v435 = vmul.f32 %v371, 0.01
      %v436 = vmul.f32 %v372, 0.01
      %v437 = vmul.f32 %v373, 0.01
      %v438 = vmul.f32 %v374, 0.01
      %v439 = vmul.f32 %v375, 0.01
      %v440 = vmul.f32 %v376, 0.01
      %v441 = vmul.f32 %v377, 0.01
      %v442 = vmul.f32 %v378, 0.01
      %v443 = vmul.f32 %v379, 0.01
      %v444 = vmul.f32 %v380, 0.01
      %v445 = vmul.f32 %v381, 0.01
      %v446 = vmul.f32 %v382, 0.01
      %v447 = vmul.f32 %v383, 0.01
      %v448 = vmul.f32 %v384, 0.01
      %v449 = vmul.f32 %v385, 0.01
      %v450 = vsel %vm386, %v354, %v418
      %v451 = vsel %vm387, %v355, %v419
      %v452 = vsel %vm388, %v356, %v420
      %v453 = vsel %vm389, %v357, %v421
      %v454 = vsel %vm390, %v358, %v422
      %v455 = vsel %vm391, %v359, %v423
      %v456 = vsel %vm392, %v360, %v424
      %v457 = vsel %vm393, %v361, %v425
      %v458 = vsel %vm394, %v362, %v426
      %v459 = vsel %vm395, %v363, %v427
      %v460 = vsel %vm396, %v364, %v428
      %v461 = vsel %vm397, %v365, %v429
      %v462 = vsel %vm398, %v366, %v430
      %v463 = vsel %vm399, %v367, %v431
      %v464 = vsel %vm400, %v368, %v432
      %v465 = vsel %vm401, %v369, %v433
      %v466 = vsel %vm402, %v370, %v434
      %v467 = vsel %vm403, %v371, %v435
      %v468 = vsel %vm404, %v372, %v436
      %v469 = vsel %vm405, %v373, %v437
      %v470 = vsel %vm406, %v374, %v438
      %v471 = vsel %vm407, %v375, %v439
      %v472 = vsel %vm408, %v376, %v440
      %v473 = vsel %vm409, %v377, %v441
      %v474 = vsel %vm410, %v378, %v442
      %v475 = vsel %vm411, %v379, %v443
      %v476 = vsel %vm412, %v380, %v444
      %v477 = vsel %vm413, %v381, %v445
      %v478 = vsel %vm414, %v382, %v446
      %v479 = vsel %vm415, %v383, %v447
      %v480 = vsel %vm416, %v384, %v448
      %v481 = vsel %vm417, %v385, %v449
      %482 = vst [vmem:[%s226] sm:$0xff] %v450
      %483 = vst [vmem:[%s226 + $0x8] sm:$0xff] %v451
      %484 = vst [vmem:[%s226 + $0x10] sm:$0xff] %v452
      %485 = vst [vmem:[%s226 + $0x18] sm:$0xff] %v453
      %486 = vst [vmem:[%s226 + $0x20] sm:$0xff] %v454
      %487 = vst [vmem:[%s226 + $0x28] sm:$0xff] %v455
      %488 = vst [vmem:[%s226 + $0x30] sm:$0xff] %v456
      %489 = vst [vmem:[%s226 + $0x38] sm:$0xff] %v457
      %490 = vst [vmem:[%s226 + $0x40] sm:$0xff] %v458
      %491 = vst [vmem:[%s226 + $0x48] sm:$0xff] %v459
      %492 = vst [vmem:[%s226 + $0x50] sm:$0xff] %v460
      %493 = vst [vmem:[%s226 + $0x58] sm:$0xff] %v461
      %494 = vst [vmem:[%s226 + $0x60] sm:$0xff] %v462
      %495 = vst [vmem:[%s226 + $0x68] sm:$0xff] %v463
      %496 = vst [vmem:[%s226 + $0x70] sm:$0xff] %v464
      %497 = vst [vmem:[%s226 + $0x78] sm:$0xff] %v465
      %498 = vst [vmem:[%s226 + $0x80] sm:$0xff] %v466
      %499 = vst [vmem:[%s226 + $0x88] sm:$0xff] %v467
      %500 = vst [vmem:[%s226 + $0x90] sm:$0xff] %v468
      %501 = vst [vmem:[%s226 + $0x98] sm:$0xff] %v469
      %502 = vst [vmem:[%s226 + $0xa0] sm:$0xff] %v470
      %503 = vst [vmem:[%s226 + $0xa8] sm:$0xff] %v471
      %504 = vst [vmem:[%s226 + $0xb0] sm:$0xff] %v472
      %505 = vst [vmem:[%s226 + $0xb8] sm:$0xff] %v473
      %506 = vst [vmem:[%s226 + $0xc0] sm:$0xff] %v474
      %507 = vst [vmem:[%s226 + $0xc8] sm:$0xff] %v475
      %508 = vst [vmem:[%s226 + $0xd0] sm:$0xff] %v476
      %509 = vst [vmem:[%s226 + $0xd8] sm:$0xff] %v477
      %510 = vst [vmem:[%s226 + $0xe0] sm:$0xff] %v478
      %511 = vst [vmem:[%s226 + $0xe8] sm:$0xff] %v479
      %512 = vst [vmem:[%s226 + $0xf0] sm:$0xff] %v480
      %513 = vst [vmem:[%s226 + $0xf8] sm:$0xff] %v481
      %s514 = smul.u32 32, %s16
      %p515 = scmp.lt.s32.totalorder %s514, 63
      %s516 = scalar_select %p515, %s514, 63
      %s517 = smul.addr %s516, 8
      %s518 = scalar_lea.vmem %s5, %s517
      // Predicated region
      $region41: #{inception_forward.11} parent=39 // pred_check
        %p519 = pneg %p144
      $region42: #{inception_forward.11} parent=39 // pred_check_branch
        %521 = sbr.rel (%p519) target = $region44
      $region43: #{inception_forward.11} parent=39 // pred_region
        %s522 = smul.u32 32, %s16
      $region44: #{inception_forward.11} parent=39 // pred_fallthru
        _
    $region40: #{inception_forward.11} parent=5 // pred_fallthru
      _
    %p523 = scmp.le.s32.totalorder 2, %s11
    // Predicated region
    $region45: #{inception_forward.11} parent=5 // pred_check
      %p524 = pneg %p523
    $region46: #{inception_forward.11} parent=5 // pred_check_branch
      %526 = sbr.rel (%p524) target = $region48
    $region47: #{inception_forward.11} parent=5 // pred_region
      %s527 = ssub.s32 %s11, 2
      // Predicated region
      $region49: #{inception_forward.11} parent=47 // pred_check
        %p528 = pneg %p150
      $region50: #{inception_forward.11} parent=47 // pred_check_branch
        %530 = sbr.rel (%p528) target = $region52
      $region51: #{inception_forward.11} parent=47 // pred_region
        %s531 = smul.u32 32, %s17
        %p532 = scmp.lt.s32.totalorder %s531, 63
        %s533 = scalar_select %p532, %s531, 63
        %s534 = smul.addr %s533, 8
        %s535 = scalar_lea.vmem %s5, %s534
      $region52: #{inception_forward.11} parent=47 // pred_fallthru
        _
    $region48: #{inception_forward.11} parent=5 // pred_fallthru
      _
  $region6: #{inception_forward.11} parent=0 // loop_footer
    %s15 = sadd.s32 1, %s11
  $region7: #{inception_forward.11} parent=0 // loop_footer_branch
    %10 = sbr.rel target = $region3
  $region8: #{inception_forward.11} parent=0 // loop_exit
    _

</llo_original>
